<compile_context>
chip_gen: v6e
topology: v6e:2x2x1
jax: 0.10.0
libtpu: 0.0.40
codegen_flags: <defaults>
</compile_context>

<pallas_src>
import functools

import jax
import jax.numpy as jnp
from jax.experimental import pallas as pl
from jax.experimental.pallas import tpu as pltpu

IN_DIM_DEFAULT = 8      # is_allreduce=0, num_loops=1 -> 3 + 5*1 = 8
F0, F1 = 256, 512       # DecompositionModel hidden widths
W3_PAD_N = 128          # padded N for the MXU layer-3 path (column 0 is real)


def _round_up(x, m):
    return (x + m - 1) // m * m


def _cdiv(a, b):
    return (a + b - 1) // b


def _chip_kind():
    try:
        return jax.devices()[0].device_kind.lower()
    except Exception:
        return ""


def _plan_tiles(B, tile_b_req, is_v7x):
    """Pick (n_tiles, tile_b, padded_b). tile_b is a multiple of 128."""
    cap = 4096 if is_v7x else 8192          # VMEM-safe per-generation tile cap
    tile_cap = max(128, min(tile_b_req, cap))
    # On v7x keep the grid >= 2 (and even) so both TensorCores get work.
    min_tiles = 2 if (is_v7x and B > 256) else 1
    n_tiles = max(min_tiles, _cdiv(B, tile_cap))
    if is_v7x and n_tiles > 1 and n_tiles % 2 == 1:
        n_tiles += 1
    tile_b = _round_up(_cdiv(B, n_tiles), 128)
    padded_b = tile_b * n_tiles
    return n_tiles, tile_b, padded_b


def _pick_chunk(tile_b):
    """Sub-chunk rows inside a tile to bound live h1/h2 ranges."""
    if tile_b <= 512:
        return tile_b
    for c in (512, 256, 128):
        if tile_b % c == 0:
            return c
    return tile_b  # unreachable: tile_b is always a multiple of 128


def mlp_kernel(x_ref, w1_ref, b1_ref, w2_ref, b2_ref, w3_ref, b3_ref, o_ref,
               *, chunk, n_chunks, layer3_mxu):
    """One batch tile of the fused 3-layer MLP.

    x_ref  : [TILE_B, IN_DIM]  f32   (streamed; cast to bf16 in-kernel)
    w1_ref : [IN_DIM, 256]     bf16  (VMEM-resident via constant index_map)
    b1_ref : [1, 256]          f32
    w2_ref : [256, 512]        bf16  (VMEM-resident)
    b2_ref : [1, 512]          f32
    w3_ref : [512, 128] bf16 (MXU path, col 0 real)  OR  [1, 512] f32 (VPU path)
    b3_ref : [1, 1]            f32   (SMEM scalar)
    o_ref  : [1, TILE_B]       f32   (lane-dense output block)
    """
    b3 = b3_ref[0, 0]

    @pl.loop(0, n_chunks)
    def _(c):
        start = pl.multiple_of(c * chunk, 128)

        # Layer 1: K=8 stays on the MXU (lane-padded to 128); bf16 in, f32 acc.
        xb = x_ref[pl.ds(start, chunk), :].astype(jnp.bfloat16)
        h1 = jnp.dot(xb, w1_ref[...], preferred_element_type=jnp.float32)
        h1 = jnp.maximum(h1 + b1_ref[...], 0.0)                    # [chunk, 256] f32

        # Layer 2: cast activations to bf16 only at the MXU input.
        h2 = jnp.dot(h1.astype(jnp.bfloat16), w2_ref[...],
                     preferred_element_type=jnp.float32)
        h2 = jnp.maximum(h2 + b2_ref[...], 0.0)                    # [chunk, 512] f32

        # Layer 3 (512 -> 1):
        if layer3_mxu:
            # v6e/v7x: MXU has slack, XLU is the likely saturating slot ->
            # padded [512,128] matmul, keep column 0.
            y = jnp.dot(h2.astype(jnp.bfloat16), w3_ref[...],
                        preferred_element_type=jnp.float32)        # [chunk, 128]
            out_col = y[:, 0:1]                                    # [chunk, 1]
        else:
            # v5e: MXU is the bottleneck -> VPU multiply + XLU lane reduce.
            out_col = jnp.sum(h2 * w3_ref[...], axis=-1, keepdims=True)

        # Repack sublane-major [chunk,1] -> lane-dense [1,chunk] (cheap XLU
        # transpose) so the writeback uses full-width unmasked stores.
        out_row = (out_col + b3).reshape(1, chunk)
        o_ref[:, pl.ds(start, chunk)] = out_row.astype(o_ref.dtype)


@functools.partial(jax.jit, static_argnames=("tile_b",))
def decomposition_model_forward(x, params, tile_b=2048):
    """x: [B, IN_DIM] float32. Returns [B, 1] float32."""
    B, in_dim = x.shape

    kind = _chip_kind()
    is_v7x = ("v7" in kind) or ("7x" in kind)
    # MXU layer-3 path on the fat-MXU chips; VPU path elsewhere (incl. unknown).
    layer3_mxu = ("v6" in kind) or is_v7x

    n_tiles, tile_b, padded_b = _plan_tiles(B, tile_b, is_v7x)
    chunk = _pick_chunk(tile_b)
    n_chunks = tile_b // chunk

    # TODO(synk): for huge ragged B, fold this pad into the kernel tail tile
    # instead of an extra HBM pass (minor at small B).
    x_pad = x if padded_b == B else jnp.pad(x, ((0, padded_b - B), (0, 0)))

    w1 = params["w1"]                    # [in, 256] bf16 (cast once at init)
    b1 = params["b1"]                    # [1, 256]  f32
    w2 = params["w2"]                    # [256, 512] bf16
    b2 = params["b2"]                    # [1, 512]  f32
    b3 = params["b3"]                    # [1, 1]    f32
    if layer3_mxu:
        w3 = params["w3_pad"]            # [512, 128] bf16, column 0 real
        w3_spec = pl.BlockSpec((F1, W3_PAD_N), lambda i: (0, 0))
    else:
        w3 = params["w3_row"]            # [1, 512] f32
        w3_spec = pl.BlockSpec((1, F1), lambda i: (0, 0))

    kernel = functools.partial(mlp_kernel, chunk=chunk, n_chunks=n_chunks,
                               layer3_mxu=layer3_mxu)

    out2d = pl.pallas_call(
        kernel,
        out_shape=jax.ShapeDtypeStruct((n_tiles, tile_b), jnp.float32),
        grid=(n_tiles,),
        in_specs=[
            pl.BlockSpec((tile_b, in_dim), lambda i: (i, 0)),     # x (streamed f32)
            pl.BlockSpec((in_dim, F0), lambda i: (0, 0)),         # w1 (resident)
            pl.BlockSpec((1, F0), lambda i: (0, 0)),              # b1
            pl.BlockSpec((F0, F1), lambda i: (0, 0)),             # w2 (resident)
            pl.BlockSpec((1, F1), lambda i: (0, 0)),              # b2
            w3_spec,                                              # w3 (resident)
            pl.BlockSpec(memory_space=pltpu.MemorySpace.SMEM),    # b3 scalar
        ],
        out_specs=pl.BlockSpec((1, tile_b), lambda i: (i, 0)),    # lane-dense out
        compiler_params=pltpu.CompilerParams(
            dimension_semantics=("parallel",),   # shard batch tiles across TCs
            vmem_limit_bytes=(48 if is_v7x else 64) * 1024 * 1024,
        ),
    )(x_pad, w1, b1, w2, b2, w3, b3)

    return out2d.reshape(-1, 1)[:B]


def init_params(key, in_dim=IN_DIM_DEFAULT):
    kw1, kw2, kw3, kb1, kb2, kb3 = jax.random.split(key, 6)

    def xavier(k, fan_in, fan_out, shape):
        # matches torch.nn.init.xavier_uniform_ (gain=1)
        bound = (6.0 / (fan_in + fan_out)) ** 0.5
        return jax.random.uniform(k, shape, jnp.float32, -bound, bound)

    def linear_bias(k, fan_in, shape):
        # PyTorch default Linear bias init: U(-1/sqrt(fan_in), 1/sqrt(fan_in))
        b = 1.0 / (fan_in ** 0.5)
        return jax.random.uniform(k, shape, jnp.float32, -b, b)

    w3_row = xavier(kw3, F1, 1, (1, F1))                       # [1, 512] f32
    w3_pad = jnp.zeros((F1, W3_PAD_N), jnp.bfloat16)
    w3_pad = w3_pad.at[:, 0].set(w3_row[0].astype(jnp.bfloat16))

    return {
        # MXU operands stored bf16 once at init (no per-call casts).
        "w1": xavier(kw1, in_dim, F0, (in_dim, F0)).astype(jnp.bfloat16),
        "b1": linear_bias(kb1, in_dim, (1, F0)),
        "w2": xavier(kw2, F0, F1, (F0, F1)).astype(jnp.bfloat16),
        "b2": linear_bias(kb2, F0, (1, F1)),
        "w3_row": w3_row,              # [1, 512] f32 (VPU path + reference)
        "w3_pad": w3_pad,              # [512, 128] bf16, column 0 real (MXU path)
        "b3": linear_bias(kb3, F1, (1, 1)),
    }


def reference_forward(x, p):
    w1 = p["w1"].astype(jnp.float32)
    w2 = p["w2"].astype(jnp.float32)
    h1 = jnp.maximum(x @ w1 + p["b1"], 0.0)
    h2 = jnp.maximum(h1 @ w2 + p["b2"], 0.0)
    return h2 @ p["w3_row"].T + p["b3"]


if __name__ == "__main__":
    key = jax.random.PRNGKey(0)
    k_x, k_p = jax.random.split(key)

    # Default config: is_allreduce=0, num_loops=1 -> input feature dim = 8.
    # B=300 exercises the batch-padding path; the tile_b=128 run also exercises
    # the multi-tile grid.
    B, IN_DIM = 300, IN_DIM_DEFAULT
    x = jax.random.normal(k_x, (B, IN_DIM), jnp.float32)
    params = init_params(k_p, in_dim=IN_DIM)

    ref = reference_forward(x, params)

    for tb in (2048, 128):
        out = jax.block_until_ready(decomposition_model_forward(x, params, tile_b=tb))
        assert out.shape == (B, 1), out.shape
        # bf16 MXU operands with f32 accumulation -> ~1e-2-level error vs f32 ref.
        rel_err = jnp.max(jnp.abs(out - ref)) / (jnp.max(jnp.abs(ref)) + 1e-6)
        assert rel_err < 5e-2, f"tile_b={tb}: relative error too large: {rel_err}"

    print("KERNEL_OK")
</pallas_src>

<mosaic_0001>
module attributes {stable_mosaic.version = 11 : i64} {
  func.func @mlp_kernel(%arg0: i32, %arg1: memref<384x8xf32, #tpu.memory_space<vmem>>, %arg2: memref<8x256xbf16, #tpu.memory_space<vmem>>, %arg3: memref<1x256xf32, #tpu.memory_space<vmem>>, %arg4: memref<256x512xbf16, #tpu.memory_space<vmem>>, %arg5: memref<1x512xf32, #tpu.memory_space<vmem>>, %arg6: memref<1x512xf32, #tpu.memory_space<vmem>>, %arg7: memref<1x1xf32, #tpu.memory_space<smem>>, %arg8: memref<1x384xf32, #tpu.memory_space<vmem>>) attributes {dimension_semantics = [#tpu.dimension_semantics<parallel>], iteration_bounds = array<i64: 1>, scalar_prefetch = 0 : i64, scratch_operands = 0 : i64, tpu.core_type = #tpu.core_type<tc>, window_params = [{transform_indices = @transform_0, window_bounds = array<i64: 384, 8>}, {pipeline_mode = #tpu.pipeline_mode<synchronous>, transform_indices = @transform_1, window_bounds = array<i64: 8, 256>}, {pipeline_mode = #tpu.pipeline_mode<synchronous>, transform_indices = @transform_2, window_bounds = array<i64: 1, 256>}, {pipeline_mode = #tpu.pipeline_mode<synchronous>, transform_indices = @transform_3, window_bounds = array<i64: 256, 512>}, {pipeline_mode = #tpu.pipeline_mode<synchronous>, transform_indices = @transform_4, window_bounds = array<i64: 1, 512>}, {pipeline_mode = #tpu.pipeline_mode<synchronous>, transform_indices = @transform_5, window_bounds = array<i64: 1, 512>}, {transform_indices = @transform_6, window_bounds = array<i64: 1, 1>}, {transform_indices = @transform_7, window_bounds = array<i64: 1, 384>}]} {
    %c0 = arith.constant 0 : index
    %c0_0 = arith.constant 0 : index
    %0 = memref.load %arg7[%c0, %c0_0] : memref<1x1xf32, #tpu.memory_space<smem>>
    %c0_i32 = arith.constant 0 : i32
    %c1_i32 = arith.constant 1 : i32
    %1 = arith.muli %c0_i32, %c1_i32 : i32
    %c0_i32_1 = arith.constant 0 : i32
    %2 = arith.addi %c0_i32_1, %1 : i32
    %c384_i32 = arith.constant 384 : i32
    %3 = arith.muli %2, %c384_i32 : i32
    %4 = tpu.assume_multiple %3, 128 : i32
    %5 = arith.index_cast %4 : i32 to index
    %c0_2 = arith.constant 0 : index
    %6 = vector.load %arg1[%5, %c0_2] : memref<384x8xf32, #tpu.memory_space<vmem>>, vector<384x8xf32>
    %7 = arith.truncf %6 : vector<384x8xf32> to vector<384x8xbf16>
    %c0_3 = arith.constant 0 : index
    %c0_4 = arith.constant 0 : index
    %8 = vector.load %arg2[%c0_3, %c0_4] : memref<8x256xbf16, #tpu.memory_space<vmem>>, vector<8x256xbf16>
    %cst = arith.constant dense<0.000000e+00> : vector<384x256xf32>
    %9 = tpu.matmul %7, %8, %cst {dimension_numbers = #tpu.dot_dimension_numbers<[1], [0], [0], [1], [0, 0, 1, 1], [], []>} : vector<384x8xbf16>, vector<8x256xbf16>, vector<384x256xf32> -> vector<384x256xf32>
    %c0_5 = arith.constant 0 : index
    %c0_6 = arith.constant 0 : index
    %10 = vector.load %arg3[%c0_5, %c0_6] : memref<1x256xf32, #tpu.memory_space<vmem>>, vector<1x256xf32>
    %11 = vector.broadcast %10 : vector<1x256xf32> to vector<384x256xf32>
    %12 = arith.addf %9, %11 : vector<384x256xf32>
    %cst_7 = arith.constant 0.000000e+00 : f32
    %13 = vector.broadcast %cst_7 : f32 to vector<384x256xf32>
    %14 = arith.maximumf %12, %13 : vector<384x256xf32>
    %15 = arith.truncf %14 : vector<384x256xf32> to vector<384x256xbf16>
    %c0_8 = arith.constant 0 : index
    %c0_9 = arith.constant 0 : index
    %16 = vector.load %arg4[%c0_8, %c0_9] : memref<256x512xbf16, #tpu.memory_space<vmem>>, vector<256x512xbf16>
    %cst_10 = arith.constant dense<0.000000e+00> : vector<384x512xf32>
    %17 = tpu.matmul %15, %16, %cst_10 {dimension_numbers = #tpu.dot_dimension_numbers<[1], [0], [0], [1], [0, 0, 1, 1], [], []>} : vector<384x256xbf16>, vector<256x512xbf16>, vector<384x512xf32> -> vector<384x512xf32>
    %c0_11 = arith.constant 0 : index
    %c0_12 = arith.constant 0 : index
    %18 = vector.load %arg5[%c0_11, %c0_12] : memref<1x512xf32, #tpu.memory_space<vmem>>, vector<1x512xf32>
    %19 = vector.broadcast %18 : vector<1x512xf32> to vector<384x512xf32>
    %20 = arith.addf %17, %19 : vector<384x512xf32>
    %cst_13 = arith.constant 0.000000e+00 : f32
    %21 = vector.broadcast %cst_13 : f32 to vector<384x512xf32>
    %22 = arith.maximumf %20, %21 : vector<384x512xf32>
    %c0_14 = arith.constant 0 : index
    %c0_15 = arith.constant 0 : index
    %23 = vector.load %arg6[%c0_14, %c0_15] : memref<1x512xf32, #tpu.memory_space<vmem>>, vector<1x512xf32>
    %24 = vector.broadcast %23 : vector<1x512xf32> to vector<384x512xf32>
    %25 = arith.mulf %22, %24 : vector<384x512xf32>
    %cst_16 = arith.constant dense<0.000000e+00> : vector<384xf32>
    %26 = vector.multi_reduction <add>, %25, %cst_16 [1] : vector<384x512xf32> to vector<384xf32>
    %27 = vector.shape_cast %26 : vector<384xf32> to vector<384x1xf32>
    %28 = vector.broadcast %0 : f32 to vector<384x1xf32>
    %29 = arith.addf %27, %28 : vector<384x1xf32>
    %30 = vector.shape_cast %29 : vector<384x1xf32> to vector<1x384xf32>
    %c0_17 = arith.constant 0 : index
    %31 = arith.index_cast %4 : i32 to index
    %32 = vector.load %arg8[%c0_17, %31] : memref<1x384xf32, #tpu.memory_space<vmem>>, vector<1x384xf32>
    tpu.vector_store %arg8[%c0_17, %31], %30 {strides = array<i32>} : memref<1x384xf32, #tpu.memory_space<vmem>>, vector<1x384xf32>,
    %c1_i32_18 = arith.constant 1 : i32
    return
  }
  func.func @transform_0(%arg0: i32) -> (i32, i32) {
    %c0_i32 = arith.constant 0 : i32
    %c0_i32_0 = arith.constant 0 : i32
    return %arg0, %c0_i32 : i32, i32
  }
  func.func @transform_1(%arg0: i32) -> (i32, i32) {
    %c0_i32 = arith.constant 0 : i32
    %c0_i32_0 = arith.constant 0 : i32
    %c0_i32_1 = arith.constant 0 : i32
    return %c0_i32, %c0_i32_0 : i32, i32
  }
  func.func @transform_2(%arg0: i32) -> (i32, i32) {
    %c0_i32 = arith.constant 0 : i32
    %c0_i32_0 = arith.constant 0 : i32
    %c0_i32_1 = arith.constant 0 : i32
    return %c0_i32, %c0_i32_0 : i32, i32
  }
  func.func @transform_3(%arg0: i32) -> (i32, i32) {
    %c0_i32 = arith.constant 0 : i32
    %c0_i32_0 = arith.constant 0 : i32
    %c0_i32_1 = arith.constant 0 : i32
    return %c0_i32, %c0_i32_0 : i32, i32
  }
  func.func @transform_4(%arg0: i32) -> (i32, i32) {
    %c0_i32 = arith.constant 0 : i32
    %c0_i32_0 = arith.constant 0 : i32
    %c0_i32_1 = arith.constant 0 : i32
    return %c0_i32, %c0_i32_0 : i32, i32
  }
  func.func @transform_5(%arg0: i32) -> (i32, i32) {
    %c0_i32 = arith.constant 0 : i32
    %c0_i32_0 = arith.constant 0 : i32
    %c0_i32_1 = arith.constant 0 : i32
    return %c0_i32, %c0_i32_0 : i32, i32
  }
  func.func @transform_6(%arg0: i32) -> (i32, i32) {
    %c0_i32 = arith.constant 0 : i32
    %c0_i32_0 = arith.constant 0 : i32
    %c0_i32_1 = arith.constant 0 : i32
    return %c0_i32, %c0_i32_0 : i32, i32
  }
  func.func @transform_7(%arg0: i32) -> (i32, i32) {
    %c0_i32 = arith.constant 0 : i32
    %c0_i32_0 = arith.constant 0 : i32
    return %arg0, %c0_i32 : i32, i32
  }
}

</mosaic_0001>

<llo_original>
// kernel: decomposition_model_forward.1
$region0: #{decomposition_model_forward.1}
  #allocation0 [shape = 'u32[]', space=smem, size = 0x4, offset = 0x4, fixed_abs, tag = 'smem constant byte address 0x4 - core index']
  #allocation1 [shape = 'u32[144,128]{1,0:T(1,128)}', space=vmem, size = 0x12000, scoped, tag = 'internal scratch']
  #allocation2 [shape = 'f32[1,1]{1,0:T(1,128)S(6)}', space=smem, size = 0x200, scoped, tag = 'scoped memory for decomposition_model_forward.1']
  %s0 = inlined_call_operand.vmem [shape: f32[384,8], index: 0, kind: input, shape index: {}]
  %s1 = inlined_call_operand.vmem [shape: bf16[8,256], index: 1, kind: input, shape index: {}]
  %s2 = inlined_call_operand.vmem [shape: f32[1,256], index: 2, kind: input, shape index: {}]
  %s3 = inlined_call_operand.vmem [shape: bf16[256,512], index: 3, kind: input, shape index: {}]
  %s4 = inlined_call_operand.vmem [shape: f32[1,512], index: 4, kind: input, shape index: {}]
  %s5 = inlined_call_operand.vmem [shape: f32[1,512], index: 5, kind: input, shape index: {}]
  %s6 = inlined_call_operand.<no memory space> [shape: f32[1,1], index: 6, kind: input, shape index: {}]
  %s7 = inlined_call_operand.vmem [shape: f32[1,384], index: 7, kind: output, shape index: {}]
  %s8 = sld [smem:[#allocation0]]
  $region38: #{decomposition_model_forward.1} parent=0
    _
  %s10 = ssub.s32 1, %s8
  %s11 = scalar_select 0, %s10, %s8
  %12 = sst [smem:[#allocation2]] %s6
  // Predicated region
  $region2: #{decomposition_model_forward.1} parent=0 // pred_check
    _
  $region3: #{decomposition_model_forward.1} parent=0 // pred_check_branch
    %14 = sbr.rel (0) target = $region5
  $region4: #{decomposition_model_forward.1} parent=0 // pred_region
    _
  $region5: #{decomposition_model_forward.1} parent=0 // pred_fallthru
    _
  // Predicated region
  $region6: #{decomposition_model_forward.1} parent=0 // pred_check
    _
  $region7: #{decomposition_model_forward.1} parent=0 // pred_check_branch
    %16 = sbr.rel (0) target = $region9
  $region8: #{decomposition_model_forward.1} parent=0 // pred_region
    _
  $region9: #{decomposition_model_forward.1} parent=0 // pred_fallthru
    _
  // Predicated region
  $region10: #{decomposition_model_forward.1} parent=0 // pred_check
    _
  $region11: #{decomposition_model_forward.1} parent=0 // pred_check_branch
    %18 = sbr.rel (0) target = $region13
  $region12: #{decomposition_model_forward.1} parent=0 // pred_region
    _
  $region13: #{decomposition_model_forward.1} parent=0 // pred_fallthru
    _
  // Predicated region
  $region14: #{decomposition_model_forward.1} parent=0 // pred_check
    _
  $region15: #{decomposition_model_forward.1} parent=0 // pred_check_branch
    %20 = sbr.rel (0) target = $region17
  $region16: #{decomposition_model_forward.1} parent=0 // pred_region
    _
  $region17: #{decomposition_model_forward.1} parent=0 // pred_fallthru
    _
  // Predicated region
  $region18: #{decomposition_model_forward.1} parent=0 // pred_check
    _
  $region19: #{decomposition_model_forward.1} parent=0 // pred_check_branch
    %22 = sbr.rel (0) target = $region21
  $region20: #{decomposition_model_forward.1} parent=0 // pred_region
    _
  $region21: #{decomposition_model_forward.1} parent=0 // pred_fallthru
    _
  // Predicated region
  $region22: #{decomposition_model_forward.1} parent=0 // pred_check
    _
  $region23: #{decomposition_model_forward.1} parent=0 // pred_check_branch
    %24 = sbr.rel (0) target = $region25
  $region24: #{decomposition_model_forward.1} parent=0 // pred_region
    _
  $region25: #{decomposition_model_forward.1} parent=0 // pred_fallthru
    _
  // Predicated region
  $region26: #{decomposition_model_forward.1} parent=0 // pred_check
    _
  $region27: #{decomposition_model_forward.1} parent=0 // pred_check_branch
    %26 = sbr.rel (0) target = $region29
  $region28: #{decomposition_model_forward.1} parent=0 // pred_region
    _
  $region29: #{decomposition_model_forward.1} parent=0 // pred_fallthru
    _
  %s28 = sld [smem:[#allocation2]]
  %v29 = vld [vmem:[%s0] sm:$0xff]
  %v30 = vld [vmem:[%s0 + $0x8] sm:$0xff]
  %v31 = vld [vmem:[%s0 + $0x10] sm:$0xff]
  %v32 = vld [vmem:[%s0 + $0x18] sm:$0xff]
  %v33 = vld [vmem:[%s0 + $0x20] sm:$0xff]
  %v34 = vld [vmem:[%s0 + $0x28] sm:$0xff]
  %v35 = vld [vmem:[%s0 + $0x30] sm:$0xff]
  %v36 = vld [vmem:[%s0 + $0x38] sm:$0xff]
  %v37 = vld [vmem:[%s0 + $0x40] sm:$0xff]
  %v38 = vld [vmem:[%s0 + $0x48] sm:$0xff]
  %v39 = vld [vmem:[%s0 + $0x50] sm:$0xff]
  %v40 = vld [vmem:[%s0 + $0x58] sm:$0xff]
  %v41 = vld [vmem:[%s0 + $0x60] sm:$0xff]
  %v42 = vld [vmem:[%s0 + $0x68] sm:$0xff]
  %v43 = vld [vmem:[%s0 + $0x70] sm:$0xff]
  %v44 = vld [vmem:[%s0 + $0x78] sm:$0xff]
  %v45 = vld [vmem:[%s0 + $0x80] sm:$0xff]
  %v46 = vld [vmem:[%s0 + $0x88] sm:$0xff]
  %v47 = vld [vmem:[%s0 + $0x90] sm:$0xff]
  %v48 = vld [vmem:[%s0 + $0x98] sm:$0xff]
  %v49 = vld [vmem:[%s0 + $0xa0] sm:$0xff]
  %v50 = vld [vmem:[%s0 + $0xa8] sm:$0xff]
  %v51 = vld [vmem:[%s0 + $0xb0] sm:$0xff]
  %v52 = vld [vmem:[%s0 + $0xb8] sm:$0xff]
  %v53 = vld [vmem:[%s0 + $0xc0] sm:$0xff]
  %v54 = vld [vmem:[%s0 + $0xc8] sm:$0xff]
  %v55 = vld [vmem:[%s0 + $0xd0] sm:$0xff]
  %v56 = vld [vmem:[%s0 + $0xd8] sm:$0xff]
  %v57 = vld [vmem:[%s0 + $0xe0] sm:$0xff]
  %v58 = vld [vmem:[%s0 + $0xe8] sm:$0xff]
  %v59 = vld [vmem:[%s0 + $0xf0] sm:$0xff]
  %v60 = vld [vmem:[%s0 + $0xf8] sm:$0xff]
  %v61 = vld [vmem:[%s0 + $0x100] sm:$0xff]
  %v62 = vld [vmem:[%s0 + $0x108] sm:$0xff]
  %v63 = vld [vmem:[%s0 + $0x110] sm:$0xff]
  %v64 = vld [vmem:[%s0 + $0x118] sm:$0xff]
  %v65 = vld [vmem:[%s0 + $0x120] sm:$0xff]
  %v66 = vld [vmem:[%s0 + $0x128] sm:$0xff]
  %v67 = vld [vmem:[%s0 + $0x130] sm:$0xff]
  %v68 = vld [vmem:[%s0 + $0x138] sm:$0xff]
  %v69 = vld [vmem:[%s0 + $0x140] sm:$0xff]
  %v70 = vld [vmem:[%s0 + $0x148] sm:$0xff]
  %v71 = vld [vmem:[%s0 + $0x150] sm:$0xff]
  %v72 = vld [vmem:[%s0 + $0x158] sm:$0xff]
  %v73 = vld [vmem:[%s0 + $0x160] sm:$0xff]
  %v74 = vld [vmem:[%s0 + $0x168] sm:$0xff]
  %v75 = vld [vmem:[%s0 + $0x170] sm:$0xff]
  %v76 = vld [vmem:[%s0 + $0x178] sm:$0xff]
  %v77 = vpack.c.bf16 %v30, %v29
  %v78 = vpack.c.bf16 %v32, %v31
  %v79 = vpack.c.bf16 %v34, %v33
  %v80 = vpack.c.bf16 %v36, %v35
  %v81 = vpack.c.bf16 %v38, %v37
  %v82 = vpack.c.bf16 %v40, %v39
  %v83 = vpack.c.bf16 %v42, %v41
  %v84 = vpack.c.bf16 %v44, %v43
  %v85 = vpack.c.bf16 %v46, %v45
  %v86 = vpack.c.bf16 %v48, %v47
  %v87 = vpack.c.bf16 %v50, %v49
  %v88 = vpack.c.bf16 %v52, %v51
  %v89 = vpack.c.bf16 %v54, %v53
  %v90 = vpack.c.bf16 %v56, %v55
  %v91 = vpack.c.bf16 %v58, %v57
  %v92 = vpack.c.bf16 %v60, %v59
  %v93 = vpack.c.bf16 %v62, %v61
  %v94 = vpack.c.bf16 %v64, %v63
  %v95 = vpack.c.bf16 %v66, %v65
  %v96 = vpack.c.bf16 %v68, %v67
  %v97 = vpack.c.bf16 %v70, %v69
  %v98 = vpack.c.bf16 %v72, %v71
  %v99 = vpack.c.bf16 %v74, %v73
  %v100 = vpack.c.bf16 %v76, %v75
  %v101 = vld [vmem:[%s1] sm:$0xff]
  %v102 = vld [vmem:[%s2] sm:$0x3]
  %v104 = vlaneseq
  %v105 = vshrl.u32 %v104, 7
  %v106 = vsub.s32 0, %v105
  %v107 = vrot.slane %v102, %v106
  %v108 = vlaneseq
  %v109 = vshrl.u32 %v108, 7
  %v110 = vsub.s32 1, %v109
  %v111 = vrot.slane %v102, %v110
  %v115 = vunpack.c.l.b16 %v101
  %v116 = vunpack.c.h.b16 %v101
  %v117 = vpack.c.b16 %v115, %v115
  %v118 = vpack.c.b16 %v116, %v116
  %vm119 = vcmask 64512
  %v121 = vsel %vm119, %v77, 0
  %v124 = vsel %vm119, %v78, 0
  %v127 = vsel %vm119, %v79, 0
  %v130 = vsel %vm119, %v80, 0
  %v133 = vsel %vm119, %v81, 0
  %v136 = vsel %vm119, %v82, 0
  %v139 = vsel %vm119, %v83, 0
  %v142 = vsel %vm119, %v84, 0
  %v145 = vsel %vm119, %v85, 0
  %v148 = vsel %vm119, %v86, 0
  %v151 = vsel %vm119, %v87, 0
  %v154 = vsel %vm119, %v88, 0
  %v157 = vsel %vm119, %v89, 0
  %v160 = vsel %vm119, %v90, 0
  %v163 = vsel %vm119, %v91, 0
  %v166 = vsel %vm119, %v92, 0
  %v169 = vsel %vm119, %v93, 0
  %v172 = vsel %vm119, %v94, 0
  %v175 = vsel %vm119, %v95, 0
  %v178 = vsel %vm119, %v96, 0
  %v181 = vsel %vm119, %v97, 0
  %v184 = vsel %vm119, %v98, 0
  %v187 = vsel %vm119, %v99, 0
  %v190 = vsel %vm119, %v100, 0
  %vm192 = vcmask 1043456
  %v194 = vsel %vm192, %v117, 0
  %v197 = vsel %vm192, %v118, 0
  %199 = vmatprep.subr.bf16.mxu0 0
  %200 = vmatpush1.bf16.msra.mxu0 0
  %201 = vmatprep.subr.bf16.mxu0 0
  %202 = vmatpush1.bf16.msra.mxu0 0
  %203 = vmatprep.subr.bf16.mxu0 0
  %204 = vmatpush1.bf16.msra.mxu0 0
  %205 = vmatprep.subr.bf16.mxu0 0
  %206 = vmatpush1.bf16.msra.mxu0 0
  %207 = vmatprep.subr.bf16.mxu0 0
  %208 = vmatpush1.bf16.msra.mxu0 0
  %209 = vmatprep.subr.bf16.mxu0 0
  %210 = vmatpush1.bf16.msra.mxu0 0
  %211 = vmatprep.subr.bf16.mxu0 0
  %212 = vmatpush1.bf16.msra.mxu0 0
  %213 = vmatprep.subr.bf16.mxu0 %v197
  %214 = vmatpush1.bf16.msra.mxu0 %v194
  %215 = vmatprep.subr.bf16.mxu0 0
  %216 = vmatpush2.bf16.msra.mxu0 0
  %217 = vmatprep.subr.bf16.mxu0 0
  %218 = vmatpush2.bf16.msra.mxu0 0
  %219 = vmatprep.subr.bf16.mxu0 0
  %220 = vmatpush2.bf16.msra.mxu0 0
  %221 = vmatprep.subr.bf16.mxu0 0
  %222 = vmatpush2.bf16.msra.mxu0 0
  %223 = vmatprep.subr.bf16.mxu0 0
  %224 = vmatpush2.bf16.msra.mxu0 0
  %225 = vmatprep.subr.bf16.mxu0 0
  %226 = vmatpush2.bf16.msra.mxu0 0
  %227 = vmatprep.subr.bf16.mxu0 0
  %228 = vmatpush2.bf16.msra.mxu0 0
  %229 = vmatprep.subr.bf16.mxu0 0
  %230 = vmatpush2.bf16.msra.mxu0 0
  %231 = vmatprep.mubr.bf16.mxu0 0
  %232 = vmatmul.mubr.bf16.gmra.mxu0 %v121
  %v233 = vpop.f32.mrf.mxu0
  %v234 = vadd.f32 %v107, %v233
  %v235 = vpop.f32.mrf.mxu0
  %v236 = vadd.f32 %v111, %v235
  %v237 = vpop.f32.mrf.mxu0
  %v238 = vadd.f32 %v107, %v237
  %v239 = vpop.f32.mrf.mxu0
  %v240 = vadd.f32 %v111, %v239
  %241 = vmatprep.mubr.bf16.mxu0 0
  %242 = vmatmul.mubr.bf16.gmra.mxu0 %v124
  %v243 = vpop.f32.mrf.mxu0
  %v244 = vadd.f32 %v107, %v243
  %v245 = vpop.f32.mrf.mxu0
  %v246 = vadd.f32 %v111, %v245
  %v247 = vpop.f32.mrf.mxu0
  %v248 = vadd.f32 %v107, %v247
  %v249 = vpop.f32.mrf.mxu0
  %v250 = vadd.f32 %v111, %v249
  %251 = vmatprep.mubr.bf16.mxu0 0
  %252 = vmatmul.mubr.bf16.gmra.mxu0 %v127
  %v253 = vpop.f32.mrf.mxu0
  %v254 = vadd.f32 %v107, %v253
  %v255 = vpop.f32.mrf.mxu0
  %v256 = vadd.f32 %v111, %v255
  %v257 = vpop.f32.mrf.mxu0
  %v258 = vadd.f32 %v107, %v257
  %v259 = vpop.f32.mrf.mxu0
  %v260 = vadd.f32 %v111, %v259
  %261 = vmatprep.mubr.bf16.mxu0 0
  %262 = vmatmul.mubr.bf16.gmra.mxu0 %v130
  %v263 = vpop.f32.mrf.mxu0
  %v264 = vadd.f32 %v107, %v263
  %v265 = vpop.f32.mrf.mxu0
  %v266 = vadd.f32 %v111, %v265
  %v267 = vpop.f32.mrf.mxu0
  %v268 = vadd.f32 %v107, %v267
  %v269 = vpop.f32.mrf.mxu0
  %v270 = vadd.f32 %v111, %v269
  %271 = vmatprep.mubr.bf16.mxu0 0
  %272 = vmatmul.mubr.bf16.gmra.mxu0 %v133
  %v273 = vpop.f32.mrf.mxu0
  %v274 = vadd.f32 %v107, %v273
  %v275 = vpop.f32.mrf.mxu0
  %v276 = vadd.f32 %v111, %v275
  %v277 = vpop.f32.mrf.mxu0
  %v278 = vadd.f32 %v107, %v277
  %v279 = vpop.f32.mrf.mxu0
  %v280 = vadd.f32 %v111, %v279
  %281 = vmatprep.mubr.bf16.mxu0 0
  %282 = vmatmul.mubr.bf16.gmra.mxu0 %v136
  %v283 = vpop.f32.mrf.mxu0
  %v284 = vadd.f32 %v107, %v283
  %v285 = vpop.f32.mrf.mxu0
  %v286 = vadd.f32 %v111, %v285
  %v287 = vpop.f32.mrf.mxu0
  %v288 = vadd.f32 %v107, %v287
  %v289 = vpop.f32.mrf.mxu0
  %v290 = vadd.f32 %v111, %v289
  %291 = vmatprep.mubr.bf16.mxu0 0
  %292 = vmatmul.mubr.bf16.gmra.mxu0 %v139
  %v293 = vpop.f32.mrf.mxu0
  %v294 = vadd.f32 %v107, %v293
  %v295 = vpop.f32.mrf.mxu0
  %v296 = vadd.f32 %v111, %v295
  %v297 = vpop.f32.mrf.mxu0
  %v298 = vadd.f32 %v107, %v297
  %v299 = vpop.f32.mrf.mxu0
  %v300 = vadd.f32 %v111, %v299
  %301 = vmatprep.mubr.bf16.mxu0 0
  %302 = vmatmul.mubr.bf16.gmra.mxu0 %v142
  %v303 = vpop.f32.mrf.mxu0
  %v304 = vadd.f32 %v107, %v303
  %v305 = vpop.f32.mrf.mxu0
  %v306 = vadd.f32 %v111, %v305
  %v307 = vpop.f32.mrf.mxu0
  %v308 = vadd.f32 %v107, %v307
  %v309 = vpop.f32.mrf.mxu0
  %v310 = vadd.f32 %v111, %v309
  %311 = vmatprep.mubr.bf16.mxu0 0
  %312 = vmatmul.mubr.bf16.gmra.mxu0 %v145
  %v313 = vpop.f32.mrf.mxu0
  %v314 = vadd.f32 %v107, %v313
  %v315 = vpop.f32.mrf.mxu0
  %v316 = vadd.f32 %v111, %v315
  %v317 = vpop.f32.mrf.mxu0
  %v318 = vadd.f32 %v107, %v317
  %v319 = vpop.f32.mrf.mxu0
  %v320 = vadd.f32 %v111, %v319
  %321 = vmatprep.mubr.bf16.mxu0 0
  %322 = vmatmul.mubr.bf16.gmra.mxu0 %v148
  %v323 = vpop.f32.mrf.mxu0
  %v324 = vadd.f32 %v107, %v323
  %v325 = vpop.f32.mrf.mxu0
  %v326 = vadd.f32 %v111, %v325
  %v327 = vpop.f32.mrf.mxu0
  %v328 = vadd.f32 %v107, %v327
  %v329 = vpop.f32.mrf.mxu0
  %v330 = vadd.f32 %v111, %v329
  %331 = vmatprep.mubr.bf16.mxu0 0
  %332 = vmatmul.mubr.bf16.gmra.mxu0 %v151
  %v333 = vpop.f32.mrf.mxu0
  %v334 = vadd.f32 %v107, %v333
  %v335 = vpop.f32.mrf.mxu0
  %v336 = vadd.f32 %v111, %v335
  %v337 = vpop.f32.mrf.mxu0
  %v338 = vadd.f32 %v107, %v337
  %v339 = vpop.f32.mrf.mxu0
  %v340 = vadd.f32 %v111, %v339
  %341 = vmatprep.mubr.bf16.mxu0 0
  %342 = vmatmul.mubr.bf16.gmra.mxu0 %v154
  %v343 = vpop.f32.mrf.mxu0
  %v344 = vadd.f32 %v107, %v343
  %v345 = vpop.f32.mrf.mxu0
  %v346 = vadd.f32 %v111, %v345
  %v347 = vpop.f32.mrf.mxu0
  %v348 = vadd.f32 %v107, %v347
  %v349 = vpop.f32.mrf.mxu0
  %v350 = vadd.f32 %v111, %v349
  %351 = vmatprep.mubr.bf16.mxu0 0
  %352 = vmatmul.mubr.bf16.gmra.mxu0 %v157
  %v353 = vpop.f32.mrf.mxu0
  %v354 = vadd.f32 %v107, %v353
  %v355 = vpop.f32.mrf.mxu0
  %v356 = vadd.f32 %v111, %v355
  %v357 = vpop.f32.mrf.mxu0
  %v358 = vadd.f32 %v107, %v357
  %v359 = vpop.f32.mrf.mxu0
  %v360 = vadd.f32 %v111, %v359
  %361 = vmatprep.mubr.bf16.mxu0 0
  %362 = vmatmul.mubr.bf16.gmra.mxu0 %v160
  %v363 = vpop.f32.mrf.mxu0
  %v364 = vadd.f32 %v107, %v363
  %v365 = vpop.f32.mrf.mxu0
  %v366 = vadd.f32 %v111, %v365
  %v367 = vpop.f32.mrf.mxu0
  %v368 = vadd.f32 %v107, %v367
  %v369 = vpop.f32.mrf.mxu0
  %v370 = vadd.f32 %v111, %v369
  %371 = vmatprep.mubr.bf16.mxu0 0
  %372 = vmatmul.mubr.bf16.gmra.mxu0 %v163
  %v373 = vpop.f32.mrf.mxu0
  %v374 = vadd.f32 %v107, %v373
  %v375 = vpop.f32.mrf.mxu0
  %v376 = vadd.f32 %v111, %v375
  %v377 = vpop.f32.mrf.mxu0
  %v378 = vadd.f32 %v107, %v377
  %v379 = vpop.f32.mrf.mxu0
  %v380 = vadd.f32 %v111, %v379
  %381 = vmatprep.mubr.bf16.mxu0 0
  %382 = vmatmul.mubr.bf16.gmra.mxu0 %v166
  %v383 = vpop.f32.mrf.mxu0
  %v384 = vadd.f32 %v107, %v383
  %v385 = vpop.f32.mrf.mxu0
  %v386 = vadd.f32 %v111, %v385
  %v387 = vpop.f32.mrf.mxu0
  %v388 = vadd.f32 %v107, %v387
  %v389 = vpop.f32.mrf.mxu0
  %v390 = vadd.f32 %v111, %v389
  %391 = vmatprep.mubr.bf16.mxu0 0
  %392 = vmatmul.mubr.bf16.gmra.mxu0 %v169
  %v393 = vpop.f32.mrf.mxu0
  %v394 = vadd.f32 %v107, %v393
  %v395 = vpop.f32.mrf.mxu0
  %v396 = vadd.f32 %v111, %v395
  %v397 = vpop.f32.mrf.mxu0
  %v398 = vadd.f32 %v107, %v397
  %v399 = vpop.f32.mrf.mxu0
  %v400 = vadd.f32 %v111, %v399
  %401 = vmatprep.mubr.bf16.mxu0 0
  %402 = vmatmul.mubr.bf16.gmra.mxu0 %v172
  %v403 = vpop.f32.mrf.mxu0
  %v404 = vadd.f32 %v107, %v403
  %v405 = vpop.f32.mrf.mxu0
  %v406 = vadd.f32 %v111, %v405
  %v407 = vpop.f32.mrf.mxu0
  %v408 = vadd.f32 %v107, %v407
  %v409 = vpop.f32.mrf.mxu0
  %v410 = vadd.f32 %v111, %v409
  %411 = vmatprep.mubr.bf16.mxu0 0
  %412 = vmatmul.mubr.bf16.gmra.mxu0 %v175
  %v413 = vpop.f32.mrf.mxu0
  %v414 = vadd.f32 %v107, %v413
  %v415 = vpop.f32.mrf.mxu0
  %v416 = vadd.f32 %v111, %v415
  %v417 = vpop.f32.mrf.mxu0
  %v418 = vadd.f32 %v107, %v417
  %v419 = vpop.f32.mrf.mxu0
  %v420 = vadd.f32 %v111, %v419
  %421 = vmatprep.mubr.bf16.mxu0 0
  %422 = vmatmul.mubr.bf16.gmra.mxu0 %v178
  %v423 = vpop.f32.mrf.mxu0
  %v424 = vadd.f32 %v107, %v423
  %v425 = vpop.f32.mrf.mxu0
  %v426 = vadd.f32 %v111, %v425
  %v427 = vpop.f32.mrf.mxu0
  %v428 = vadd.f32 %v107, %v427
  %v429 = vpop.f32.mrf.mxu0
  %v430 = vadd.f32 %v111, %v429
  %431 = vmatprep.mubr.bf16.mxu0 0
  %432 = vmatmul.mubr.bf16.gmra.mxu0 %v181
  %v433 = vpop.f32.mrf.mxu0
  %v434 = vadd.f32 %v107, %v433
  %v435 = vpop.f32.mrf.mxu0
  %v436 = vadd.f32 %v111, %v435
  %v437 = vpop.f32.mrf.mxu0
  %v438 = vadd.f32 %v107, %v437
  %v439 = vpop.f32.mrf.mxu0
  %v440 = vadd.f32 %v111, %v439
  %441 = vmatprep.mubr.bf16.mxu0 0
  %442 = vmatmul.mubr.bf16.gmra.mxu0 %v184
  %v443 = vpop.f32.mrf.mxu0
  %v444 = vadd.f32 %v107, %v443
  %v445 = vpop.f32.mrf.mxu0
  %v446 = vadd.f32 %v111, %v445
  %v447 = vpop.f32.mrf.mxu0
  %v448 = vadd.f32 %v107, %v447
  %v449 = vpop.f32.mrf.mxu0
  %v450 = vadd.f32 %v111, %v449
  %451 = vmatprep.mubr.bf16.mxu0 0
  %452 = vmatmul.mubr.bf16.gmra.mxu0 %v187
  %v453 = vpop.f32.mrf.mxu0
  %v454 = vadd.f32 %v107, %v453
  %v455 = vpop.f32.mrf.mxu0
  %v456 = vadd.f32 %v111, %v455
  %v457 = vpop.f32.mrf.mxu0
  %v458 = vadd.f32 %v107, %v457
  %v459 = vpop.f32.mrf.mxu0
  %v460 = vadd.f32 %v111, %v459
  %461 = vmatprep.mubr.bf16.mxu0 0
  %462 = vmatmul.mubr.bf16.gmra.mxu0 %v190
  %v463 = vpop.f32.mrf.mxu0
  %v464 = vadd.f32 %v107, %v463
  %v465 = vpop.f32.mrf.mxu0
  %v466 = vadd.f32 %v111, %v465
  %v467 = vpop.f32.mrf.mxu0
  %v468 = vadd.f32 %v107, %v467
  %v469 = vpop.f32.mrf.mxu0
  %v470 = vadd.f32 %v111, %v469
  %471 = vdwg.mxu0
  %v472 = vmax.f32 %v234, 0.0
  %v473 = vmax.f32 %v236, 0.0
  %v474 = vmax.f32 %v238, 0.0
  %v475 = vmax.f32 %v240, 0.0
  %v476 = vmax.f32 %v244, 0.0
  %v477 = vmax.f32 %v246, 0.0
  %v478 = vmax.f32 %v248, 0.0
  %v479 = vmax.f32 %v250, 0.0
  %v480 = vmax.f32 %v254, 0.0
  %v481 = vmax.f32 %v256, 0.0
  %v482 = vmax.f32 %v258, 0.0
  %v483 = vmax.f32 %v260, 0.0
  %v484 = vmax.f32 %v264, 0.0
  %v485 = vmax.f32 %v266, 0.0
  %v486 = vmax.f32 %v268, 0.0
  %v487 = vmax.f32 %v270, 0.0
  %v488 = vmax.f32 %v274, 0.0
  %v489 = vmax.f32 %v276, 0.0
  %v490 = vmax.f32 %v278, 0.0
  %v491 = vmax.f32 %v280, 0.0
  %v492 = vmax.f32 %v284, 0.0
  %v493 = vmax.f32 %v286, 0.0
  %v494 = vmax.f32 %v288, 0.0
  %v495 = vmax.f32 %v290, 0.0
  %v496 = vmax.f32 %v294, 0.0
  %v497 = vmax.f32 %v296, 0.0
  %v498 = vmax.f32 %v298, 0.0
  %v499 = vmax.f32 %v300, 0.0
  %v500 = vmax.f32 %v304, 0.0
  %v501 = vmax.f32 %v306, 0.0
  %v502 = vmax.f32 %v308, 0.0
  %v503 = vmax.f32 %v310, 0.0
  %v504 = vmax.f32 %v314, 0.0
  %v505 = vmax.f32 %v316, 0.0
  %v506 = vmax.f32 %v318, 0.0
  %v507 = vmax.f32 %v320, 0.0
  %v508 = vmax.f32 %v324, 0.0
  %v509 = vmax.f32 %v326, 0.0
  %v510 = vmax.f32 %v328, 0.0
  %v511 = vmax.f32 %v330, 0.0
  %v512 = vmax.f32 %v334, 0.0
  %v513 = vmax.f32 %v336, 0.0
  %v514 = vmax.f32 %v338, 0.0
  %v515 = vmax.f32 %v340, 0.0
  %v516 = vmax.f32 %v344, 0.0
  %v517 = vmax.f32 %v346, 0.0
  %v518 = vmax.f32 %v348, 0.0
  %v519 = vmax.f32 %v350, 0.0
  %v520 = vmax.f32 %v354, 0.0
  %v521 = vmax.f32 %v356, 0.0
  %v522 = vmax.f32 %v358, 0.0
  %v523 = vmax.f32 %v360, 0.0
  %v524 = vmax.f32 %v364, 0.0
  %v525 = vmax.f32 %v366, 0.0
  %v526 = vmax.f32 %v368, 0.0
  %v527 = vmax.f32 %v370, 0.0
  %v528 = vmax.f32 %v374, 0.0
  %v529 = vmax.f32 %v376, 0.0
  %v530 = vmax.f32 %v378, 0.0
  %v531 = vmax.f32 %v380, 0.0
  %v532 = vmax.f32 %v384, 0.0
  %v533 = vmax.f32 %v386, 0.0
  %v534 = vmax.f32 %v388, 0.0
  %v535 = vmax.f32 %v390, 0.0
  %v536 = vmax.f32 %v394, 0.0
  %v537 = vmax.f32 %v396, 0.0
  %v538 = vmax.f32 %v398, 0.0
  %v539 = vmax.f32 %v400, 0.0
  %v540 = vmax.f32 %v404, 0.0
  %v541 = vmax.f32 %v406, 0.0
  %v542 = vmax.f32 %v408, 0.0
  %v543 = vmax.f32 %v410, 0.0
  %v544 = vmax.f32 %v414, 0.0
  %v545 = vmax.f32 %v416, 0.0
  %v546 = vmax.f32 %v418, 0.0
  %v547 = vmax.f32 %v420, 0.0
  %v548 = vmax.f32 %v424, 0.0
  %v549 = vmax.f32 %v426, 0.0
  %v550 = vmax.f32 %v428, 0.0
  %v551 = vmax.f32 %v430, 0.0
  %v552 = vmax.f32 %v434, 0.0
  %v553 = vmax.f32 %v436, 0.0
  %v554 = vmax.f32 %v438, 0.0
  %v555 = vmax.f32 %v440, 0.0
  %v556 = vmax.f32 %v444, 0.0
  %v557 = vmax.f32 %v446, 0.0
  %v558 = vmax.f32 %v448, 0.0
  %v559 = vmax.f32 %v450, 0.0
  %v560 = vmax.f32 %v454, 0.0
  %v561 = vmax.f32 %v456, 0.0
  %v562 = vmax.f32 %v458, 0.0
  %v563 = vmax.f32 %v460, 0.0
  %v564 = vmax.f32 %v464, 0.0
  %v565 = vmax.f32 %v466, 0.0
  %v566 = vmax.f32 %v468, 0.0
  %v567 = vmax.f32 %v470, 0.0
  %v568 = vpack.c.bf16 %v474, %v472
  %v569 = vpack.c.bf16 %v475, %v473
  %v570 = vpack.c.bf16 %v478, %v476
  %v571 = vpack.c.bf16 %v479, %v477
  %v572 = vpack.c.bf16 %v482, %v480
  %v573 = vpack.c.bf16 %v483, %v481
  %v574 = vpack.c.bf16 %v486, %v484
  %v575 = vpack.c.bf16 %v487, %v485
  %v576 = vpack.c.bf16 %v490, %v488
  %v577 = vpack.c.bf16 %v491, %v489
  %v578 = vpack.c.bf16 %v494, %v492
  %v579 = vpack.c.bf16 %v495, %v493
  %v580 = vpack.c.bf16 %v498, %v496
  %v581 = vpack.c.bf16 %v499, %v497
  %v582 = vpack.c.bf16 %v502, %v500
  %v583 = vpack.c.bf16 %v503, %v501
  %v584 = vpack.c.bf16 %v506, %v504
  %v585 = vpack.c.bf16 %v507, %v505
  %v586 = vpack.c.bf16 %v510, %v508
  %v587 = vpack.c.bf16 %v511, %v509
  %v588 = vpack.c.bf16 %v514, %v512
  %v589 = vpack.c.bf16 %v515, %v513
  %v590 = vpack.c.bf16 %v518, %v516
  %v591 = vpack.c.bf16 %v519, %v517
  %v592 = vpack.c.bf16 %v522, %v520
  %v593 = vpack.c.bf16 %v523, %v521
  %v594 = vpack.c.bf16 %v526, %v524
  %v595 = vpack.c.bf16 %v527, %v525
  %v596 = vpack.c.bf16 %v530, %v528
  %v597 = vpack.c.bf16 %v531, %v529
  %v598 = vpack.c.bf16 %v534, %v532
  %v599 = vpack.c.bf16 %v535, %v533
  %v600 = vpack.c.bf16 %v538, %v536
  %v601 = vpack.c.bf16 %v539, %v537
  %v602 = vpack.c.bf16 %v542, %v540
  %v603 = vpack.c.bf16 %v543, %v541
  %v604 = vpack.c.bf16 %v546, %v544
  %v605 = vpack.c.bf16 %v547, %v545
  %v606 = vpack.c.bf16 %v550, %v548
  %v607 = vpack.c.bf16 %v551, %v549
  %v608 = vpack.c.bf16 %v554, %v552
  %v609 = vpack.c.bf16 %v555, %v553
  %v610 = vpack.c.bf16 %v558, %v556
  %v611 = vpack.c.bf16 %v559, %v557
  %v612 = vpack.c.bf16 %v562, %v560
  %v613 = vpack.c.bf16 %v563, %v561
  %v614 = vpack.c.bf16 %v566, %v564
  %v615 = vpack.c.bf16 %v567, %v565
  %v616 = vld [vmem:[%s3] sm:$0xff]
  %v617 = vld [vmem:[%s3 + $0x8] sm:$0xff]
  %v618 = vld [vmem:[%s3 + $0x10] sm:$0xff]
  %v619 = vld [vmem:[%s3 + $0x18] sm:$0xff]
  %v620 = vld [vmem:[%s3 + $0x20] sm:$0xff]
  %v621 = vld [vmem:[%s3 + $0x28] sm:$0xff]
  %v622 = vld [vmem:[%s3 + $0x30] sm:$0xff]
  %v623 = vld [vmem:[%s3 + $0x38] sm:$0xff]
  %v624 = vld [vmem:[%s3 + $0x40] sm:$0xff]
  %v625 = vld [vmem:[%s3 + $0x48] sm:$0xff]
  %v626 = vld [vmem:[%s3 + $0x50] sm:$0xff]
  %v627 = vld [vmem:[%s3 + $0x58] sm:$0xff]
  %v628 = vld [vmem:[%s3 + $0x60] sm:$0xff]
  %v629 = vld [vmem:[%s3 + $0x68] sm:$0xff]
  %v630 = vld [vmem:[%s3 + $0x70] sm:$0xff]
  %v631 = vld [vmem:[%s3 + $0x78] sm:$0xff]
  %v632 = vld [vmem:[%s3 + $0x80] sm:$0xff]
  %v633 = vld [vmem:[%s3 + $0x88] sm:$0xff]
  %v634 = vld [vmem:[%s3 + $0x90] sm:$0xff]
  %v635 = vld [vmem:[%s3 + $0x98] sm:$0xff]
  %v636 = vld [vmem:[%s3 + $0xa0] sm:$0xff]
  %v637 = vld [vmem:[%s3 + $0xa8] sm:$0xff]
  %v638 = vld [vmem:[%s3 + $0xb0] sm:$0xff]
  %v639 = vld [vmem:[%s3 + $0xb8] sm:$0xff]
  %v640 = vld [vmem:[%s3 + $0xc0] sm:$0xff]
  %v641 = vld [vmem:[%s3 + $0xc8] sm:$0xff]
  %v642 = vld [vmem:[%s3 + $0xd0] sm:$0xff]
  %v643 = vld [vmem:[%s3 + $0xd8] sm:$0xff]
  %v644 = vld [vmem:[%s3 + $0xe0] sm:$0xff]
  %v645 = vld [vmem:[%s3 + $0xe8] sm:$0xff]
  %v646 = vld [vmem:[%s3 + $0xf0] sm:$0xff]
  %v647 = vld [vmem:[%s3 + $0xf8] sm:$0xff]
  %v648 = vld [vmem:[%s3 + $0x100] sm:$0xff]
  %v649 = vld [vmem:[%s3 + $0x108] sm:$0xff]
  %v650 = vld [vmem:[%s3 + $0x110] sm:$0xff]
  %v651 = vld [vmem:[%s3 + $0x118] sm:$0xff]
  %v652 = vld [vmem:[%s3 + $0x120] sm:$0xff]
  %v653 = vld [vmem:[%s3 + $0x128] sm:$0xff]
  %v654 = vld [vmem:[%s3 + $0x130] sm:$0xff]
  %v655 = vld [vmem:[%s3 + $0x138] sm:$0xff]
  %v656 = vld [vmem:[%s3 + $0x140] sm:$0xff]
  %v657 = vld [vmem:[%s3 + $0x148] sm:$0xff]
  %v658 = vld [vmem:[%s3 + $0x150] sm:$0xff]
  %v659 = vld [vmem:[%s3 + $0x158] sm:$0xff]
  %v660 = vld [vmem:[%s3 + $0x160] sm:$0xff]
  %v661 = vld [vmem:[%s3 + $0x168] sm:$0xff]
  %v662 = vld [vmem:[%s3 + $0x170] sm:$0xff]
  %v663 = vld [vmem:[%s3 + $0x178] sm:$0xff]
  %v664 = vld [vmem:[%s3 + $0x180] sm:$0xff]
  %v665 = vld [vmem:[%s3 + $0x188] sm:$0xff]
  %v666 = vld [vmem:[%s3 + $0x190] sm:$0xff]
  %v667 = vld [vmem:[%s3 + $0x198] sm:$0xff]
  %v668 = vld [vmem:[%s3 + $0x1a0] sm:$0xff]
  %v669 = vld [vmem:[%s3 + $0x1a8] sm:$0xff]
  %v670 = vld [vmem:[%s3 + $0x1b0] sm:$0xff]
  %v671 = vld [vmem:[%s3 + $0x1b8] sm:$0xff]
  %v672 = vld [vmem:[%s3 + $0x1c0] sm:$0xff]
  %v673 = vld [vmem:[%s3 + $0x1c8] sm:$0xff]
  %v674 = vld [vmem:[%s3 + $0x1d0] sm:$0xff]
  %v675 = vld [vmem:[%s3 + $0x1d8] sm:$0xff]
  %v676 = vld [vmem:[%s3 + $0x1e0] sm:$0xff]
  %v677 = vld [vmem:[%s3 + $0x1e8] sm:$0xff]
  %v678 = vld [vmem:[%s3 + $0x1f0] sm:$0xff]
  %v679 = vld [vmem:[%s3 + $0x1f8] sm:$0xff]
  %v680 = vld [vmem:[%s4] sm:$0xf]
  %v682 = vlaneseq
  %v683 = vshrl.u32 %v682, 7
  %v684 = vsub.s32 0, %v683
  %v685 = vrot.slane %v680, %v684
  %v686 = vlaneseq
  %v687 = vshrl.u32 %v686, 7
  %v688 = vsub.s32 1, %v687
  %v689 = vrot.slane %v680, %v688
  %v690 = vlaneseq
  %v691 = vshrl.u32 %v690, 7
  %v692 = vsub.s32 2, %v691
  %v693 = vrot.slane %v680, %v692
  %v694 = vlaneseq
  %v695 = vshrl.u32 %v694, 7
  %v696 = vsub.s32 3, %v695
  %v697 = vrot.slane %v680, %v696
  %v766 = vunpack.c.l.b16 %v616
  %v767 = vunpack.c.h.b16 %v616
  %v768 = vunpack.c.l.b16 %v617
  %v769 = vunpack.c.h.b16 %v617
  %v770 = vunpack.c.l.b16 %v618
  %v771 = vunpack.c.h.b16 %v618
  %v772 = vunpack.c.l.b16 %v619
  %v773 = vunpack.c.h.b16 %v619
  %v774 = vunpack.c.l.b16 %v620
  %v775 = vunpack.c.h.b16 %v620
  %v776 = vunpack.c.l.b16 %v621
  %v777 = vunpack.c.h.b16 %v621
  %v778 = vunpack.c.l.b16 %v622
  %v779 = vunpack.c.h.b16 %v622
  %v780 = vunpack.c.l.b16 %v623
  %v781 = vunpack.c.h.b16 %v623
  %v782 = vunpack.c.l.b16 %v624
  %v783 = vunpack.c.h.b16 %v624
  %v784 = vunpack.c.l.b16 %v625
  %v785 = vunpack.c.h.b16 %v625
  %v786 = vunpack.c.l.b16 %v626
  %v787 = vunpack.c.h.b16 %v626
  %v788 = vunpack.c.l.b16 %v627
  %v789 = vunpack.c.h.b16 %v627
  %v790 = vunpack.c.l.b16 %v628
  %v791 = vunpack.c.h.b16 %v628
  %v792 = vunpack.c.l.b16 %v629
  %v793 = vunpack.c.h.b16 %v629
  %v794 = vunpack.c.l.b16 %v630
  %v795 = vunpack.c.h.b16 %v630
  %v796 = vunpack.c.l.b16 %v631
  %v797 = vunpack.c.h.b16 %v631
  %v798 = vunpack.c.l.b16 %v632
  %v799 = vunpack.c.h.b16 %v632
  %v800 = vunpack.c.l.b16 %v633
  %v801 = vunpack.c.h.b16 %v633
  %v802 = vunpack.c.l.b16 %v634
  %v803 = vunpack.c.h.b16 %v634
  %v804 = vunpack.c.l.b16 %v635
  %v805 = vunpack.c.h.b16 %v635
  %v806 = vunpack.c.l.b16 %v636
  %v807 = vunpack.c.h.b16 %v636
  %v808 = vunpack.c.l.b16 %v637
  %v809 = vunpack.c.h.b16 %v637
  %v810 = vunpack.c.l.b16 %v638
  %v811 = vunpack.c.h.b16 %v638
  %v812 = vunpack.c.l.b16 %v639
  %v813 = vunpack.c.h.b16 %v639
  %v814 = vunpack.c.l.b16 %v640
  %v815 = vunpack.c.h.b16 %v640
  %v816 = vunpack.c.l.b16 %v641
  %v817 = vunpack.c.h.b16 %v641
  %v818 = vunpack.c.l.b16 %v642
  %v819 = vunpack.c.h.b16 %v642
  %v820 = vunpack.c.l.b16 %v643
  %v821 = vunpack.c.h.b16 %v643
  %v822 = vunpack.c.l.b16 %v644
  %v823 = vunpack.c.h.b16 %v644
  %v824 = vunpack.c.l.b16 %v645
  %v825 = vunpack.c.h.b16 %v645
  %v826 = vunpack.c.l.b16 %v646
  %v827 = vunpack.c.h.b16 %v646
  %v828 = vunpack.c.l.b16 %v647
  %v829 = vunpack.c.h.b16 %v647
  %v830 = vunpack.c.l.b16 %v648
  %v831 = vunpack.c.h.b16 %v648
  %v832 = vunpack.c.l.b16 %v649
  %v833 = vunpack.c.h.b16 %v649
  %v834 = vunpack.c.l.b16 %v650
  %v835 = vunpack.c.h.b16 %v650
  %v836 = vunpack.c.l.b16 %v651
  %v837 = vunpack.c.h.b16 %v651
  %v838 = vunpack.c.l.b16 %v652
  %v839 = vunpack.c.h.b16 %v652
  %v840 = vunpack.c.l.b16 %v653
  %v841 = vunpack.c.h.b16 %v653
  %v842 = vunpack.c.l.b16 %v654
  %v843 = vunpack.c.h.b16 %v654
  %v844 = vunpack.c.l.b16 %v655
  %v845 = vunpack.c.h.b16 %v655
  %v846 = vunpack.c.l.b16 %v656
  %v847 = vunpack.c.h.b16 %v656
  %v848 = vunpack.c.l.b16 %v657
  %v849 = vunpack.c.h.b16 %v657
  %v850 = vunpack.c.l.b16 %v658
  %v851 = vunpack.c.h.b16 %v658
  %v852 = vunpack.c.l.b16 %v659
  %v853 = vunpack.c.h.b16 %v659
  %v854 = vunpack.c.l.b16 %v660
  %v855 = vunpack.c.h.b16 %v660
  %v856 = vunpack.c.l.b16 %v661
  %v857 = vunpack.c.h.b16 %v661
  %v858 = vunpack.c.l.b16 %v662
  %v859 = vunpack.c.h.b16 %v662
  %v860 = vunpack.c.l.b16 %v663
  %v861 = vunpack.c.h.b16 %v663
  %v862 = vunpack.c.l.b16 %v664
  %v863 = vunpack.c.h.b16 %v664
  %v864 = vunpack.c.l.b16 %v665
  %v865 = vunpack.c.h.b16 %v665
  %v866 = vunpack.c.l.b16 %v666
  %v867 = vunpack.c.h.b16 %v666
  %v868 = vunpack.c.l.b16 %v667
  %v869 = vunpack.c.h.b16 %v667
  %v870 = vunpack.c.l.b16 %v668
  %v871 = vunpack.c.h.b16 %v668
  %v872 = vunpack.c.l.b16 %v669
  %v873 = vunpack.c.h.b16 %v669
  %v874 = vunpack.c.l.b16 %v670
  %v875 = vunpack.c.h.b16 %v670
  %v876 = vunpack.c.l.b16 %v671
  %v877 = vunpack.c.h.b16 %v671
  %v878 = vunpack.c.l.b16 %v672
  %v879 = vunpack.c.h.b16 %v672
  %v880 = vunpack.c.l.b16 %v673
  %v881 = vunpack.c.h.b16 %v673
  %v882 = vunpack.c.l.b16 %v674
  %v883 = vunpack.c.h.b16 %v674
  %v884 = vunpack.c.l.b16 %v675
  %v885 = vunpack.c.h.b16 %v675
  %v886 = vunpack.c.l.b16 %v676
  %v887 = vunpack.c.h.b16 %v676
  %v888 = vunpack.c.l.b16 %v677
  %v889 = vunpack.c.h.b16 %v677
  %v890 = vunpack.c.l.b16 %v678
  %v891 = vunpack.c.h.b16 %v678
  %v892 = vunpack.c.l.b16 %v679
  %v893 = vunpack.c.h.b16 %v679
  %v894 = vpack.c.b16 %v770, %v766
  %v895 = vpack.c.b16 %v771, %v767
  %v896 = vpack.c.b16 %v772, %v768
  %v897 = vpack.c.b16 %v773, %v769
  %v898 = vpack.c.b16 %v778, %v774
  %v899 = vpack.c.b16 %v779, %v775
  %v900 = vpack.c.b16 %v780, %v776
  %v901 = vpack.c.b16 %v781, %v777
  %v902 = vpack.c.b16 %v786, %v782
  %v903 = vpack.c.b16 %v787, %v783
  %v904 = vpack.c.b16 %v788, %v784
  %v905 = vpack.c.b16 %v789, %v785
  %v906 = vpack.c.b16 %v794, %v790
  %v907 = vpack.c.b16 %v795, %v791
  %v908 = vpack.c.b16 %v796, %v792
  %v909 = vpack.c.b16 %v797, %v793
  %v910 = vpack.c.b16 %v802, %v798
  %v911 = vpack.c.b16 %v803, %v799
  %v912 = vpack.c.b16 %v804, %v800
  %v913 = vpack.c.b16 %v805, %v801
  %v914 = vpack.c.b16 %v810, %v806
  %v915 = vpack.c.b16 %v811, %v807
  %v916 = vpack.c.b16 %v812, %v808
  %v917 = vpack.c.b16 %v813, %v809
  %v918 = vpack.c.b16 %v818, %v814
  %v919 = vpack.c.b16 %v819, %v815
  %v920 = vpack.c.b16 %v820, %v816
  %v921 = vpack.c.b16 %v821, %v817
  %v922 = vpack.c.b16 %v826, %v822
  %v923 = vpack.c.b16 %v827, %v823
  %v924 = vpack.c.b16 %v828, %v824
  %v925 = vpack.c.b16 %v829, %v825
  %v926 = vpack.c.b16 %v834, %v830
  %v927 = vpack.c.b16 %v835, %v831
  %v928 = vpack.c.b16 %v836, %v832
  %v929 = vpack.c.b16 %v837, %v833
  %v930 = vpack.c.b16 %v842, %v838
  %v931 = vpack.c.b16 %v843, %v839
  %v932 = vpack.c.b16 %v844, %v840
  %v933 = vpack.c.b16 %v845, %v841
  %v934 = vpack.c.b16 %v850, %v846
  %v935 = vpack.c.b16 %v851, %v847
  %v936 = vpack.c.b16 %v852, %v848
  %v937 = vpack.c.b16 %v853, %v849
  %v938 = vpack.c.b16 %v858, %v854
  %v939 = vpack.c.b16 %v859, %v855
  %v940 = vpack.c.b16 %v860, %v856
  %v941 = vpack.c.b16 %v861, %v857
  %v942 = vpack.c.b16 %v866, %v862
  %v943 = vpack.c.b16 %v867, %v863
  %v944 = vpack.c.b16 %v868, %v864
  %v945 = vpack.c.b16 %v869, %v865
  %v946 = vpack.c.b16 %v874, %v870
  %v947 = vpack.c.b16 %v875, %v871
  %v948 = vpack.c.b16 %v876, %v872
  %v949 = vpack.c.b16 %v877, %v873
  %v950 = vpack.c.b16 %v882, %v878
  %v951 = vpack.c.b16 %v883, %v879
  %v952 = vpack.c.b16 %v884, %v880
  %v953 = vpack.c.b16 %v885, %v881
  %v954 = vpack.c.b16 %v890, %v886
  %v955 = vpack.c.b16 %v891, %v887
  %v956 = vpack.c.b16 %v892, %v888
  %v957 = vpack.c.b16 %v893, %v889
  %1022 = vmatprep.subr.bf16.mxu0 %v923
  %1023 = vmatpush1.bf16.msra.mxu0 %v922
  %1024 = vmatprep.subr.bf16.mxu0 %v919
  %1025 = vmatpush1.bf16.msra.mxu0 %v918
  %1026 = vmatprep.subr.bf16.mxu0 %v915
  %1027 = vmatpush1.bf16.msra.mxu0 %v914
  %1028 = vmatprep.subr.bf16.mxu0 %v911
  %1029 = vmatpush1.bf16.msra.mxu0 %v910
  %1030 = vmatprep.subr.bf16.mxu0 %v907
  %1031 = vmatpush1.bf16.msra.mxu0 %v906
  %1032 = vmatprep.subr.bf16.mxu0 %v903
  %1033 = vmatpush1.bf16.msra.mxu0 %v902
  %1034 = vmatprep.subr.bf16.mxu0 %v899
  %1035 = vmatpush1.bf16.msra.mxu0 %v898
  %1036 = vmatprep.subr.bf16.mxu0 %v895
  %1037 = vmatpush1.bf16.msra.mxu0 %v894
  %1038 = vmatprep.subr.bf16.mxu0 %v955
  %1039 = vmatpush2.bf16.msra.mxu0 %v954
  %1040 = vmatprep.subr.bf16.mxu0 %v951
  %1041 = vmatpush2.bf16.msra.mxu0 %v950
  %1042 = vmatprep.subr.bf16.mxu0 %v947
  %1043 = vmatpush2.bf16.msra.mxu0 %v946
  %1044 = vmatprep.subr.bf16.mxu0 %v943
  %1045 = vmatpush2.bf16.msra.mxu0 %v942
  %1046 = vmatprep.subr.bf16.mxu0 %v939
  %1047 = vmatpush2.bf16.msra.mxu0 %v938
  %1048 = vmatprep.subr.bf16.mxu0 %v935
  %1049 = vmatpush2.bf16.msra.mxu0 %v934
  %1050 = vmatprep.subr.bf16.mxu0 %v931
  %1051 = vmatpush2.bf16.msra.mxu0 %v930
  %1052 = vmatprep.subr.bf16.mxu0 %v927
  %1053 = vmatpush2.bf16.msra.mxu0 %v926
  %1054 = vmatprep.mubr.bf16.mxu0 %v569
  %1055 = vmatmul.mubr.bf16.gmra.mxu0 %v568
  %v1056 = vpop.f32.mrf.mxu0
  %v1057 = vadd.f32 %v685, %v1056
  %v1058 = vpop.f32.mrf.mxu0
  %v1059 = vadd.f32 %v689, %v1058
  %v1060 = vpop.f32.mrf.mxu0
  %v1061 = vadd.f32 %v685, %v1060
  %v1062 = vpop.f32.mrf.mxu0
  %v1063 = vadd.f32 %v689, %v1062
  %1064 = vmatprep.mubr.bf16.mxu0 %v571
  %1065 = vmatmul.mubr.bf16.gmra.mxu0 %v570
  %v1066 = vpop.f32.mrf.mxu0
  %v1067 = vadd.f32 %v685, %v1066
  %v1068 = vpop.f32.mrf.mxu0
  %v1069 = vadd.f32 %v689, %v1068
  %v1070 = vpop.f32.mrf.mxu0
  %v1071 = vadd.f32 %v685, %v1070
  %v1072 = vpop.f32.mrf.mxu0
  %v1073 = vadd.f32 %v689, %v1072
  %1074 = vmatprep.mubr.bf16.mxu0 %v573
  %1075 = vmatmul.mubr.bf16.gmra.mxu0 %v572
  %v1076 = vpop.f32.mrf.mxu0
  %v1077 = vadd.f32 %v685, %v1076
  %v1078 = vpop.f32.mrf.mxu0
  %v1079 = vadd.f32 %v689, %v1078
  %v1080 = vpop.f32.mrf.mxu0
  %v1081 = vadd.f32 %v685, %v1080
  %v1082 = vpop.f32.mrf.mxu0
  %v1083 = vadd.f32 %v689, %v1082
  %1084 = vmatprep.mubr.bf16.mxu0 %v575
  %1085 = vmatmul.mubr.bf16.gmra.mxu0 %v574
  %v1086 = vpop.f32.mrf.mxu0
  %v1087 = vadd.f32 %v685, %v1086
  %v1088 = vpop.f32.mrf.mxu0
  %v1089 = vadd.f32 %v689, %v1088
  %v1090 = vpop.f32.mrf.mxu0
  %v1091 = vadd.f32 %v685, %v1090
  %v1092 = vpop.f32.mrf.mxu0
  %v1093 = vadd.f32 %v689, %v1092
  %1094 = vmatprep.mubr.bf16.mxu0 %v577
  %1095 = vmatmul.mubr.bf16.gmra.mxu0 %v576
  %v1096 = vpop.f32.mrf.mxu0
  %v1097 = vadd.f32 %v685, %v1096
  %v1098 = vpop.f32.mrf.mxu0
  %v1099 = vadd.f32 %v689, %v1098
  %v1100 = vpop.f32.mrf.mxu0
  %v1101 = vadd.f32 %v685, %v1100
  %v1102 = vpop.f32.mrf.mxu0
  %v1103 = vadd.f32 %v689, %v1102
  %1104 = vmatprep.mubr.bf16.mxu0 %v579
  %1105 = vmatmul.mubr.bf16.gmra.mxu0 %v578
  %v1106 = vpop.f32.mrf.mxu0
  %v1107 = vadd.f32 %v685, %v1106
  %v1108 = vpop.f32.mrf.mxu0
  %v1109 = vadd.f32 %v689, %v1108
  %v1110 = vpop.f32.mrf.mxu0
  %v1111 = vadd.f32 %v685, %v1110
  %v1112 = vpop.f32.mrf.mxu0
  %v1113 = vadd.f32 %v689, %v1112
  %1114 = vmatprep.mubr.bf16.mxu0 %v581
  %1115 = vmatmul.mubr.bf16.gmra.mxu0 %v580
  %v1116 = vpop.f32.mrf.mxu0
  %v1117 = vadd.f32 %v685, %v1116
  %v1118 = vpop.f32.mrf.mxu0
  %v1119 = vadd.f32 %v689, %v1118
  %v1120 = vpop.f32.mrf.mxu0
  %v1121 = vadd.f32 %v685, %v1120
  %v1122 = vpop.f32.mrf.mxu0
  %v1123 = vadd.f32 %v689, %v1122
  %1124 = vmatprep.mubr.bf16.mxu0 %v583
  %1125 = vmatmul.mubr.bf16.gmra.mxu0 %v582
  %v1126 = vpop.f32.mrf.mxu0
  %v1127 = vadd.f32 %v685, %v1126
  %v1128 = vpop.f32.mrf.mxu0
  %v1129 = vadd.f32 %v689, %v1128
  %v1130 = vpop.f32.mrf.mxu0
  %v1131 = vadd.f32 %v685, %v1130
  %v1132 = vpop.f32.mrf.mxu0
  %v1133 = vadd.f32 %v689, %v1132
  %1134 = vmatprep.mubr.bf16.mxu0 %v585
  %1135 = vmatmul.mubr.bf16.gmra.mxu0 %v584
  %v1136 = vpop.f32.mrf.mxu0
  %v1137 = vadd.f32 %v685, %v1136
  %v1138 = vpop.f32.mrf.mxu0
  %v1139 = vadd.f32 %v689, %v1138
  %v1140 = vpop.f32.mrf.mxu0
  %v1141 = vadd.f32 %v685, %v1140
  %v1142 = vpop.f32.mrf.mxu0
  %v1143 = vadd.f32 %v689, %v1142
  %1144 = vmatprep.mubr.bf16.mxu0 %v587
  %1145 = vmatmul.mubr.bf16.gmra.mxu0 %v586
  %v1146 = vpop.f32.mrf.mxu0
  %v1147 = vadd.f32 %v685, %v1146
  %v1148 = vpop.f32.mrf.mxu0
  %v1149 = vadd.f32 %v689, %v1148
  %v1150 = vpop.f32.mrf.mxu0
  %v1151 = vadd.f32 %v685, %v1150
  %v1152 = vpop.f32.mrf.mxu0
  %v1153 = vadd.f32 %v689, %v1152
  %1154 = vmatprep.mubr.bf16.mxu0 %v589
  %1155 = vmatmul.mubr.bf16.gmra.mxu0 %v588
  %v1156 = vpop.f32.mrf.mxu0
  %v1157 = vadd.f32 %v685, %v1156
  %v1158 = vpop.f32.mrf.mxu0
  %v1159 = vadd.f32 %v689, %v1158
  %v1160 = vpop.f32.mrf.mxu0
  %v1161 = vadd.f32 %v685, %v1160
  %v1162 = vpop.f32.mrf.mxu0
  %v1163 = vadd.f32 %v689, %v1162
  %1164 = vmatprep.mubr.bf16.mxu0 %v591
  %1165 = vmatmul.mubr.bf16.gmra.mxu0 %v590
  %v1166 = vpop.f32.mrf.mxu0
  %v1167 = vadd.f32 %v685, %v1166
  %v1168 = vpop.f32.mrf.mxu0
  %v1169 = vadd.f32 %v689, %v1168
  %v1170 = vpop.f32.mrf.mxu0
  %v1171 = vadd.f32 %v685, %v1170
  %v1172 = vpop.f32.mrf.mxu0
  %v1173 = vadd.f32 %v689, %v1172
  %1174 = vmatprep.mubr.bf16.mxu0 %v593
  %1175 = vmatmul.mubr.bf16.gmra.mxu0 %v592
  %v1176 = vpop.f32.mrf.mxu0
  %v1177 = vadd.f32 %v685, %v1176
  %v1178 = vpop.f32.mrf.mxu0
  %v1179 = vadd.f32 %v689, %v1178
  %v1180 = vpop.f32.mrf.mxu0
  %v1181 = vadd.f32 %v685, %v1180
  %v1182 = vpop.f32.mrf.mxu0
  %v1183 = vadd.f32 %v689, %v1182
  %1184 = vmatprep.mubr.bf16.mxu0 %v595
  %1185 = vmatmul.mubr.bf16.gmra.mxu0 %v594
  %v1186 = vpop.f32.mrf.mxu0
  %v1187 = vadd.f32 %v685, %v1186
  %v1188 = vpop.f32.mrf.mxu0
  %v1189 = vadd.f32 %v689, %v1188
  %v1190 = vpop.f32.mrf.mxu0
  %v1191 = vadd.f32 %v685, %v1190
  %v1192 = vpop.f32.mrf.mxu0
  %v1193 = vadd.f32 %v689, %v1192
  %1194 = vmatprep.mubr.bf16.mxu0 %v597
  %1195 = vmatmul.mubr.bf16.gmra.mxu0 %v596
  %v1196 = vpop.f32.mrf.mxu0
  %v1197 = vadd.f32 %v685, %v1196
  %v1198 = vpop.f32.mrf.mxu0
  %v1199 = vadd.f32 %v689, %v1198
  %v1200 = vpop.f32.mrf.mxu0
  %v1201 = vadd.f32 %v685, %v1200
  %v1202 = vpop.f32.mrf.mxu0
  %v1203 = vadd.f32 %v689, %v1202
  %1204 = vmatprep.mubr.bf16.mxu0 %v599
  %1205 = vmatmul.mubr.bf16.gmra.mxu0 %v598
  %v1206 = vpop.f32.mrf.mxu0
  %v1207 = vadd.f32 %v685, %v1206
  %v1208 = vpop.f32.mrf.mxu0
  %v1209 = vadd.f32 %v689, %v1208
  %v1210 = vpop.f32.mrf.mxu0
  %v1211 = vadd.f32 %v685, %v1210
  %v1212 = vpop.f32.mrf.mxu0
  %v1213 = vadd.f32 %v689, %v1212
  %1214 = vmatprep.mubr.bf16.mxu0 %v601
  %1215 = vmatmul.mubr.bf16.gmra.mxu0 %v600
  %v1216 = vpop.f32.mrf.mxu0
  %v1217 = vadd.f32 %v685, %v1216
  %v1218 = vpop.f32.mrf.mxu0
  %v1219 = vadd.f32 %v689, %v1218
  %v1220 = vpop.f32.mrf.mxu0
  %v1221 = vadd.f32 %v685, %v1220
  %v1222 = vpop.f32.mrf.mxu0
  %v1223 = vadd.f32 %v689, %v1222
  %1224 = vmatprep.mubr.bf16.mxu0 %v603
  %1225 = vmatmul.mubr.bf16.gmra.mxu0 %v602
  %v1226 = vpop.f32.mrf.mxu0
  %v1227 = vadd.f32 %v685, %v1226
  %v1228 = vpop.f32.mrf.mxu0
  %v1229 = vadd.f32 %v689, %v1228
  %v1230 = vpop.f32.mrf.mxu0
  %v1231 = vadd.f32 %v685, %v1230
  %v1232 = vpop.f32.mrf.mxu0
  %v1233 = vadd.f32 %v689, %v1232
  %1234 = vmatprep.mubr.bf16.mxu0 %v605
  %1235 = vmatmul.mubr.bf16.gmra.mxu0 %v604
  %v1236 = vpop.f32.mrf.mxu0
  %v1237 = vadd.f32 %v685, %v1236
  %v1238 = vpop.f32.mrf.mxu0
  %v1239 = vadd.f32 %v689, %v1238
  %v1240 = vpop.f32.mrf.mxu0
  %v1241 = vadd.f32 %v685, %v1240
  %v1242 = vpop.f32.mrf.mxu0
  %v1243 = vadd.f32 %v689, %v1242
  %1244 = vmatprep.mubr.bf16.mxu0 %v607
  %1245 = vmatmul.mubr.bf16.gmra.mxu0 %v606
  %v1246 = vpop.f32.mrf.mxu0
  %v1247 = vadd.f32 %v685, %v1246
  %v1248 = vpop.f32.mrf.mxu0
  %v1249 = vadd.f32 %v689, %v1248
  %v1250 = vpop.f32.mrf.mxu0
  %v1251 = vadd.f32 %v685, %v1250
  %v1252 = vpop.f32.mrf.mxu0
  %v1253 = vadd.f32 %v689, %v1252
  %1254 = vmatprep.mubr.bf16.mxu0 %v609
  %1255 = vmatmul.mubr.bf16.gmra.mxu0 %v608
  %v1256 = vpop.f32.mrf.mxu0
  %v1257 = vadd.f32 %v685, %v1256
  %v1258 = vpop.f32.mrf.mxu0
  %v1259 = vadd.f32 %v689, %v1258
  %v1260 = vpop.f32.mrf.mxu0
  %v1261 = vadd.f32 %v685, %v1260
  %v1262 = vpop.f32.mrf.mxu0
  %v1263 = vadd.f32 %v689, %v1262
  %1264 = vmatprep.mubr.bf16.mxu0 %v611
  %1265 = vmatmul.mubr.bf16.gmra.mxu0 %v610
  %v1266 = vpop.f32.mrf.mxu0
  %v1267 = vadd.f32 %v685, %v1266
  %v1268 = vpop.f32.mrf.mxu0
  %v1269 = vadd.f32 %v689, %v1268
  %v1270 = vpop.f32.mrf.mxu0
  %v1271 = vadd.f32 %v685, %v1270
  %v1272 = vpop.f32.mrf.mxu0
  %v1273 = vadd.f32 %v689, %v1272
  %1274 = vmatprep.mubr.bf16.mxu0 %v613
  %1275 = vmatmul.mubr.bf16.gmra.mxu0 %v612
  %v1276 = vpop.f32.mrf.mxu0
  %v1277 = vadd.f32 %v685, %v1276
  %v1278 = vpop.f32.mrf.mxu0
  %v1279 = vadd.f32 %v689, %v1278
  %v1280 = vpop.f32.mrf.mxu0
  %v1281 = vadd.f32 %v685, %v1280
  %v1282 = vpop.f32.mrf.mxu0
  %v1283 = vadd.f32 %v689, %v1282
  %1284 = vmatprep.mubr.bf16.mxu0 %v615
  %1285 = vmatmul.mubr.bf16.gmra.mxu0 %v614
  %v1286 = vpop.f32.mrf.mxu0
  %v1287 = vadd.f32 %v685, %v1286
  %v1288 = vpop.f32.mrf.mxu0
  %v1289 = vadd.f32 %v689, %v1288
  %v1290 = vpop.f32.mrf.mxu0
  %v1291 = vadd.f32 %v685, %v1290
  %v1292 = vpop.f32.mrf.mxu0
  %v1293 = vadd.f32 %v689, %v1292
  %1294 = vdwg.mxu0
  %1295 = vmatprep.subr.bf16.mxu0 %v925
  %1296 = vmatpush1.bf16.msra.mxu0 %v924
  %1297 = vmatprep.subr.bf16.mxu0 %v921
  %1298 = vmatpush1.bf16.msra.mxu0 %v920
  %1299 = vmatprep.subr.bf16.mxu0 %v917
  %1300 = vmatpush1.bf16.msra.mxu0 %v916
  %1301 = vmatprep.subr.bf16.mxu0 %v913
  %1302 = vmatpush1.bf16.msra.mxu0 %v912
  %1303 = vmatprep.subr.bf16.mxu0 %v909
  %1304 = vmatpush1.bf16.msra.mxu0 %v908
  %1305 = vmatprep.subr.bf16.mxu0 %v905
  %1306 = vmatpush1.bf16.msra.mxu0 %v904
  %1307 = vmatprep.subr.bf16.mxu0 %v901
  %1308 = vmatpush1.bf16.msra.mxu0 %v900
  %1309 = vmatprep.subr.bf16.mxu0 %v897
  %1310 = vmatpush1.bf16.msra.mxu0 %v896
  %1311 = vmatprep.subr.bf16.mxu0 %v957
  %1312 = vmatpush2.bf16.msra.mxu0 %v956
  %1313 = vmatprep.subr.bf16.mxu0 %v953
  %1314 = vmatpush2.bf16.msra.mxu0 %v952
  %1315 = vmatprep.subr.bf16.mxu0 %v949
  %1316 = vmatpush2.bf16.msra.mxu0 %v948
  %1317 = vmatprep.subr.bf16.mxu0 %v945
  %1318 = vmatpush2.bf16.msra.mxu0 %v944
  %1319 = vmatprep.subr.bf16.mxu0 %v941
  %1320 = vmatpush2.bf16.msra.mxu0 %v940
  %1321 = vmatprep.subr.bf16.mxu0 %v937
  %1322 = vmatpush2.bf16.msra.mxu0 %v936
  %1323 = vmatprep.subr.bf16.mxu0 %v933
  %1324 = vmatpush2.bf16.msra.mxu0 %v932
  %1325 = vmatprep.subr.bf16.mxu0 %v929
  %1326 = vmatpush2.bf16.msra.mxu0 %v928
  %1327 = vmatprep.mubr.bf16.mxu0 %v569
  %1328 = vmatmul.mubr.bf16.gmra.mxu0 %v568
  %v1329 = vpop.f32.mrf.mxu0
  %v1330 = vadd.f32 %v693, %v1329
  %v1331 = vpop.f32.mrf.mxu0
  %v1332 = vadd.f32 %v697, %v1331
  %v1333 = vpop.f32.mrf.mxu0
  %v1334 = vadd.f32 %v693, %v1333
  %v1335 = vpop.f32.mrf.mxu0
  %v1336 = vadd.f32 %v697, %v1335
  %1337 = vmatprep.mubr.bf16.mxu0 %v571
  %1338 = vmatmul.mubr.bf16.gmra.mxu0 %v570
  %v1339 = vpop.f32.mrf.mxu0
  %v1340 = vadd.f32 %v693, %v1339
  %v1341 = vpop.f32.mrf.mxu0
  %v1342 = vadd.f32 %v697, %v1341
  %v1343 = vpop.f32.mrf.mxu0
  %v1344 = vadd.f32 %v693, %v1343
  %v1345 = vpop.f32.mrf.mxu0
  %v1346 = vadd.f32 %v697, %v1345
  %1347 = vmatprep.mubr.bf16.mxu0 %v573
  %1348 = vmatmul.mubr.bf16.gmra.mxu0 %v572
  %v1349 = vpop.f32.mrf.mxu0
  %v1350 = vadd.f32 %v693, %v1349
  %v1351 = vpop.f32.mrf.mxu0
  %v1352 = vadd.f32 %v697, %v1351
  %v1353 = vpop.f32.mrf.mxu0
  %v1354 = vadd.f32 %v693, %v1353
  %v1355 = vpop.f32.mrf.mxu0
  %v1356 = vadd.f32 %v697, %v1355
  %1357 = vmatprep.mubr.bf16.mxu0 %v575
  %1358 = vmatmul.mubr.bf16.gmra.mxu0 %v574
  %v1359 = vpop.f32.mrf.mxu0
  %v1360 = vadd.f32 %v693, %v1359
  %v1361 = vpop.f32.mrf.mxu0
  %v1362 = vadd.f32 %v697, %v1361
  %v1363 = vpop.f32.mrf.mxu0
  %v1364 = vadd.f32 %v693, %v1363
  %v1365 = vpop.f32.mrf.mxu0
  %v1366 = vadd.f32 %v697, %v1365
  %1367 = vmatprep.mubr.bf16.mxu0 %v577
  %1368 = vmatmul.mubr.bf16.gmra.mxu0 %v576
  %v1369 = vpop.f32.mrf.mxu0
  %v1370 = vadd.f32 %v693, %v1369
  %v1371 = vpop.f32.mrf.mxu0
  %v1372 = vadd.f32 %v697, %v1371
  %v1373 = vpop.f32.mrf.mxu0
  %v1374 = vadd.f32 %v693, %v1373
  %v1375 = vpop.f32.mrf.mxu0
  %v1376 = vadd.f32 %v697, %v1375
  %1377 = vmatprep.mubr.bf16.mxu0 %v579
  %1378 = vmatmul.mubr.bf16.gmra.mxu0 %v578
  %v1379 = vpop.f32.mrf.mxu0
  %v1380 = vadd.f32 %v693, %v1379
  %v1381 = vpop.f32.mrf.mxu0
  %v1382 = vadd.f32 %v697, %v1381
  %v1383 = vpop.f32.mrf.mxu0
  %v1384 = vadd.f32 %v693, %v1383
  %v1385 = vpop.f32.mrf.mxu0
  %v1386 = vadd.f32 %v697, %v1385
  %1387 = vmatprep.mubr.bf16.mxu0 %v581
  %1388 = vmatmul.mubr.bf16.gmra.mxu0 %v580
  %v1389 = vpop.f32.mrf.mxu0
  %v1390 = vadd.f32 %v693, %v1389
  %v1391 = vpop.f32.mrf.mxu0
  %v1392 = vadd.f32 %v697, %v1391
  %v1393 = vpop.f32.mrf.mxu0
  %v1394 = vadd.f32 %v693, %v1393
  %v1395 = vpop.f32.mrf.mxu0
  %v1396 = vadd.f32 %v697, %v1395
  %1397 = vmatprep.mubr.bf16.mxu0 %v583
  %1398 = vmatmul.mubr.bf16.gmra.mxu0 %v582
  %v1399 = vpop.f32.mrf.mxu0
  %v1400 = vadd.f32 %v693, %v1399
  %v1401 = vpop.f32.mrf.mxu0
  %v1402 = vadd.f32 %v697, %v1401
  %v1403 = vpop.f32.mrf.mxu0
  %v1404 = vadd.f32 %v693, %v1403
  %v1405 = vpop.f32.mrf.mxu0
  %v1406 = vadd.f32 %v697, %v1405
  %1407 = vmatprep.mubr.bf16.mxu0 %v585
  %1408 = vmatmul.mubr.bf16.gmra.mxu0 %v584
  %v1409 = vpop.f32.mrf.mxu0
  %v1410 = vadd.f32 %v693, %v1409
  %v1411 = vpop.f32.mrf.mxu0
  %v1412 = vadd.f32 %v697, %v1411
  %v1413 = vpop.f32.mrf.mxu0
  %v1414 = vadd.f32 %v693, %v1413
  %v1415 = vpop.f32.mrf.mxu0
  %v1416 = vadd.f32 %v697, %v1415
  %1417 = vmatprep.mubr.bf16.mxu0 %v587
  %1418 = vmatmul.mubr.bf16.gmra.mxu0 %v586
  %v1419 = vpop.f32.mrf.mxu0
  %v1420 = vadd.f32 %v693, %v1419
  %v1421 = vpop.f32.mrf.mxu0
  %v1422 = vadd.f32 %v697, %v1421
  %v1423 = vpop.f32.mrf.mxu0
  %v1424 = vadd.f32 %v693, %v1423
  %v1425 = vpop.f32.mrf.mxu0
  %v1426 = vadd.f32 %v697, %v1425
  %1427 = vmatprep.mubr.bf16.mxu0 %v589
  %1428 = vmatmul.mubr.bf16.gmra.mxu0 %v588
  %v1429 = vpop.f32.mrf.mxu0
  %v1430 = vadd.f32 %v693, %v1429
  %v1431 = vpop.f32.mrf.mxu0
  %v1432 = vadd.f32 %v697, %v1431
  %v1433 = vpop.f32.mrf.mxu0
  %v1434 = vadd.f32 %v693, %v1433
  %v1435 = vpop.f32.mrf.mxu0
  %v1436 = vadd.f32 %v697, %v1435
  %1437 = vmatprep.mubr.bf16.mxu0 %v591
  %1438 = vmatmul.mubr.bf16.gmra.mxu0 %v590
  %v1439 = vpop.f32.mrf.mxu0
  %v1440 = vadd.f32 %v693, %v1439
  %v1441 = vpop.f32.mrf.mxu0
  %v1442 = vadd.f32 %v697, %v1441
  %v1443 = vpop.f32.mrf.mxu0
  %v1444 = vadd.f32 %v693, %v1443
  %v1445 = vpop.f32.mrf.mxu0
  %v1446 = vadd.f32 %v697, %v1445
  %1447 = vmatprep.mubr.bf16.mxu0 %v593
  %1448 = vmatmul.mubr.bf16.gmra.mxu0 %v592
  %v1449 = vpop.f32.mrf.mxu0
  %v1450 = vadd.f32 %v693, %v1449
  %v1451 = vpop.f32.mrf.mxu0
  %v1452 = vadd.f32 %v697, %v1451
  %v1453 = vpop.f32.mrf.mxu0
  %v1454 = vadd.f32 %v693, %v1453
  %v1455 = vpop.f32.mrf.mxu0
  %v1456 = vadd.f32 %v697, %v1455
  %1457 = vmatprep.mubr.bf16.mxu0 %v595
  %1458 = vmatmul.mubr.bf16.gmra.mxu0 %v594
  %v1459 = vpop.f32.mrf.mxu0
  %v1460 = vadd.f32 %v693, %v1459
  %v1461 = vpop.f32.mrf.mxu0
  %v1462 = vadd.f32 %v697, %v1461
  %v1463 = vpop.f32.mrf.mxu0
  %v1464 = vadd.f32 %v693, %v1463
  %v1465 = vpop.f32.mrf.mxu0
  %v1466 = vadd.f32 %v697, %v1465
  %1467 = vmatprep.mubr.bf16.mxu0 %v597
  %1468 = vmatmul.mubr.bf16.gmra.mxu0 %v596
  %v1469 = vpop.f32.mrf.mxu0
  %v1470 = vadd.f32 %v693, %v1469
  %v1471 = vpop.f32.mrf.mxu0
  %v1472 = vadd.f32 %v697, %v1471
  %v1473 = vpop.f32.mrf.mxu0
  %v1474 = vadd.f32 %v693, %v1473
  %v1475 = vpop.f32.mrf.mxu0
  %v1476 = vadd.f32 %v697, %v1475
  %1477 = vmatprep.mubr.bf16.mxu0 %v599
  %1478 = vmatmul.mubr.bf16.gmra.mxu0 %v598
  %v1479 = vpop.f32.mrf.mxu0
  %v1480 = vadd.f32 %v693, %v1479
  %v1481 = vpop.f32.mrf.mxu0
  %v1482 = vadd.f32 %v697, %v1481
  %v1483 = vpop.f32.mrf.mxu0
  %v1484 = vadd.f32 %v693, %v1483
  %v1485 = vpop.f32.mrf.mxu0
  %v1486 = vadd.f32 %v697, %v1485
  %1487 = vmatprep.mubr.bf16.mxu0 %v601
  %1488 = vmatmul.mubr.bf16.gmra.mxu0 %v600
  %v1489 = vpop.f32.mrf.mxu0
  %v1490 = vadd.f32 %v693, %v1489
  %v1491 = vpop.f32.mrf.mxu0
  %v1492 = vadd.f32 %v697, %v1491
  %v1493 = vpop.f32.mrf.mxu0
  %v1494 = vadd.f32 %v693, %v1493
  %v1495 = vpop.f32.mrf.mxu0
  %v1496 = vadd.f32 %v697, %v1495
  %1497 = vmatprep.mubr.bf16.mxu0 %v603
  %1498 = vmatmul.mubr.bf16.gmra.mxu0 %v602
  %v1499 = vpop.f32.mrf.mxu0
  %v1500 = vadd.f32 %v693, %v1499
  %v1501 = vpop.f32.mrf.mxu0
  %v1502 = vadd.f32 %v697, %v1501
  %v1503 = vpop.f32.mrf.mxu0
  %v1504 = vadd.f32 %v693, %v1503
  %v1505 = vpop.f32.mrf.mxu0
  %v1506 = vadd.f32 %v697, %v1505
  %1507 = vmatprep.mubr.bf16.mxu0 %v605
  %1508 = vmatmul.mubr.bf16.gmra.mxu0 %v604
  %v1509 = vpop.f32.mrf.mxu0
  %v1510 = vadd.f32 %v693, %v1509
  %v1511 = vpop.f32.mrf.mxu0
  %v1512 = vadd.f32 %v697, %v1511
  %v1513 = vpop.f32.mrf.mxu0
  %v1514 = vadd.f32 %v693, %v1513
  %v1515 = vpop.f32.mrf.mxu0
  %v1516 = vadd.f32 %v697, %v1515
  %1517 = vmatprep.mubr.bf16.mxu0 %v607
  %1518 = vmatmul.mubr.bf16.gmra.mxu0 %v606
  %v1519 = vpop.f32.mrf.mxu0
  %v1520 = vadd.f32 %v693, %v1519
  %v1521 = vpop.f32.mrf.mxu0
  %v1522 = vadd.f32 %v697, %v1521
  %v1523 = vpop.f32.mrf.mxu0
  %v1524 = vadd.f32 %v693, %v1523
  %v1525 = vpop.f32.mrf.mxu0
  %v1526 = vadd.f32 %v697, %v1525
  %1527 = vmatprep.mubr.bf16.mxu0 %v609
  %1528 = vmatmul.mubr.bf16.gmra.mxu0 %v608
  %v1529 = vpop.f32.mrf.mxu0
  %v1530 = vadd.f32 %v693, %v1529
  %v1531 = vpop.f32.mrf.mxu0
  %v1532 = vadd.f32 %v697, %v1531
  %v1533 = vpop.f32.mrf.mxu0
  %v1534 = vadd.f32 %v693, %v1533
  %v1535 = vpop.f32.mrf.mxu0
  %v1536 = vadd.f32 %v697, %v1535
  %1537 = vmatprep.mubr.bf16.mxu0 %v611
  %1538 = vmatmul.mubr.bf16.gmra.mxu0 %v610
  %v1539 = vpop.f32.mrf.mxu0
  %v1540 = vadd.f32 %v693, %v1539
  %v1541 = vpop.f32.mrf.mxu0
  %v1542 = vadd.f32 %v697, %v1541
  %v1543 = vpop.f32.mrf.mxu0
  %v1544 = vadd.f32 %v693, %v1543
  %v1545 = vpop.f32.mrf.mxu0
  %v1546 = vadd.f32 %v697, %v1545
  %1547 = vmatprep.mubr.bf16.mxu0 %v613
  %1548 = vmatmul.mubr.bf16.gmra.mxu0 %v612
  %v1549 = vpop.f32.mrf.mxu0
  %v1550 = vadd.f32 %v693, %v1549
  %v1551 = vpop.f32.mrf.mxu0
  %v1552 = vadd.f32 %v697, %v1551
  %v1553 = vpop.f32.mrf.mxu0
  %v1554 = vadd.f32 %v693, %v1553
  %v1555 = vpop.f32.mrf.mxu0
  %v1556 = vadd.f32 %v697, %v1555
  %1557 = vmatprep.mubr.bf16.mxu0 %v615
  %1558 = vmatmul.mubr.bf16.gmra.mxu0 %v614
  %v1559 = vpop.f32.mrf.mxu0
  %v1560 = vadd.f32 %v693, %v1559
  %v1561 = vpop.f32.mrf.mxu0
  %v1562 = vadd.f32 %v697, %v1561
  %v1563 = vpop.f32.mrf.mxu0
  %v1564 = vadd.f32 %v693, %v1563
  %v1565 = vpop.f32.mrf.mxu0
  %v1566 = vadd.f32 %v697, %v1565
  %1567 = vdwg.mxu0
  %v1568 = vmax.f32 %v1057, 0.0
  %v1569 = vmax.f32 %v1059, 0.0
  %v1570 = vmax.f32 %v1330, 0.0
  %v1571 = vmax.f32 %v1332, 0.0
  %v1572 = vmax.f32 %v1061, 0.0
  %v1573 = vmax.f32 %v1063, 0.0
  %v1574 = vmax.f32 %v1334, 0.0
  %v1575 = vmax.f32 %v1336, 0.0
  %v1576 = vmax.f32 %v1067, 0.0
  %v1577 = vmax.f32 %v1069, 0.0
  %v1578 = vmax.f32 %v1340, 0.0
  %v1579 = vmax.f32 %v1342, 0.0
  %v1580 = vmax.f32 %v1071, 0.0
  %v1581 = vmax.f32 %v1073, 0.0
  %v1582 = vmax.f32 %v1344, 0.0
  %v1583 = vmax.f32 %v1346, 0.0
  %v1584 = vmax.f32 %v1077, 0.0
  %v1585 = vmax.f32 %v1079, 0.0
  %v1586 = vmax.f32 %v1350, 0.0
  %v1587 = vmax.f32 %v1352, 0.0
  %v1588 = vmax.f32 %v1081, 0.0
  %v1589 = vmax.f32 %v1083, 0.0
  %v1590 = vmax.f32 %v1354, 0.0
  %v1591 = vmax.f32 %v1356, 0.0
  %v1592 = vmax.f32 %v1087, 0.0
  %v1593 = vmax.f32 %v1089, 0.0
  %v1594 = vmax.f32 %v1360, 0.0
  %v1595 = vmax.f32 %v1362, 0.0
  %v1596 = vmax.f32 %v1091, 0.0
  %v1597 = vmax.f32 %v1093, 0.0
  %v1598 = vmax.f32 %v1364, 0.0
  %v1599 = vmax.f32 %v1366, 0.0
  %v1600 = vmax.f32 %v1097, 0.0
  %v1601 = vmax.f32 %v1099, 0.0
  %v1602 = vmax.f32 %v1370, 0.0
  %v1603 = vmax.f32 %v1372, 0.0
  %v1604 = vmax.f32 %v1101, 0.0
  %v1605 = vmax.f32 %v1103, 0.0
  %v1606 = vmax.f32 %v1374, 0.0
  %v1607 = vmax.f32 %v1376, 0.0
  %v1608 = vmax.f32 %v1107, 0.0
  %v1609 = vmax.f32 %v1109, 0.0
  %v1610 = vmax.f32 %v1380, 0.0
  %v1611 = vmax.f32 %v1382, 0.0
  %v1612 = vmax.f32 %v1111, 0.0
  %v1613 = vmax.f32 %v1113, 0.0
  %v1614 = vmax.f32 %v1384, 0.0
  %v1615 = vmax.f32 %v1386, 0.0
  %v1616 = vmax.f32 %v1117, 0.0
  %v1617 = vmax.f32 %v1119, 0.0
  %v1618 = vmax.f32 %v1390, 0.0
  %v1619 = vmax.f32 %v1392, 0.0
  %v1620 = vmax.f32 %v1121, 0.0
  %v1621 = vmax.f32 %v1123, 0.0
  %v1622 = vmax.f32 %v1394, 0.0
  %v1623 = vmax.f32 %v1396, 0.0
  %v1624 = vmax.f32 %v1127, 0.0
  %v1625 = vmax.f32 %v1129, 0.0
  %v1626 = vmax.f32 %v1400, 0.0
  %v1627 = vmax.f32 %v1402, 0.0
  %v1628 = vmax.f32 %v1131, 0.0
  %v1629 = vmax.f32 %v1133, 0.0
  %v1630 = vmax.f32 %v1404, 0.0
  %v1631 = vmax.f32 %v1406, 0.0
  %v1632 = vmax.f32 %v1137, 0.0
  %v1633 = vmax.f32 %v1139, 0.0
  %v1634 = vmax.f32 %v1410, 0.0
  %v1635 = vmax.f32 %v1412, 0.0
  %v1636 = vmax.f32 %v1141, 0.0
  %v1637 = vmax.f32 %v1143, 0.0
  %v1638 = vmax.f32 %v1414, 0.0
  %v1639 = vmax.f32 %v1416, 0.0
  %v1640 = vmax.f32 %v1147, 0.0
  %v1641 = vmax.f32 %v1149, 0.0
  %v1642 = vmax.f32 %v1420, 0.0
  %v1643 = vmax.f32 %v1422, 0.0
  %v1644 = vmax.f32 %v1151, 0.0
  %v1645 = vmax.f32 %v1153, 0.0
  %v1646 = vmax.f32 %v1424, 0.0
  %v1647 = vmax.f32 %v1426, 0.0
  %v1648 = vmax.f32 %v1157, 0.0
  %v1649 = vmax.f32 %v1159, 0.0
  %v1650 = vmax.f32 %v1430, 0.0
  %v1651 = vmax.f32 %v1432, 0.0
  %v1652 = vmax.f32 %v1161, 0.0
  %v1653 = vmax.f32 %v1163, 0.0
  %v1654 = vmax.f32 %v1434, 0.0
  %v1655 = vmax.f32 %v1436, 0.0
  %v1656 = vmax.f32 %v1167, 0.0
  %v1657 = vmax.f32 %v1169, 0.0
  %v1658 = vmax.f32 %v1440, 0.0
  %v1659 = vmax.f32 %v1442, 0.0
  %v1660 = vmax.f32 %v1171, 0.0
  %v1661 = vmax.f32 %v1173, 0.0
  %v1662 = vmax.f32 %v1444, 0.0
  %v1663 = vmax.f32 %v1446, 0.0
  %v1664 = vmax.f32 %v1177, 0.0
  %v1665 = vmax.f32 %v1179, 0.0
  %v1666 = vmax.f32 %v1450, 0.0
  %v1667 = vmax.f32 %v1452, 0.0
  %v1668 = vmax.f32 %v1181, 0.0
  %v1669 = vmax.f32 %v1183, 0.0
  %v1670 = vmax.f32 %v1454, 0.0
  %v1671 = vmax.f32 %v1456, 0.0
  %v1672 = vmax.f32 %v1187, 0.0
  %v1673 = vmax.f32 %v1189, 0.0
  %v1674 = vmax.f32 %v1460, 0.0
  %v1675 = vmax.f32 %v1462, 0.0
  %v1676 = vmax.f32 %v1191, 0.0
  %v1677 = vmax.f32 %v1193, 0.0
  %v1678 = vmax.f32 %v1464, 0.0
  %v1679 = vmax.f32 %v1466, 0.0
  %v1680 = vmax.f32 %v1197, 0.0
  %v1681 = vmax.f32 %v1199, 0.0
  %v1682 = vmax.f32 %v1470, 0.0
  %v1683 = vmax.f32 %v1472, 0.0
  %v1684 = vmax.f32 %v1201, 0.0
  %v1685 = vmax.f32 %v1203, 0.0
  %v1686 = vmax.f32 %v1474, 0.0
  %v1687 = vmax.f32 %v1476, 0.0
  %v1688 = vmax.f32 %v1207, 0.0
  %v1689 = vmax.f32 %v1209, 0.0
  %v1690 = vmax.f32 %v1480, 0.0
  %v1691 = vmax.f32 %v1482, 0.0
  %v1692 = vmax.f32 %v1211, 0.0
  %v1693 = vmax.f32 %v1213, 0.0
  %v1694 = vmax.f32 %v1484, 0.0
  %v1695 = vmax.f32 %v1486, 0.0
  %v1696 = vmax.f32 %v1217, 0.0
  %v1697 = vmax.f32 %v1219, 0.0
  %v1698 = vmax.f32 %v1490, 0.0
  %v1699 = vmax.f32 %v1492, 0.0
  %v1700 = vmax.f32 %v1221, 0.0
  %v1701 = vmax.f32 %v1223, 0.0
  %v1702 = vmax.f32 %v1494, 0.0
  %v1703 = vmax.f32 %v1496, 0.0
  %v1704 = vmax.f32 %v1227, 0.0
  %v1705 = vmax.f32 %v1229, 0.0
  %v1706 = vmax.f32 %v1500, 0.0
  %v1707 = vmax.f32 %v1502, 0.0
  %v1708 = vmax.f32 %v1231, 0.0
  %v1709 = vmax.f32 %v1233, 0.0
  %v1710 = vmax.f32 %v1504, 0.0
  %v1711 = vmax.f32 %v1506, 0.0
  %v1712 = vmax.f32 %v1237, 0.0
  %v1713 = vmax.f32 %v1239, 0.0
  %v1714 = vmax.f32 %v1510, 0.0
  %v1715 = vmax.f32 %v1512, 0.0
  %v1716 = vmax.f32 %v1241, 0.0
  %v1717 = vmax.f32 %v1243, 0.0
  %v1718 = vmax.f32 %v1514, 0.0
  %v1719 = vmax.f32 %v1516, 0.0
  %v1720 = vmax.f32 %v1247, 0.0
  %v1721 = vmax.f32 %v1249, 0.0
  %v1722 = vmax.f32 %v1520, 0.0
  %v1723 = vmax.f32 %v1522, 0.0
  %v1724 = vmax.f32 %v1251, 0.0
  %v1725 = vmax.f32 %v1253, 0.0
  %v1726 = vmax.f32 %v1524, 0.0
  %v1727 = vmax.f32 %v1526, 0.0
  %v1728 = vmax.f32 %v1257, 0.0
  %v1729 = vmax.f32 %v1259, 0.0
  %v1730 = vmax.f32 %v1530, 0.0
  %v1731 = vmax.f32 %v1532, 0.0
  %v1732 = vmax.f32 %v1261, 0.0
  %v1733 = vmax.f32 %v1263, 0.0
  %v1734 = vmax.f32 %v1534, 0.0
  %v1735 = vmax.f32 %v1536, 0.0
  %v1736 = vmax.f32 %v1267, 0.0
  %v1737 = vmax.f32 %v1269, 0.0
  %v1738 = vmax.f32 %v1540, 0.0
  %v1739 = vmax.f32 %v1542, 0.0
  %v1740 = vmax.f32 %v1271, 0.0
  %v1741 = vmax.f32 %v1273, 0.0
  %v1742 = vmax.f32 %v1544, 0.0
  %v1743 = vmax.f32 %v1546, 0.0
  %v1744 = vmax.f32 %v1277, 0.0
  %v1745 = vmax.f32 %v1279, 0.0
  %v1746 = vmax.f32 %v1550, 0.0
  %v1747 = vmax.f32 %v1552, 0.0
  %v1748 = vmax.f32 %v1281, 0.0
  %v1749 = vmax.f32 %v1283, 0.0
  %v1750 = vmax.f32 %v1554, 0.0
  %v1751 = vmax.f32 %v1556, 0.0
  %v1752 = vmax.f32 %v1287, 0.0
  %v1753 = vmax.f32 %v1289, 0.0
  %v1754 = vmax.f32 %v1560, 0.0
  %v1755 = vmax.f32 %v1562, 0.0
  %v1756 = vmax.f32 %v1291, 0.0
  %v1757 = vmax.f32 %v1293, 0.0
  %v1758 = vmax.f32 %v1564, 0.0
  %v1759 = vmax.f32 %v1566, 0.0
  %v1760 = vld [vmem:[%s5] sm:$0xf]
  %v1762 = vlaneseq
  %v1763 = vshrl.u32 %v1762, 7
  %v1764 = vsub.s32 0, %v1763
  %v1765 = vrot.slane %v1760, %v1764
  %v1766 = vlaneseq
  %v1767 = vshrl.u32 %v1766, 7
  %v1768 = vsub.s32 1, %v1767
  %v1769 = vrot.slane %v1760, %v1768
  %v1770 = vlaneseq
  %v1771 = vshrl.u32 %v1770, 7
  %v1772 = vsub.s32 2, %v1771
  %v1773 = vrot.slane %v1760, %v1772
  %v1774 = vlaneseq
  %v1775 = vshrl.u32 %v1774, 7
  %v1776 = vsub.s32 3, %v1775
  %v1777 = vrot.slane %v1760, %v1776
  %v1782 = vmul.f32 %v1568, %v1765
  %v1783 = vmul.f32 %v1569, %v1769
  %v1784 = vmul.f32 %v1570, %v1773
  %v1785 = vmul.f32 %v1571, %v1777
  %v1786 = vmul.f32 %v1572, %v1765
  %v1787 = vmul.f32 %v1573, %v1769
  %v1788 = vmul.f32 %v1574, %v1773
  %v1789 = vmul.f32 %v1575, %v1777
  %v1790 = vmul.f32 %v1576, %v1765
  %v1791 = vmul.f32 %v1577, %v1769
  %v1792 = vmul.f32 %v1578, %v1773
  %v1793 = vmul.f32 %v1579, %v1777
  %v1794 = vmul.f32 %v1580, %v1765
  %v1795 = vmul.f32 %v1581, %v1769
  %v1796 = vmul.f32 %v1582, %v1773
  %v1797 = vmul.f32 %v1583, %v1777
  %v1798 = vmul.f32 %v1584, %v1765
  %v1799 = vmul.f32 %v1585, %v1769
  %v1800 = vmul.f32 %v1586, %v1773
  %v1801 = vmul.f32 %v1587, %v1777
  %v1802 = vmul.f32 %v1588, %v1765
  %v1803 = vmul.f32 %v1589, %v1769
  %v1804 = vmul.f32 %v1590, %v1773
  %v1805 = vmul.f32 %v1591, %v1777
  %v1806 = vmul.f32 %v1592, %v1765
  %v1807 = vmul.f32 %v1593, %v1769
  %v1808 = vmul.f32 %v1594, %v1773
  %v1809 = vmul.f32 %v1595, %v1777
  %v1810 = vmul.f32 %v1596, %v1765
  %v1811 = vmul.f32 %v1597, %v1769
  %v1812 = vmul.f32 %v1598, %v1773
  %v1813 = vmul.f32 %v1599, %v1777
  %v1814 = vmul.f32 %v1600, %v1765
  %v1815 = vmul.f32 %v1601, %v1769
  %v1816 = vmul.f32 %v1602, %v1773
  %v1817 = vmul.f32 %v1603, %v1777
  %v1818 = vmul.f32 %v1604, %v1765
  %v1819 = vmul.f32 %v1605, %v1769
  %v1820 = vmul.f32 %v1606, %v1773
  %v1821 = vmul.f32 %v1607, %v1777
  %v1822 = vmul.f32 %v1608, %v1765
  %v1823 = vmul.f32 %v1609, %v1769
  %v1824 = vmul.f32 %v1610, %v1773
  %v1825 = vmul.f32 %v1611, %v1777
  %v1826 = vmul.f32 %v1612, %v1765
  %v1827 = vmul.f32 %v1613, %v1769
  %v1828 = vmul.f32 %v1614, %v1773
  %v1829 = vmul.f32 %v1615, %v1777
  %v1830 = vmul.f32 %v1616, %v1765
  %v1831 = vmul.f32 %v1617, %v1769
  %v1832 = vmul.f32 %v1618, %v1773
  %v1833 = vmul.f32 %v1619, %v1777
  %v1834 = vmul.f32 %v1620, %v1765
  %v1835 = vmul.f32 %v1621, %v1769
  %v1836 = vmul.f32 %v1622, %v1773
  %v1837 = vmul.f32 %v1623, %v1777
  %v1838 = vmul.f32 %v1624, %v1765
  %v1839 = vmul.f32 %v1625, %v1769
  %v1840 = vmul.f32 %v1626, %v1773
  %v1841 = vmul.f32 %v1627, %v1777
  %v1842 = vmul.f32 %v1628, %v1765
  %v1843 = vmul.f32 %v1629, %v1769
  %v1844 = vmul.f32 %v1630, %v1773
  %v1845 = vmul.f32 %v1631, %v1777
  %v1846 = vmul.f32 %v1632, %v1765
  %v1847 = vmul.f32 %v1633, %v1769
  %v1848 = vmul.f32 %v1634, %v1773
  %v1849 = vmul.f32 %v1635, %v1777
  %v1850 = vmul.f32 %v1636, %v1765
  %v1851 = vmul.f32 %v1637, %v1769
  %v1852 = vmul.f32 %v1638, %v1773
  %v1853 = vmul.f32 %v1639, %v1777
  %v1854 = vmul.f32 %v1640, %v1765
  %v1855 = vmul.f32 %v1641, %v1769
  %v1856 = vmul.f32 %v1642, %v1773
  %v1857 = vmul.f32 %v1643, %v1777
  %v1858 = vmul.f32 %v1644, %v1765
  %v1859 = vmul.f32 %v1645, %v1769
  %v1860 = vmul.f32 %v1646, %v1773
  %v1861 = vmul.f32 %v1647, %v1777
  %v1862 = vmul.f32 %v1648, %v1765
  %v1863 = vmul.f32 %v1649, %v1769
  %v1864 = vmul.f32 %v1650, %v1773
  %v1865 = vmul.f32 %v1651, %v1777
  %v1866 = vmul.f32 %v1652, %v1765
  %v1867 = vmul.f32 %v1653, %v1769
  %v1868 = vmul.f32 %v1654, %v1773
  %v1869 = vmul.f32 %v1655, %v1777
  %v1870 = vmul.f32 %v1656, %v1765
  %v1871 = vmul.f32 %v1657, %v1769
  %v1872 = vmul.f32 %v1658, %v1773
  %v1873 = vmul.f32 %v1659, %v1777
  %v1874 = vmul.f32 %v1660, %v1765
  %v1875 = vmul.f32 %v1661, %v1769
  %v1876 = vmul.f32 %v1662, %v1773
  %v1877 = vmul.f32 %v1663, %v1777
  %v1878 = vmul.f32 %v1664, %v1765
  %v1879 = vmul.f32 %v1665, %v1769
  %v1880 = vmul.f32 %v1666, %v1773
  %v1881 = vmul.f32 %v1667, %v1777
  %v1882 = vmul.f32 %v1668, %v1765
  %v1883 = vmul.f32 %v1669, %v1769
  %v1884 = vmul.f32 %v1670, %v1773
  %v1885 = vmul.f32 %v1671, %v1777
  %v1886 = vmul.f32 %v1672, %v1765
  %v1887 = vmul.f32 %v1673, %v1769
  %v1888 = vmul.f32 %v1674, %v1773
  %v1889 = vmul.f32 %v1675, %v1777
  %v1890 = vmul.f32 %v1676, %v1765
  %v1891 = vmul.f32 %v1677, %v1769
  %v1892 = vmul.f32 %v1678, %v1773
  %v1893 = vmul.f32 %v1679, %v1777
  %v1894 = vmul.f32 %v1680, %v1765
  %v1895 = vmul.f32 %v1681, %v1769
  %v1896 = vmul.f32 %v1682, %v1773
  %v1897 = vmul.f32 %v1683, %v1777
  %v1898 = vmul.f32 %v1684, %v1765
  %v1899 = vmul.f32 %v1685, %v1769
  %v1900 = vmul.f32 %v1686, %v1773
  %v1901 = vmul.f32 %v1687, %v1777
  %v1902 = vmul.f32 %v1688, %v1765
  %v1903 = vmul.f32 %v1689, %v1769
  %v1904 = vmul.f32 %v1690, %v1773
  %v1905 = vmul.f32 %v1691, %v1777
  %v1906 = vmul.f32 %v1692, %v1765
  %v1907 = vmul.f32 %v1693, %v1769
  %v1908 = vmul.f32 %v1694, %v1773
  %v1909 = vmul.f32 %v1695, %v1777
  %v1910 = vmul.f32 %v1696, %v1765
  %v1911 = vmul.f32 %v1697, %v1769
  %v1912 = vmul.f32 %v1698, %v1773
  %v1913 = vmul.f32 %v1699, %v1777
  %v1914 = vmul.f32 %v1700, %v1765
  %v1915 = vmul.f32 %v1701, %v1769
  %v1916 = vmul.f32 %v1702, %v1773
  %v1917 = vmul.f32 %v1703, %v1777
  %v1918 = vmul.f32 %v1704, %v1765
  %v1919 = vmul.f32 %v1705, %v1769
  %v1920 = vmul.f32 %v1706, %v1773
  %v1921 = vmul.f32 %v1707, %v1777
  %v1922 = vmul.f32 %v1708, %v1765
  %v1923 = vmul.f32 %v1709, %v1769
  %v1924 = vmul.f32 %v1710, %v1773
  %v1925 = vmul.f32 %v1711, %v1777
  %v1926 = vmul.f32 %v1712, %v1765
  %v1927 = vmul.f32 %v1713, %v1769
  %v1928 = vmul.f32 %v1714, %v1773
  %v1929 = vmul.f32 %v1715, %v1777
  %v1930 = vmul.f32 %v1716, %v1765
  %v1931 = vmul.f32 %v1717, %v1769
  %v1932 = vmul.f32 %v1718, %v1773
  %v1933 = vmul.f32 %v1719, %v1777
  %v1934 = vmul.f32 %v1720, %v1765
  %v1935 = vmul.f32 %v1721, %v1769
  %v1936 = vmul.f32 %v1722, %v1773
  %v1937 = vmul.f32 %v1723, %v1777
  %v1938 = vmul.f32 %v1724, %v1765
  %v1939 = vmul.f32 %v1725, %v1769
  %v1940 = vmul.f32 %v1726, %v1773
  %v1941 = vmul.f32 %v1727, %v1777
  %v1942 = vmul.f32 %v1728, %v1765
  %v1943 = vmul.f32 %v1729, %v1769
  %v1944 = vmul.f32 %v1730, %v1773
  %v1945 = vmul.f32 %v1731, %v1777
  %v1946 = vmul.f32 %v1732, %v1765
  %v1947 = vmul.f32 %v1733, %v1769
  %v1948 = vmul.f32 %v1734, %v1773
  %v1949 = vmul.f32 %v1735, %v1777
  %v1950 = vmul.f32 %v1736, %v1765
  %v1951 = vmul.f32 %v1737, %v1769
  %v1952 = vmul.f32 %v1738, %v1773
  %v1953 = vmul.f32 %v1739, %v1777
  %v1954 = vmul.f32 %v1740, %v1765
  %v1955 = vmul.f32 %v1741, %v1769
  %v1956 = vmul.f32 %v1742, %v1773
  %v1957 = vmul.f32 %v1743, %v1777
  %v1958 = vmul.f32 %v1744, %v1765
  %v1959 = vmul.f32 %v1745, %v1769
  %v1960 = vmul.f32 %v1746, %v1773
  %v1961 = vmul.f32 %v1747, %v1777
  %v1962 = vmul.f32 %v1748, %v1765
  %v1963 = vmul.f32 %v1749, %v1769
  %v1964 = vmul.f32 %v1750, %v1773
  %v1965 = vmul.f32 %v1751, %v1777
  %v1966 = vmul.f32 %v1752, %v1765
  %v1967 = vmul.f32 %v1753, %v1769
  %v1968 = vmul.f32 %v1754, %v1773
  %v1969 = vmul.f32 %v1755, %v1777
  %v1970 = vmul.f32 %v1756, %v1765
  %v1971 = vmul.f32 %v1757, %v1769
  %v1972 = vmul.f32 %v1758, %v1773
  %v1973 = vmul.f32 %v1759, %v1777
  %v1974 = vadd.f32 %v1782, %v1783
  %v1975 = vadd.f32 %v1974, %v1784
  %v1976 = vadd.f32 %v1975, %v1785
  %1977 = vadd.xlane.f32.xlu0 %v1976
  %v1978 = vpop.xlane.xlu0 %1977
  %v1979 = vadd.f32 %v1786, %v1787
  %v1980 = vadd.f32 %v1979, %v1788
  %v1981 = vadd.f32 %v1980, %v1789
  %1982 = vadd.xlane.f32.xlu0 %v1981
  %v1983 = vpop.xlane.xlu0 %1982
  %v1984 = vadd.f32 %v1790, %v1791
  %v1985 = vadd.f32 %v1984, %v1792
  %v1986 = vadd.f32 %v1985, %v1793
  %1987 = vadd.xlane.f32.xlu0 %v1986
  %v1988 = vpop.xlane.xlu0 %1987
  %v1989 = vadd.f32 %v1794, %v1795
  %v1990 = vadd.f32 %v1989, %v1796
  %v1991 = vadd.f32 %v1990, %v1797
  %1992 = vadd.xlane.f32.xlu0 %v1991
  %v1993 = vpop.xlane.xlu0 %1992
  %v1994 = vadd.f32 %v1798, %v1799
  %v1995 = vadd.f32 %v1994, %v1800
  %v1996 = vadd.f32 %v1995, %v1801
  %1997 = vadd.xlane.f32.xlu0 %v1996
  %v1998 = vpop.xlane.xlu0 %1997
  %v1999 = vadd.f32 %v1802, %v1803
  %v2000 = vadd.f32 %v1999, %v1804
  %v2001 = vadd.f32 %v2000, %v1805
  %2002 = vadd.xlane.f32.xlu0 %v2001
  %v2003 = vpop.xlane.xlu0 %2002
  %v2004 = vadd.f32 %v1806, %v1807
  %v2005 = vadd.f32 %v2004, %v1808
  %v2006 = vadd.f32 %v2005, %v1809
  %2007 = vadd.xlane.f32.xlu0 %v2006
  %v2008 = vpop.xlane.xlu0 %2007
  %v2009 = vadd.f32 %v1810, %v1811
  %v2010 = vadd.f32 %v2009, %v1812
  %v2011 = vadd.f32 %v2010, %v1813
  %2012 = vadd.xlane.f32.xlu0 %v2011
  %v2013 = vpop.xlane.xlu0 %2012
  %v2014 = vadd.f32 %v1814, %v1815
  %v2015 = vadd.f32 %v2014, %v1816
  %v2016 = vadd.f32 %v2015, %v1817
  %2017 = vadd.xlane.f32.xlu0 %v2016
  %v2018 = vpop.xlane.xlu0 %2017
  %v2019 = vadd.f32 %v1818, %v1819
  %v2020 = vadd.f32 %v2019, %v1820
  %v2021 = vadd.f32 %v2020, %v1821
  %2022 = vadd.xlane.f32.xlu0 %v2021
  %v2023 = vpop.xlane.xlu0 %2022
  %v2024 = vadd.f32 %v1822, %v1823
  %v2025 = vadd.f32 %v2024, %v1824
  %v2026 = vadd.f32 %v2025, %v1825
  %2027 = vadd.xlane.f32.xlu0 %v2026
  %v2028 = vpop.xlane.xlu0 %2027
  %v2029 = vadd.f32 %v1826, %v1827
  %v2030 = vadd.f32 %v2029, %v1828
  %v2031 = vadd.f32 %v2030, %v1829
  %2032 = vadd.xlane.f32.xlu0 %v2031
  %v2033 = vpop.xlane.xlu0 %2032
  %v2034 = vadd.f32 %v1830, %v1831
  %v2035 = vadd.f32 %v2034, %v1832
  %v2036 = vadd.f32 %v2035, %v1833
  %2037 = vadd.xlane.f32.xlu0 %v2036
  %v2038 = vpop.xlane.xlu0 %2037
  %v2039 = vadd.f32 %v1834, %v1835
  %v2040 = vadd.f32 %v2039, %v1836
  %v2041 = vadd.f32 %v2040, %v1837
  %2042 = vadd.xlane.f32.xlu0 %v2041
  %v2043 = vpop.xlane.xlu0 %2042
  %v2044 = vadd.f32 %v1838, %v1839
  %v2045 = vadd.f32 %v2044, %v1840
  %v2046 = vadd.f32 %v2045, %v1841
  %2047 = vadd.xlane.f32.xlu0 %v2046
  %v2048 = vpop.xlane.xlu0 %2047
  %v2049 = vadd.f32 %v1842, %v1843
  %v2050 = vadd.f32 %v2049, %v1844
  %v2051 = vadd.f32 %v2050, %v1845
  %2052 = vadd.xlane.f32.xlu0 %v2051
  %v2053 = vpop.xlane.xlu0 %2052
  %v2054 = vadd.f32 %v1846, %v1847
  %v2055 = vadd.f32 %v2054, %v1848
  %v2056 = vadd.f32 %v2055, %v1849
  %2057 = vadd.xlane.f32.xlu0 %v2056
  %v2058 = vpop.xlane.xlu0 %2057
  %v2059 = vadd.f32 %v1850, %v1851
  %v2060 = vadd.f32 %v2059, %v1852
  %v2061 = vadd.f32 %v2060, %v1853
  %2062 = vadd.xlane.f32.xlu0 %v2061
  %v2063 = vpop.xlane.xlu0 %2062
  %v2064 = vadd.f32 %v1854, %v1855
  %v2065 = vadd.f32 %v2064, %v1856
  %v2066 = vadd.f32 %v2065, %v1857
  %2067 = vadd.xlane.f32.xlu0 %v2066
  %v2068 = vpop.xlane.xlu0 %2067
  %v2069 = vadd.f32 %v1858, %v1859
  %v2070 = vadd.f32 %v2069, %v1860
  %v2071 = vadd.f32 %v2070, %v1861
  %2072 = vadd.xlane.f32.xlu0 %v2071
  %v2073 = vpop.xlane.xlu0 %2072
  %v2074 = vadd.f32 %v1862, %v1863
  %v2075 = vadd.f32 %v2074, %v1864
  %v2076 = vadd.f32 %v2075, %v1865
  %2077 = vadd.xlane.f32.xlu0 %v2076
  %v2078 = vpop.xlane.xlu0 %2077
  %v2079 = vadd.f32 %v1866, %v1867
  %v2080 = vadd.f32 %v2079, %v1868
  %v2081 = vadd.f32 %v2080, %v1869
  %2082 = vadd.xlane.f32.xlu0 %v2081
  %v2083 = vpop.xlane.xlu0 %2082
  %v2084 = vadd.f32 %v1870, %v1871
  %v2085 = vadd.f32 %v2084, %v1872
  %v2086 = vadd.f32 %v2085, %v1873
  %2087 = vadd.xlane.f32.xlu0 %v2086
  %v2088 = vpop.xlane.xlu0 %2087
  %v2089 = vadd.f32 %v1874, %v1875
  %v2090 = vadd.f32 %v2089, %v1876
  %v2091 = vadd.f32 %v2090, %v1877
  %2092 = vadd.xlane.f32.xlu0 %v2091
  %v2093 = vpop.xlane.xlu0 %2092
  %v2094 = vadd.f32 %v1878, %v1879
  %v2095 = vadd.f32 %v2094, %v1880
  %v2096 = vadd.f32 %v2095, %v1881
  %2097 = vadd.xlane.f32.xlu0 %v2096
  %v2098 = vpop.xlane.xlu0 %2097
  %v2099 = vadd.f32 %v1882, %v1883
  %v2100 = vadd.f32 %v2099, %v1884
  %v2101 = vadd.f32 %v2100, %v1885
  %2102 = vadd.xlane.f32.xlu0 %v2101
  %v2103 = vpop.xlane.xlu0 %2102
  %v2104 = vadd.f32 %v1886, %v1887
  %v2105 = vadd.f32 %v2104, %v1888
  %v2106 = vadd.f32 %v2105, %v1889
  %2107 = vadd.xlane.f32.xlu0 %v2106
  %v2108 = vpop.xlane.xlu0 %2107
  %v2109 = vadd.f32 %v1890, %v1891
  %v2110 = vadd.f32 %v2109, %v1892
  %v2111 = vadd.f32 %v2110, %v1893
  %2112 = vadd.xlane.f32.xlu0 %v2111
  %v2113 = vpop.xlane.xlu0 %2112
  %v2114 = vadd.f32 %v1894, %v1895
  %v2115 = vadd.f32 %v2114, %v1896
  %v2116 = vadd.f32 %v2115, %v1897
  %2117 = vadd.xlane.f32.xlu0 %v2116
  %v2118 = vpop.xlane.xlu0 %2117
  %v2119 = vadd.f32 %v1898, %v1899
  %v2120 = vadd.f32 %v2119, %v1900
  %v2121 = vadd.f32 %v2120, %v1901
  %2122 = vadd.xlane.f32.xlu0 %v2121
  %v2123 = vpop.xlane.xlu0 %2122
  %v2124 = vadd.f32 %v1902, %v1903
  %v2125 = vadd.f32 %v2124, %v1904
  %v2126 = vadd.f32 %v2125, %v1905
  %2127 = vadd.xlane.f32.xlu0 %v2126
  %v2128 = vpop.xlane.xlu0 %2127
  %v2129 = vadd.f32 %v1906, %v1907
  %v2130 = vadd.f32 %v2129, %v1908
  %v2131 = vadd.f32 %v2130, %v1909
  %2132 = vadd.xlane.f32.xlu0 %v2131
  %v2133 = vpop.xlane.xlu0 %2132
  %v2134 = vadd.f32 %v1910, %v1911
  %v2135 = vadd.f32 %v2134, %v1912
  %v2136 = vadd.f32 %v2135, %v1913
  %2137 = vadd.xlane.f32.xlu0 %v2136
  %v2138 = vpop.xlane.xlu0 %2137
  %v2139 = vadd.f32 %v1914, %v1915
  %v2140 = vadd.f32 %v2139, %v1916
  %v2141 = vadd.f32 %v2140, %v1917
  %2142 = vadd.xlane.f32.xlu0 %v2141
  %v2143 = vpop.xlane.xlu0 %2142
  %v2144 = vadd.f32 %v1918, %v1919
  %v2145 = vadd.f32 %v2144, %v1920
  %v2146 = vadd.f32 %v2145, %v1921
  %2147 = vadd.xlane.f32.xlu0 %v2146
  %v2148 = vpop.xlane.xlu0 %2147
  %v2149 = vadd.f32 %v1922, %v1923
  %v2150 = vadd.f32 %v2149, %v1924
  %v2151 = vadd.f32 %v2150, %v1925
  %2152 = vadd.xlane.f32.xlu0 %v2151
  %v2153 = vpop.xlane.xlu0 %2152
  %v2154 = vadd.f32 %v1926, %v1927
  %v2155 = vadd.f32 %v2154, %v1928
  %v2156 = vadd.f32 %v2155, %v1929
  %2157 = vadd.xlane.f32.xlu0 %v2156
  %v2158 = vpop.xlane.xlu0 %2157
  %v2159 = vadd.f32 %v1930, %v1931
  %v2160 = vadd.f32 %v2159, %v1932
  %v2161 = vadd.f32 %v2160, %v1933
  %2162 = vadd.xlane.f32.xlu0 %v2161
  %v2163 = vpop.xlane.xlu0 %2162
  %v2164 = vadd.f32 %v1934, %v1935
  %v2165 = vadd.f32 %v2164, %v1936
  %v2166 = vadd.f32 %v2165, %v1937
  %2167 = vadd.xlane.f32.xlu0 %v2166
  %v2168 = vpop.xlane.xlu0 %2167
  %v2169 = vadd.f32 %v1938, %v1939
  %v2170 = vadd.f32 %v2169, %v1940
  %v2171 = vadd.f32 %v2170, %v1941
  %2172 = vadd.xlane.f32.xlu0 %v2171
  %v2173 = vpop.xlane.xlu0 %2172
  %v2174 = vadd.f32 %v1942, %v1943
  %v2175 = vadd.f32 %v2174, %v1944
  %v2176 = vadd.f32 %v2175, %v1945
  %2177 = vadd.xlane.f32.xlu0 %v2176
  %v2178 = vpop.xlane.xlu0 %2177
  %v2179 = vadd.f32 %v1946, %v1947
  %v2180 = vadd.f32 %v2179, %v1948
  %v2181 = vadd.f32 %v2180, %v1949
  %2182 = vadd.xlane.f32.xlu0 %v2181
  %v2183 = vpop.xlane.xlu0 %2182
  %v2184 = vadd.f32 %v1950, %v1951
  %v2185 = vadd.f32 %v2184, %v1952
  %v2186 = vadd.f32 %v2185, %v1953
  %2187 = vadd.xlane.f32.xlu0 %v2186
  %v2188 = vpop.xlane.xlu0 %2187
  %v2189 = vadd.f32 %v1954, %v1955
  %v2190 = vadd.f32 %v2189, %v1956
  %v2191 = vadd.f32 %v2190, %v1957
  %2192 = vadd.xlane.f32.xlu0 %v2191
  %v2193 = vpop.xlane.xlu0 %2192
  %v2194 = vadd.f32 %v1958, %v1959
  %v2195 = vadd.f32 %v2194, %v1960
  %v2196 = vadd.f32 %v2195, %v1961
  %2197 = vadd.xlane.f32.xlu0 %v2196
  %v2198 = vpop.xlane.xlu0 %2197
  %v2199 = vadd.f32 %v1962, %v1963
  %v2200 = vadd.f32 %v2199, %v1964
  %v2201 = vadd.f32 %v2200, %v1965
  %2202 = vadd.xlane.f32.xlu0 %v2201
  %v2203 = vpop.xlane.xlu0 %2202
  %v2204 = vadd.f32 %v1966, %v1967
  %v2205 = vadd.f32 %v2204, %v1968
  %v2206 = vadd.f32 %v2205, %v1969
  %2207 = vadd.xlane.f32.xlu0 %v2206
  %v2208 = vpop.xlane.xlu0 %2207
  %v2209 = vadd.f32 %v1970, %v1971
  %v2210 = vadd.f32 %v2209, %v1972
  %v2211 = vadd.f32 %v2210, %v1973
  %2212 = vadd.xlane.f32.xlu0 %v2211
  %v2213 = vpop.xlane.xlu0 %2212
  %v2214 = vstv %s28
  %v2215 = vadd.f32 %v1978, %v2214
  %v2216 = vadd.f32 %v1983, %v2214
  %v2217 = vadd.f32 %v1988, %v2214
  %v2218 = vadd.f32 %v1993, %v2214
  %v2219 = vadd.f32 %v1998, %v2214
  %v2220 = vadd.f32 %v2003, %v2214
  %v2221 = vadd.f32 %v2008, %v2214
  %v2222 = vadd.f32 %v2013, %v2214
  %v2223 = vadd.f32 %v2018, %v2214
  %v2224 = vadd.f32 %v2023, %v2214
  %v2225 = vadd.f32 %v2028, %v2214
  %v2226 = vadd.f32 %v2033, %v2214
  %v2227 = vadd.f32 %v2038, %v2214
  %v2228 = vadd.f32 %v2043, %v2214
  %v2229 = vadd.f32 %v2048, %v2214
  %v2230 = vadd.f32 %v2053, %v2214
  %v2231 = vadd.f32 %v2058, %v2214
  %v2232 = vadd.f32 %v2063, %v2214
  %v2233 = vadd.f32 %v2068, %v2214
  %v2234 = vadd.f32 %v2073, %v2214
  %v2235 = vadd.f32 %v2078, %v2214
  %v2236 = vadd.f32 %v2083, %v2214
  %v2237 = vadd.f32 %v2088, %v2214
  %v2238 = vadd.f32 %v2093, %v2214
  %v2239 = vadd.f32 %v2098, %v2214
  %v2240 = vadd.f32 %v2103, %v2214
  %v2241 = vadd.f32 %v2108, %v2214
  %v2242 = vadd.f32 %v2113, %v2214
  %v2243 = vadd.f32 %v2118, %v2214
  %v2244 = vadd.f32 %v2123, %v2214
  %v2245 = vadd.f32 %v2128, %v2214
  %v2246 = vadd.f32 %v2133, %v2214
  %v2247 = vadd.f32 %v2138, %v2214
  %v2248 = vadd.f32 %v2143, %v2214
  %v2249 = vadd.f32 %v2148, %v2214
  %v2250 = vadd.f32 %v2153, %v2214
  %v2251 = vadd.f32 %v2158, %v2214
  %v2252 = vadd.f32 %v2163, %v2214
  %v2253 = vadd.f32 %v2168, %v2214
  %v2254 = vadd.f32 %v2173, %v2214
  %v2255 = vadd.f32 %v2178, %v2214
  %v2256 = vadd.f32 %v2183, %v2214
  %v2257 = vadd.f32 %v2188, %v2214
  %v2258 = vadd.f32 %v2193, %v2214
  %v2259 = vadd.f32 %v2198, %v2214
  %v2260 = vadd.f32 %v2203, %v2214
  %v2261 = vadd.f32 %v2208, %v2214
  %v2262 = vadd.f32 %v2213, %v2214
  %v2311 = vlaneseq
  %v2312 = vshrl.u32 %v2311, 7
  %v2313 = vsub.s32 0, %v2312
  %v2314 = vrot.slane %v2215, %v2313
  %v2315 = vlaneseq
  %v2316 = vshrl.u32 %v2315, 7
  %v2317 = vsub.s32 1, %v2316
  %v2318 = vrot.slane %v2215, %v2317
  %v2319 = vlaneseq
  %v2320 = vshrl.u32 %v2319, 7
  %v2321 = vsub.s32 2, %v2320
  %v2322 = vrot.slane %v2215, %v2321
  %v2323 = vlaneseq
  %v2324 = vshrl.u32 %v2323, 7
  %v2325 = vsub.s32 3, %v2324
  %v2326 = vrot.slane %v2215, %v2325
  %v2327 = vlaneseq
  %v2328 = vshrl.u32 %v2327, 7
  %v2329 = vsub.s32 4, %v2328
  %v2330 = vrot.slane %v2215, %v2329
  %v2331 = vlaneseq
  %v2332 = vshrl.u32 %v2331, 7
  %v2333 = vsub.s32 5, %v2332
  %v2334 = vrot.slane %v2215, %v2333
  %v2335 = vlaneseq
  %v2336 = vshrl.u32 %v2335, 7
  %v2337 = vsub.s32 6, %v2336
  %v2338 = vrot.slane %v2215, %v2337
  %v2339 = vlaneseq
  %v2340 = vshrl.u32 %v2339, 7
  %v2341 = vsub.s32 7, %v2340
  %v2342 = vrot.slane %v2215, %v2341
  %v2343 = vlaneseq
  %v2344 = vshrl.u32 %v2343, 7
  %v2345 = vsub.s32 0, %v2344
  %v2346 = vrot.slane %v2216, %v2345
  %v2347 = vlaneseq
  %v2348 = vshrl.u32 %v2347, 7
  %v2349 = vsub.s32 1, %v2348
  %v2350 = vrot.slane %v2216, %v2349
  %v2351 = vlaneseq
  %v2352 = vshrl.u32 %v2351, 7
  %v2353 = vsub.s32 2, %v2352
  %v2354 = vrot.slane %v2216, %v2353
  %v2355 = vlaneseq
  %v2356 = vshrl.u32 %v2355, 7
  %v2357 = vsub.s32 3, %v2356
  %v2358 = vrot.slane %v2216, %v2357
  %v2359 = vlaneseq
  %v2360 = vshrl.u32 %v2359, 7
  %v2361 = vsub.s32 4, %v2360
  %v2362 = vrot.slane %v2216, %v2361
  %v2363 = vlaneseq
  %v2364 = vshrl.u32 %v2363, 7
  %v2365 = vsub.s32 5, %v2364
  %v2366 = vrot.slane %v2216, %v2365
  %v2367 = vlaneseq
  %v2368 = vshrl.u32 %v2367, 7
  %v2369 = vsub.s32 6, %v2368
  %v2370 = vrot.slane %v2216, %v2369
  %v2371 = vlaneseq
  %v2372 = vshrl.u32 %v2371, 7
  %v2373 = vsub.s32 7, %v2372
  %v2374 = vrot.slane %v2216, %v2373
  %v2375 = vlaneseq
  %v2376 = vshrl.u32 %v2375, 7
  %v2377 = vsub.s32 0, %v2376
  %v2378 = vrot.slane %v2217, %v2377
  %v2379 = vlaneseq
  %v2380 = vshrl.u32 %v2379, 7
  %v2381 = vsub.s32 1, %v2380
  %v2382 = vrot.slane %v2217, %v2381
  %v2383 = vlaneseq
  %v2384 = vshrl.u32 %v2383, 7
  %v2385 = vsub.s32 2, %v2384
  %v2386 = vrot.slane %v2217, %v2385
  %v2387 = vlaneseq
  %v2388 = vshrl.u32 %v2387, 7
  %v2389 = vsub.s32 3, %v2388
  %v2390 = vrot.slane %v2217, %v2389
  %v2391 = vlaneseq
  %v2392 = vshrl.u32 %v2391, 7
  %v2393 = vsub.s32 4, %v2392
  %v2394 = vrot.slane %v2217, %v2393
  %v2395 = vlaneseq
  %v2396 = vshrl.u32 %v2395, 7
  %v2397 = vsub.s32 5, %v2396
  %v2398 = vrot.slane %v2217, %v2397
  %v2399 = vlaneseq
  %v2400 = vshrl.u32 %v2399, 7
  %v2401 = vsub.s32 6, %v2400
  %v2402 = vrot.slane %v2217, %v2401
  %v2403 = vlaneseq
  %v2404 = vshrl.u32 %v2403, 7
  %v2405 = vsub.s32 7, %v2404
  %v2406 = vrot.slane %v2217, %v2405
  %v2407 = vlaneseq
  %v2408 = vshrl.u32 %v2407, 7
  %v2409 = vsub.s32 0, %v2408
  %v2410 = vrot.slane %v2218, %v2409
  %v2411 = vlaneseq
  %v2412 = vshrl.u32 %v2411, 7
  %v2413 = vsub.s32 1, %v2412
  %v2414 = vrot.slane %v2218, %v2413
  %v2415 = vlaneseq
  %v2416 = vshrl.u32 %v2415, 7
  %v2417 = vsub.s32 2, %v2416
  %v2418 = vrot.slane %v2218, %v2417
  %v2419 = vlaneseq
  %v2420 = vshrl.u32 %v2419, 7
  %v2421 = vsub.s32 3, %v2420
  %v2422 = vrot.slane %v2218, %v2421
  %v2423 = vlaneseq
  %v2424 = vshrl.u32 %v2423, 7
  %v2425 = vsub.s32 4, %v2424
  %v2426 = vrot.slane %v2218, %v2425
  %v2427 = vlaneseq
  %v2428 = vshrl.u32 %v2427, 7
  %v2429 = vsub.s32 5, %v2428
  %v2430 = vrot.slane %v2218, %v2429
  %v2431 = vlaneseq
  %v2432 = vshrl.u32 %v2431, 7
  %v2433 = vsub.s32 6, %v2432
  %v2434 = vrot.slane %v2218, %v2433
  %v2435 = vlaneseq
  %v2436 = vshrl.u32 %v2435, 7
  %v2437 = vsub.s32 7, %v2436
  %v2438 = vrot.slane %v2218, %v2437
  %v2439 = vlaneseq
  %v2440 = vshrl.u32 %v2439, 7
  %v2441 = vsub.s32 0, %v2440
  %v2442 = vrot.slane %v2219, %v2441
  %v2443 = vlaneseq
  %v2444 = vshrl.u32 %v2443, 7
  %v2445 = vsub.s32 1, %v2444
  %v2446 = vrot.slane %v2219, %v2445
  %v2447 = vlaneseq
  %v2448 = vshrl.u32 %v2447, 7
  %v2449 = vsub.s32 2, %v2448
  %v2450 = vrot.slane %v2219, %v2449
  %v2451 = vlaneseq
  %v2452 = vshrl.u32 %v2451, 7
  %v2453 = vsub.s32 3, %v2452
  %v2454 = vrot.slane %v2219, %v2453
  %v2455 = vlaneseq
  %v2456 = vshrl.u32 %v2455, 7
  %v2457 = vsub.s32 4, %v2456
  %v2458 = vrot.slane %v2219, %v2457
  %v2459 = vlaneseq
  %v2460 = vshrl.u32 %v2459, 7
  %v2461 = vsub.s32 5, %v2460
  %v2462 = vrot.slane %v2219, %v2461
  %v2463 = vlaneseq
  %v2464 = vshrl.u32 %v2463, 7
  %v2465 = vsub.s32 6, %v2464
  %v2466 = vrot.slane %v2219, %v2465
  %v2467 = vlaneseq
  %v2468 = vshrl.u32 %v2467, 7
  %v2469 = vsub.s32 7, %v2468
  %v2470 = vrot.slane %v2219, %v2469
  %v2471 = vlaneseq
  %v2472 = vshrl.u32 %v2471, 7
  %v2473 = vsub.s32 0, %v2472
  %v2474 = vrot.slane %v2220, %v2473
  %v2475 = vlaneseq
  %v2476 = vshrl.u32 %v2475, 7
  %v2477 = vsub.s32 1, %v2476
  %v2478 = vrot.slane %v2220, %v2477
  %v2479 = vlaneseq
  %v2480 = vshrl.u32 %v2479, 7
  %v2481 = vsub.s32 2, %v2480
  %v2482 = vrot.slane %v2220, %v2481
  %v2483 = vlaneseq
  %v2484 = vshrl.u32 %v2483, 7
  %v2485 = vsub.s32 3, %v2484
  %v2486 = vrot.slane %v2220, %v2485
  %v2487 = vlaneseq
  %v2488 = vshrl.u32 %v2487, 7
  %v2489 = vsub.s32 4, %v2488
  %v2490 = vrot.slane %v2220, %v2489
  %v2491 = vlaneseq
  %v2492 = vshrl.u32 %v2491, 7
  %v2493 = vsub.s32 5, %v2492
  %v2494 = vrot.slane %v2220, %v2493
  %v2495 = vlaneseq
  %v2496 = vshrl.u32 %v2495, 7
  %v2497 = vsub.s32 6, %v2496
  %v2498 = vrot.slane %v2220, %v2497
  %v2499 = vlaneseq
  %v2500 = vshrl.u32 %v2499, 7
  %v2501 = vsub.s32 7, %v2500
  %v2502 = vrot.slane %v2220, %v2501
  %v2503 = vlaneseq
  %v2504 = vshrl.u32 %v2503, 7
  %v2505 = vsub.s32 0, %v2504
  %v2506 = vrot.slane %v2221, %v2505
  %v2507 = vlaneseq
  %v2508 = vshrl.u32 %v2507, 7
  %v2509 = vsub.s32 1, %v2508
  %v2510 = vrot.slane %v2221, %v2509
  %v2511 = vlaneseq
  %v2512 = vshrl.u32 %v2511, 7
  %v2513 = vsub.s32 2, %v2512
  %v2514 = vrot.slane %v2221, %v2513
  %v2515 = vlaneseq
  %v2516 = vshrl.u32 %v2515, 7
  %v2517 = vsub.s32 3, %v2516
  %v2518 = vrot.slane %v2221, %v2517
  %v2519 = vlaneseq
  %v2520 = vshrl.u32 %v2519, 7
  %v2521 = vsub.s32 4, %v2520
  %v2522 = vrot.slane %v2221, %v2521
  %v2523 = vlaneseq
  %v2524 = vshrl.u32 %v2523, 7
  %v2525 = vsub.s32 5, %v2524
  %v2526 = vrot.slane %v2221, %v2525
  %v2527 = vlaneseq
  %v2528 = vshrl.u32 %v2527, 7
  %v2529 = vsub.s32 6, %v2528
  %v2530 = vrot.slane %v2221, %v2529
  %v2531 = vlaneseq
  %v2532 = vshrl.u32 %v2531, 7
  %v2533 = vsub.s32 7, %v2532
  %v2534 = vrot.slane %v2221, %v2533
  %v2535 = vlaneseq
  %v2536 = vshrl.u32 %v2535, 7
  %v2537 = vsub.s32 0, %v2536
  %v2538 = vrot.slane %v2222, %v2537
  %v2539 = vlaneseq
  %v2540 = vshrl.u32 %v2539, 7
  %v2541 = vsub.s32 1, %v2540
  %v2542 = vrot.slane %v2222, %v2541
  %v2543 = vlaneseq
  %v2544 = vshrl.u32 %v2543, 7
  %v2545 = vsub.s32 2, %v2544
  %v2546 = vrot.slane %v2222, %v2545
  %v2547 = vlaneseq
  %v2548 = vshrl.u32 %v2547, 7
  %v2549 = vsub.s32 3, %v2548
  %v2550 = vrot.slane %v2222, %v2549
  %v2551 = vlaneseq
  %v2552 = vshrl.u32 %v2551, 7
  %v2553 = vsub.s32 4, %v2552
  %v2554 = vrot.slane %v2222, %v2553
  %v2555 = vlaneseq
  %v2556 = vshrl.u32 %v2555, 7
  %v2557 = vsub.s32 5, %v2556
  %v2558 = vrot.slane %v2222, %v2557
  %v2559 = vlaneseq
  %v2560 = vshrl.u32 %v2559, 7
  %v2561 = vsub.s32 6, %v2560
  %v2562 = vrot.slane %v2222, %v2561
  %v2563 = vlaneseq
  %v2564 = vshrl.u32 %v2563, 7
  %v2565 = vsub.s32 7, %v2564
  %v2566 = vrot.slane %v2222, %v2565
  %v2567 = vlaneseq
  %v2568 = vshrl.u32 %v2567, 7
  %v2569 = vsub.s32 0, %v2568
  %v2570 = vrot.slane %v2223, %v2569
  %v2571 = vlaneseq
  %v2572 = vshrl.u32 %v2571, 7
  %v2573 = vsub.s32 1, %v2572
  %v2574 = vrot.slane %v2223, %v2573
  %v2575 = vlaneseq
  %v2576 = vshrl.u32 %v2575, 7
  %v2577 = vsub.s32 2, %v2576
  %v2578 = vrot.slane %v2223, %v2577
  %v2579 = vlaneseq
  %v2580 = vshrl.u32 %v2579, 7
  %v2581 = vsub.s32 3, %v2580
  %v2582 = vrot.slane %v2223, %v2581
  %v2583 = vlaneseq
  %v2584 = vshrl.u32 %v2583, 7
  %v2585 = vsub.s32 4, %v2584
  %v2586 = vrot.slane %v2223, %v2585
  %v2587 = vlaneseq
  %v2588 = vshrl.u32 %v2587, 7
  %v2589 = vsub.s32 5, %v2588
  %v2590 = vrot.slane %v2223, %v2589
  %v2591 = vlaneseq
  %v2592 = vshrl.u32 %v2591, 7
  %v2593 = vsub.s32 6, %v2592
  %v2594 = vrot.slane %v2223, %v2593
  %v2595 = vlaneseq
  %v2596 = vshrl.u32 %v2595, 7
  %v2597 = vsub.s32 7, %v2596
  %v2598 = vrot.slane %v2223, %v2597
  %v2599 = vlaneseq
  %v2600 = vshrl.u32 %v2599, 7
  %v2601 = vsub.s32 0, %v2600
  %v2602 = vrot.slane %v2224, %v2601
  %v2603 = vlaneseq
  %v2604 = vshrl.u32 %v2603, 7
  %v2605 = vsub.s32 1, %v2604
  %v2606 = vrot.slane %v2224, %v2605
  %v2607 = vlaneseq
  %v2608 = vshrl.u32 %v2607, 7
  %v2609 = vsub.s32 2, %v2608
  %v2610 = vrot.slane %v2224, %v2609
  %v2611 = vlaneseq
  %v2612 = vshrl.u32 %v2611, 7
  %v2613 = vsub.s32 3, %v2612
  %v2614 = vrot.slane %v2224, %v2613
  %v2615 = vlaneseq
  %v2616 = vshrl.u32 %v2615, 7
  %v2617 = vsub.s32 4, %v2616
  %v2618 = vrot.slane %v2224, %v2617
  %v2619 = vlaneseq
  %v2620 = vshrl.u32 %v2619, 7
  %v2621 = vsub.s32 5, %v2620
  %v2622 = vrot.slane %v2224, %v2621
  %v2623 = vlaneseq
  %v2624 = vshrl.u32 %v2623, 7
  %v2625 = vsub.s32 6, %v2624
  %v2626 = vrot.slane %v2224, %v2625
  %v2627 = vlaneseq
  %v2628 = vshrl.u32 %v2627, 7
  %v2629 = vsub.s32 7, %v2628
  %v2630 = vrot.slane %v2224, %v2629
  %v2631 = vlaneseq
  %v2632 = vshrl.u32 %v2631, 7
  %v2633 = vsub.s32 0, %v2632
  %v2634 = vrot.slane %v2225, %v2633
  %v2635 = vlaneseq
  %v2636 = vshrl.u32 %v2635, 7
  %v2637 = vsub.s32 1, %v2636
  %v2638 = vrot.slane %v2225, %v2637
  %v2639 = vlaneseq
  %v2640 = vshrl.u32 %v2639, 7
  %v2641 = vsub.s32 2, %v2640
  %v2642 = vrot.slane %v2225, %v2641
  %v2643 = vlaneseq
  %v2644 = vshrl.u32 %v2643, 7
  %v2645 = vsub.s32 3, %v2644
  %v2646 = vrot.slane %v2225, %v2645
  %v2647 = vlaneseq
  %v2648 = vshrl.u32 %v2647, 7
  %v2649 = vsub.s32 4, %v2648
  %v2650 = vrot.slane %v2225, %v2649
  %v2651 = vlaneseq
  %v2652 = vshrl.u32 %v2651, 7
  %v2653 = vsub.s32 5, %v2652
  %v2654 = vrot.slane %v2225, %v2653
  %v2655 = vlaneseq
  %v2656 = vshrl.u32 %v2655, 7
  %v2657 = vsub.s32 6, %v2656
  %v2658 = vrot.slane %v2225, %v2657
  %v2659 = vlaneseq
  %v2660 = vshrl.u32 %v2659, 7
  %v2661 = vsub.s32 7, %v2660
  %v2662 = vrot.slane %v2225, %v2661
  %v2663 = vlaneseq
  %v2664 = vshrl.u32 %v2663, 7
  %v2665 = vsub.s32 0, %v2664
  %v2666 = vrot.slane %v2226, %v2665
  %v2667 = vlaneseq
  %v2668 = vshrl.u32 %v2667, 7
  %v2669 = vsub.s32 1, %v2668
  %v2670 = vrot.slane %v2226, %v2669
  %v2671 = vlaneseq
  %v2672 = vshrl.u32 %v2671, 7
  %v2673 = vsub.s32 2, %v2672
  %v2674 = vrot.slane %v2226, %v2673
  %v2675 = vlaneseq
  %v2676 = vshrl.u32 %v2675, 7
  %v2677 = vsub.s32 3, %v2676
  %v2678 = vrot.slane %v2226, %v2677
  %v2679 = vlaneseq
  %v2680 = vshrl.u32 %v2679, 7
  %v2681 = vsub.s32 4, %v2680
  %v2682 = vrot.slane %v2226, %v2681
  %v2683 = vlaneseq
  %v2684 = vshrl.u32 %v2683, 7
  %v2685 = vsub.s32 5, %v2684
  %v2686 = vrot.slane %v2226, %v2685
  %v2687 = vlaneseq
  %v2688 = vshrl.u32 %v2687, 7
  %v2689 = vsub.s32 6, %v2688
  %v2690 = vrot.slane %v2226, %v2689
  %v2691 = vlaneseq
  %v2692 = vshrl.u32 %v2691, 7
  %v2693 = vsub.s32 7, %v2692
  %v2694 = vrot.slane %v2226, %v2693
  %v2695 = vlaneseq
  %v2696 = vshrl.u32 %v2695, 7
  %v2697 = vsub.s32 0, %v2696
  %v2698 = vrot.slane %v2227, %v2697
  %v2699 = vlaneseq
  %v2700 = vshrl.u32 %v2699, 7
  %v2701 = vsub.s32 1, %v2700
  %v2702 = vrot.slane %v2227, %v2701
  %v2703 = vlaneseq
  %v2704 = vshrl.u32 %v2703, 7
  %v2705 = vsub.s32 2, %v2704
  %v2706 = vrot.slane %v2227, %v2705
  %v2707 = vlaneseq
  %v2708 = vshrl.u32 %v2707, 7
  %v2709 = vsub.s32 3, %v2708
  %v2710 = vrot.slane %v2227, %v2709
  %v2711 = vlaneseq
  %v2712 = vshrl.u32 %v2711, 7
  %v2713 = vsub.s32 4, %v2712
  %v2714 = vrot.slane %v2227, %v2713
  %v2715 = vlaneseq
  %v2716 = vshrl.u32 %v2715, 7
  %v2717 = vsub.s32 5, %v2716
  %v2718 = vrot.slane %v2227, %v2717
  %v2719 = vlaneseq
  %v2720 = vshrl.u32 %v2719, 7
  %v2721 = vsub.s32 6, %v2720
  %v2722 = vrot.slane %v2227, %v2721
  %v2723 = vlaneseq
  %v2724 = vshrl.u32 %v2723, 7
  %v2725 = vsub.s32 7, %v2724
  %v2726 = vrot.slane %v2227, %v2725
  %v2727 = vlaneseq
  %v2728 = vshrl.u32 %v2727, 7
  %v2729 = vsub.s32 0, %v2728
  %v2730 = vrot.slane %v2228, %v2729
  %v2731 = vlaneseq
  %v2732 = vshrl.u32 %v2731, 7
  %v2733 = vsub.s32 1, %v2732
  %v2734 = vrot.slane %v2228, %v2733
  %v2735 = vlaneseq
  %v2736 = vshrl.u32 %v2735, 7
  %v2737 = vsub.s32 2, %v2736
  %v2738 = vrot.slane %v2228, %v2737
  %v2739 = vlaneseq
  %v2740 = vshrl.u32 %v2739, 7
  %v2741 = vsub.s32 3, %v2740
  %v2742 = vrot.slane %v2228, %v2741
  %v2743 = vlaneseq
  %v2744 = vshrl.u32 %v2743, 7
  %v2745 = vsub.s32 4, %v2744
  %v2746 = vrot.slane %v2228, %v2745
  %v2747 = vlaneseq
  %v2748 = vshrl.u32 %v2747, 7
  %v2749 = vsub.s32 5, %v2748
  %v2750 = vrot.slane %v2228, %v2749
  %v2751 = vlaneseq
  %v2752 = vshrl.u32 %v2751, 7
  %v2753 = vsub.s32 6, %v2752
  %v2754 = vrot.slane %v2228, %v2753
  %v2755 = vlaneseq
  %v2756 = vshrl.u32 %v2755, 7
  %v2757 = vsub.s32 7, %v2756
  %v2758 = vrot.slane %v2228, %v2757
  %v2759 = vlaneseq
  %v2760 = vshrl.u32 %v2759, 7
  %v2761 = vsub.s32 0, %v2760
  %v2762 = vrot.slane %v2229, %v2761
  %v2763 = vlaneseq
  %v2764 = vshrl.u32 %v2763, 7
  %v2765 = vsub.s32 1, %v2764
  %v2766 = vrot.slane %v2229, %v2765
  %v2767 = vlaneseq
  %v2768 = vshrl.u32 %v2767, 7
  %v2769 = vsub.s32 2, %v2768
  %v2770 = vrot.slane %v2229, %v2769
  %v2771 = vlaneseq
  %v2772 = vshrl.u32 %v2771, 7
  %v2773 = vsub.s32 3, %v2772
  %v2774 = vrot.slane %v2229, %v2773
  %v2775 = vlaneseq
  %v2776 = vshrl.u32 %v2775, 7
  %v2777 = vsub.s32 4, %v2776
  %v2778 = vrot.slane %v2229, %v2777
  %v2779 = vlaneseq
  %v2780 = vshrl.u32 %v2779, 7
  %v2781 = vsub.s32 5, %v2780
  %v2782 = vrot.slane %v2229, %v2781
  %v2783 = vlaneseq
  %v2784 = vshrl.u32 %v2783, 7
  %v2785 = vsub.s32 6, %v2784
  %v2786 = vrot.slane %v2229, %v2785
  %v2787 = vlaneseq
  %v2788 = vshrl.u32 %v2787, 7
  %v2789 = vsub.s32 7, %v2788
  %v2790 = vrot.slane %v2229, %v2789
  %v2791 = vlaneseq
  %v2792 = vshrl.u32 %v2791, 7
  %v2793 = vsub.s32 0, %v2792
  %v2794 = vrot.slane %v2230, %v2793
  %v2795 = vlaneseq
  %v2796 = vshrl.u32 %v2795, 7
  %v2797 = vsub.s32 1, %v2796
  %v2798 = vrot.slane %v2230, %v2797
  %v2799 = vlaneseq
  %v2800 = vshrl.u32 %v2799, 7
  %v2801 = vsub.s32 2, %v2800
  %v2802 = vrot.slane %v2230, %v2801
  %v2803 = vlaneseq
  %v2804 = vshrl.u32 %v2803, 7
  %v2805 = vsub.s32 3, %v2804
  %v2806 = vrot.slane %v2230, %v2805
  %v2807 = vlaneseq
  %v2808 = vshrl.u32 %v2807, 7
  %v2809 = vsub.s32 4, %v2808
  %v2810 = vrot.slane %v2230, %v2809
  %v2811 = vlaneseq
  %v2812 = vshrl.u32 %v2811, 7
  %v2813 = vsub.s32 5, %v2812
  %v2814 = vrot.slane %v2230, %v2813
  %v2815 = vlaneseq
  %v2816 = vshrl.u32 %v2815, 7
  %v2817 = vsub.s32 6, %v2816
  %v2818 = vrot.slane %v2230, %v2817
  %v2819 = vlaneseq
  %v2820 = vshrl.u32 %v2819, 7
  %v2821 = vsub.s32 7, %v2820
  %v2822 = vrot.slane %v2230, %v2821
  %v2823 = vlaneseq
  %v2824 = vshrl.u32 %v2823, 7
  %v2825 = vsub.s32 0, %v2824
  %v2826 = vrot.slane %v2231, %v2825
  %v2827 = vlaneseq
  %v2828 = vshrl.u32 %v2827, 7
  %v2829 = vsub.s32 1, %v2828
  %v2830 = vrot.slane %v2231, %v2829
  %v2831 = vlaneseq
  %v2832 = vshrl.u32 %v2831, 7
  %v2833 = vsub.s32 2, %v2832
  %v2834 = vrot.slane %v2231, %v2833
  %v2835 = vlaneseq
  %v2836 = vshrl.u32 %v2835, 7
  %v2837 = vsub.s32 3, %v2836
  %v2838 = vrot.slane %v2231, %v2837
  %v2839 = vlaneseq
  %v2840 = vshrl.u32 %v2839, 7
  %v2841 = vsub.s32 4, %v2840
  %v2842 = vrot.slane %v2231, %v2841
  %v2843 = vlaneseq
  %v2844 = vshrl.u32 %v2843, 7
  %v2845 = vsub.s32 5, %v2844
  %v2846 = vrot.slane %v2231, %v2845
  %v2847 = vlaneseq
  %v2848 = vshrl.u32 %v2847, 7
  %v2849 = vsub.s32 6, %v2848
  %v2850 = vrot.slane %v2231, %v2849
  %v2851 = vlaneseq
  %v2852 = vshrl.u32 %v2851, 7
  %v2853 = vsub.s32 7, %v2852
  %v2854 = vrot.slane %v2231, %v2853
  %v2855 = vlaneseq
  %v2856 = vshrl.u32 %v2855, 7
  %v2857 = vsub.s32 0, %v2856
  %v2858 = vrot.slane %v2232, %v2857
  %v2859 = vlaneseq
  %v2860 = vshrl.u32 %v2859, 7
  %v2861 = vsub.s32 1, %v2860
  %v2862 = vrot.slane %v2232, %v2861
  %v2863 = vlaneseq
  %v2864 = vshrl.u32 %v2863, 7
  %v2865 = vsub.s32 2, %v2864
  %v2866 = vrot.slane %v2232, %v2865
  %v2867 = vlaneseq
  %v2868 = vshrl.u32 %v2867, 7
  %v2869 = vsub.s32 3, %v2868
  %v2870 = vrot.slane %v2232, %v2869
  %v2871 = vlaneseq
  %v2872 = vshrl.u32 %v2871, 7
  %v2873 = vsub.s32 4, %v2872
  %v2874 = vrot.slane %v2232, %v2873
  %v2875 = vlaneseq
  %v2876 = vshrl.u32 %v2875, 7
  %v2877 = vsub.s32 5, %v2876
  %v2878 = vrot.slane %v2232, %v2877
  %v2879 = vlaneseq
  %v2880 = vshrl.u32 %v2879, 7
  %v2881 = vsub.s32 6, %v2880
  %v2882 = vrot.slane %v2232, %v2881
  %v2883 = vlaneseq
  %v2884 = vshrl.u32 %v2883, 7
  %v2885 = vsub.s32 7, %v2884
  %v2886 = vrot.slane %v2232, %v2885
  %v2887 = vlaneseq
  %v2888 = vshrl.u32 %v2887, 7
  %v2889 = vsub.s32 0, %v2888
  %v2890 = vrot.slane %v2233, %v2889
  %v2891 = vlaneseq
  %v2892 = vshrl.u32 %v2891, 7
  %v2893 = vsub.s32 1, %v2892
  %v2894 = vrot.slane %v2233, %v2893
  %v2895 = vlaneseq
  %v2896 = vshrl.u32 %v2895, 7
  %v2897 = vsub.s32 2, %v2896
  %v2898 = vrot.slane %v2233, %v2897
  %v2899 = vlaneseq
  %v2900 = vshrl.u32 %v2899, 7
  %v2901 = vsub.s32 3, %v2900
  %v2902 = vrot.slane %v2233, %v2901
  %v2903 = vlaneseq
  %v2904 = vshrl.u32 %v2903, 7
  %v2905 = vsub.s32 4, %v2904
  %v2906 = vrot.slane %v2233, %v2905
  %v2907 = vlaneseq
  %v2908 = vshrl.u32 %v2907, 7
  %v2909 = vsub.s32 5, %v2908
  %v2910 = vrot.slane %v2233, %v2909
  %v2911 = vlaneseq
  %v2912 = vshrl.u32 %v2911, 7
  %v2913 = vsub.s32 6, %v2912
  %v2914 = vrot.slane %v2233, %v2913
  %v2915 = vlaneseq
  %v2916 = vshrl.u32 %v2915, 7
  %v2917 = vsub.s32 7, %v2916
  %v2918 = vrot.slane %v2233, %v2917
  %v2919 = vlaneseq
  %v2920 = vshrl.u32 %v2919, 7
  %v2921 = vsub.s32 0, %v2920
  %v2922 = vrot.slane %v2234, %v2921
  %v2923 = vlaneseq
  %v2924 = vshrl.u32 %v2923, 7
  %v2925 = vsub.s32 1, %v2924
  %v2926 = vrot.slane %v2234, %v2925
  %v2927 = vlaneseq
  %v2928 = vshrl.u32 %v2927, 7
  %v2929 = vsub.s32 2, %v2928
  %v2930 = vrot.slane %v2234, %v2929
  %v2931 = vlaneseq
  %v2932 = vshrl.u32 %v2931, 7
  %v2933 = vsub.s32 3, %v2932
  %v2934 = vrot.slane %v2234, %v2933
  %v2935 = vlaneseq
  %v2936 = vshrl.u32 %v2935, 7
  %v2937 = vsub.s32 4, %v2936
  %v2938 = vrot.slane %v2234, %v2937
  %v2939 = vlaneseq
  %v2940 = vshrl.u32 %v2939, 7
  %v2941 = vsub.s32 5, %v2940
  %v2942 = vrot.slane %v2234, %v2941
  %v2943 = vlaneseq
  %v2944 = vshrl.u32 %v2943, 7
  %v2945 = vsub.s32 6, %v2944
  %v2946 = vrot.slane %v2234, %v2945
  %v2947 = vlaneseq
  %v2948 = vshrl.u32 %v2947, 7
  %v2949 = vsub.s32 7, %v2948
  %v2950 = vrot.slane %v2234, %v2949
  %v2951 = vlaneseq
  %v2952 = vshrl.u32 %v2951, 7
  %v2953 = vsub.s32 0, %v2952
  %v2954 = vrot.slane %v2235, %v2953
  %v2955 = vlaneseq
  %v2956 = vshrl.u32 %v2955, 7
  %v2957 = vsub.s32 1, %v2956
  %v2958 = vrot.slane %v2235, %v2957
  %v2959 = vlaneseq
  %v2960 = vshrl.u32 %v2959, 7
  %v2961 = vsub.s32 2, %v2960
  %v2962 = vrot.slane %v2235, %v2961
  %v2963 = vlaneseq
  %v2964 = vshrl.u32 %v2963, 7
  %v2965 = vsub.s32 3, %v2964
  %v2966 = vrot.slane %v2235, %v2965
  %v2967 = vlaneseq
  %v2968 = vshrl.u32 %v2967, 7
  %v2969 = vsub.s32 4, %v2968
  %v2970 = vrot.slane %v2235, %v2969
  %v2971 = vlaneseq
  %v2972 = vshrl.u32 %v2971, 7
  %v2973 = vsub.s32 5, %v2972
  %v2974 = vrot.slane %v2235, %v2973
  %v2975 = vlaneseq
  %v2976 = vshrl.u32 %v2975, 7
  %v2977 = vsub.s32 6, %v2976
  %v2978 = vrot.slane %v2235, %v2977
  %v2979 = vlaneseq
  %v2980 = vshrl.u32 %v2979, 7
  %v2981 = vsub.s32 7, %v2980
  %v2982 = vrot.slane %v2235, %v2981
  %v2983 = vlaneseq
  %v2984 = vshrl.u32 %v2983, 7
  %v2985 = vsub.s32 0, %v2984
  %v2986 = vrot.slane %v2236, %v2985
  %v2987 = vlaneseq
  %v2988 = vshrl.u32 %v2987, 7
  %v2989 = vsub.s32 1, %v2988
  %v2990 = vrot.slane %v2236, %v2989
  %v2991 = vlaneseq
  %v2992 = vshrl.u32 %v2991, 7
  %v2993 = vsub.s32 2, %v2992
  %v2994 = vrot.slane %v2236, %v2993
  %v2995 = vlaneseq
  %v2996 = vshrl.u32 %v2995, 7
  %v2997 = vsub.s32 3, %v2996
  %v2998 = vrot.slane %v2236, %v2997
  %v2999 = vlaneseq
  %v3000 = vshrl.u32 %v2999, 7
  %v3001 = vsub.s32 4, %v3000
  %v3002 = vrot.slane %v2236, %v3001
  %v3003 = vlaneseq
  %v3004 = vshrl.u32 %v3003, 7
  %v3005 = vsub.s32 5, %v3004
  %v3006 = vrot.slane %v2236, %v3005
  %v3007 = vlaneseq
  %v3008 = vshrl.u32 %v3007, 7
  %v3009 = vsub.s32 6, %v3008
  %v3010 = vrot.slane %v2236, %v3009
  %v3011 = vlaneseq
  %v3012 = vshrl.u32 %v3011, 7
  %v3013 = vsub.s32 7, %v3012
  %v3014 = vrot.slane %v2236, %v3013
  %v3015 = vlaneseq
  %v3016 = vshrl.u32 %v3015, 7
  %v3017 = vsub.s32 0, %v3016
  %v3018 = vrot.slane %v2237, %v3017
  %v3019 = vlaneseq
  %v3020 = vshrl.u32 %v3019, 7
  %v3021 = vsub.s32 1, %v3020
  %v3022 = vrot.slane %v2237, %v3021
  %v3023 = vlaneseq
  %v3024 = vshrl.u32 %v3023, 7
  %v3025 = vsub.s32 2, %v3024
  %v3026 = vrot.slane %v2237, %v3025
  %v3027 = vlaneseq
  %v3028 = vshrl.u32 %v3027, 7
  %v3029 = vsub.s32 3, %v3028
  %v3030 = vrot.slane %v2237, %v3029
  %v3031 = vlaneseq
  %v3032 = vshrl.u32 %v3031, 7
  %v3033 = vsub.s32 4, %v3032
  %v3034 = vrot.slane %v2237, %v3033
  %v3035 = vlaneseq
  %v3036 = vshrl.u32 %v3035, 7
  %v3037 = vsub.s32 5, %v3036
  %v3038 = vrot.slane %v2237, %v3037
  %v3039 = vlaneseq
  %v3040 = vshrl.u32 %v3039, 7
  %v3041 = vsub.s32 6, %v3040
  %v3042 = vrot.slane %v2237, %v3041
  %v3043 = vlaneseq
  %v3044 = vshrl.u32 %v3043, 7
  %v3045 = vsub.s32 7, %v3044
  %v3046 = vrot.slane %v2237, %v3045
  %v3047 = vlaneseq
  %v3048 = vshrl.u32 %v3047, 7
  %v3049 = vsub.s32 0, %v3048
  %v3050 = vrot.slane %v2238, %v3049
  %v3051 = vlaneseq
  %v3052 = vshrl.u32 %v3051, 7
  %v3053 = vsub.s32 1, %v3052
  %v3054 = vrot.slane %v2238, %v3053
  %v3055 = vlaneseq
  %v3056 = vshrl.u32 %v3055, 7
  %v3057 = vsub.s32 2, %v3056
  %v3058 = vrot.slane %v2238, %v3057
  %v3059 = vlaneseq
  %v3060 = vshrl.u32 %v3059, 7
  %v3061 = vsub.s32 3, %v3060
  %v3062 = vrot.slane %v2238, %v3061
  %v3063 = vlaneseq
  %v3064 = vshrl.u32 %v3063, 7
  %v3065 = vsub.s32 4, %v3064
  %v3066 = vrot.slane %v2238, %v3065
  %v3067 = vlaneseq
  %v3068 = vshrl.u32 %v3067, 7
  %v3069 = vsub.s32 5, %v3068
  %v3070 = vrot.slane %v2238, %v3069
  %v3071 = vlaneseq
  %v3072 = vshrl.u32 %v3071, 7
  %v3073 = vsub.s32 6, %v3072
  %v3074 = vrot.slane %v2238, %v3073
  %v3075 = vlaneseq
  %v3076 = vshrl.u32 %v3075, 7
  %v3077 = vsub.s32 7, %v3076
  %v3078 = vrot.slane %v2238, %v3077
  %v3079 = vlaneseq
  %v3080 = vshrl.u32 %v3079, 7
  %v3081 = vsub.s32 0, %v3080
  %v3082 = vrot.slane %v2239, %v3081
  %v3083 = vlaneseq
  %v3084 = vshrl.u32 %v3083, 7
  %v3085 = vsub.s32 1, %v3084
  %v3086 = vrot.slane %v2239, %v3085
  %v3087 = vlaneseq
  %v3088 = vshrl.u32 %v3087, 7
  %v3089 = vsub.s32 2, %v3088
  %v3090 = vrot.slane %v2239, %v3089
  %v3091 = vlaneseq
  %v3092 = vshrl.u32 %v3091, 7
  %v3093 = vsub.s32 3, %v3092
  %v3094 = vrot.slane %v2239, %v3093
  %v3095 = vlaneseq
  %v3096 = vshrl.u32 %v3095, 7
  %v3097 = vsub.s32 4, %v3096
  %v3098 = vrot.slane %v2239, %v3097
  %v3099 = vlaneseq
  %v3100 = vshrl.u32 %v3099, 7
  %v3101 = vsub.s32 5, %v3100
  %v3102 = vrot.slane %v2239, %v3101
  %v3103 = vlaneseq
  %v3104 = vshrl.u32 %v3103, 7
  %v3105 = vsub.s32 6, %v3104
  %v3106 = vrot.slane %v2239, %v3105
  %v3107 = vlaneseq
  %v3108 = vshrl.u32 %v3107, 7
  %v3109 = vsub.s32 7, %v3108
  %v3110 = vrot.slane %v2239, %v3109
  %v3111 = vlaneseq
  %v3112 = vshrl.u32 %v3111, 7
  %v3113 = vsub.s32 0, %v3112
  %v3114 = vrot.slane %v2240, %v3113
  %v3115 = vlaneseq
  %v3116 = vshrl.u32 %v3115, 7
  %v3117 = vsub.s32 1, %v3116
  %v3118 = vrot.slane %v2240, %v3117
  %v3119 = vlaneseq
  %v3120 = vshrl.u32 %v3119, 7
  %v3121 = vsub.s32 2, %v3120
  %v3122 = vrot.slane %v2240, %v3121
  %v3123 = vlaneseq
  %v3124 = vshrl.u32 %v3123, 7
  %v3125 = vsub.s32 3, %v3124
  %v3126 = vrot.slane %v2240, %v3125
  %v3127 = vlaneseq
  %v3128 = vshrl.u32 %v3127, 7
  %v3129 = vsub.s32 4, %v3128
  %v3130 = vrot.slane %v2240, %v3129
  %v3131 = vlaneseq
  %v3132 = vshrl.u32 %v3131, 7
  %v3133 = vsub.s32 5, %v3132
  %v3134 = vrot.slane %v2240, %v3133
  %v3135 = vlaneseq
  %v3136 = vshrl.u32 %v3135, 7
  %v3137 = vsub.s32 6, %v3136
  %v3138 = vrot.slane %v2240, %v3137
  %v3139 = vlaneseq
  %v3140 = vshrl.u32 %v3139, 7
  %v3141 = vsub.s32 7, %v3140
  %v3142 = vrot.slane %v2240, %v3141
  %v3143 = vlaneseq
  %v3144 = vshrl.u32 %v3143, 7
  %v3145 = vsub.s32 0, %v3144
  %v3146 = vrot.slane %v2241, %v3145
  %v3147 = vlaneseq
  %v3148 = vshrl.u32 %v3147, 7
  %v3149 = vsub.s32 1, %v3148
  %v3150 = vrot.slane %v2241, %v3149
  %v3151 = vlaneseq
  %v3152 = vshrl.u32 %v3151, 7
  %v3153 = vsub.s32 2, %v3152
  %v3154 = vrot.slane %v2241, %v3153
  %v3155 = vlaneseq
  %v3156 = vshrl.u32 %v3155, 7
  %v3157 = vsub.s32 3, %v3156
  %v3158 = vrot.slane %v2241, %v3157
  %v3159 = vlaneseq
  %v3160 = vshrl.u32 %v3159, 7
  %v3161 = vsub.s32 4, %v3160
  %v3162 = vrot.slane %v2241, %v3161
  %v3163 = vlaneseq
  %v3164 = vshrl.u32 %v3163, 7
  %v3165 = vsub.s32 5, %v3164
  %v3166 = vrot.slane %v2241, %v3165
  %v3167 = vlaneseq
  %v3168 = vshrl.u32 %v3167, 7
  %v3169 = vsub.s32 6, %v3168
  %v3170 = vrot.slane %v2241, %v3169
  %v3171 = vlaneseq
  %v3172 = vshrl.u32 %v3171, 7
  %v3173 = vsub.s32 7, %v3172
  %v3174 = vrot.slane %v2241, %v3173
  %v3175 = vlaneseq
  %v3176 = vshrl.u32 %v3175, 7
  %v3177 = vsub.s32 0, %v3176
  %v3178 = vrot.slane %v2242, %v3177
  %v3179 = vlaneseq
  %v3180 = vshrl.u32 %v3179, 7
  %v3181 = vsub.s32 1, %v3180
  %v3182 = vrot.slane %v2242, %v3181
  %v3183 = vlaneseq
  %v3184 = vshrl.u32 %v3183, 7
  %v3185 = vsub.s32 2, %v3184
  %v3186 = vrot.slane %v2242, %v3185
  %v3187 = vlaneseq
  %v3188 = vshrl.u32 %v3187, 7
  %v3189 = vsub.s32 3, %v3188
  %v3190 = vrot.slane %v2242, %v3189
  %v3191 = vlaneseq
  %v3192 = vshrl.u32 %v3191, 7
  %v3193 = vsub.s32 4, %v3192
  %v3194 = vrot.slane %v2242, %v3193
  %v3195 = vlaneseq
  %v3196 = vshrl.u32 %v3195, 7
  %v3197 = vsub.s32 5, %v3196
  %v3198 = vrot.slane %v2242, %v3197
  %v3199 = vlaneseq
  %v3200 = vshrl.u32 %v3199, 7
  %v3201 = vsub.s32 6, %v3200
  %v3202 = vrot.slane %v2242, %v3201
  %v3203 = vlaneseq
  %v3204 = vshrl.u32 %v3203, 7
  %v3205 = vsub.s32 7, %v3204
  %v3206 = vrot.slane %v2242, %v3205
  %v3207 = vlaneseq
  %v3208 = vshrl.u32 %v3207, 7
  %v3209 = vsub.s32 0, %v3208
  %v3210 = vrot.slane %v2243, %v3209
  %v3211 = vlaneseq
  %v3212 = vshrl.u32 %v3211, 7
  %v3213 = vsub.s32 1, %v3212
  %v3214 = vrot.slane %v2243, %v3213
  %v3215 = vlaneseq
  %v3216 = vshrl.u32 %v3215, 7
  %v3217 = vsub.s32 2, %v3216
  %v3218 = vrot.slane %v2243, %v3217
  %v3219 = vlaneseq
  %v3220 = vshrl.u32 %v3219, 7
  %v3221 = vsub.s32 3, %v3220
  %v3222 = vrot.slane %v2243, %v3221
  %v3223 = vlaneseq
  %v3224 = vshrl.u32 %v3223, 7
  %v3225 = vsub.s32 4, %v3224
  %v3226 = vrot.slane %v2243, %v3225
  %v3227 = vlaneseq
  %v3228 = vshrl.u32 %v3227, 7
  %v3229 = vsub.s32 5, %v3228
  %v3230 = vrot.slane %v2243, %v3229
  %v3231 = vlaneseq
  %v3232 = vshrl.u32 %v3231, 7
  %v3233 = vsub.s32 6, %v3232
  %v3234 = vrot.slane %v2243, %v3233
  %v3235 = vlaneseq
  %v3236 = vshrl.u32 %v3235, 7
  %v3237 = vsub.s32 7, %v3236
  %v3238 = vrot.slane %v2243, %v3237
  %v3239 = vlaneseq
  %v3240 = vshrl.u32 %v3239, 7
  %v3241 = vsub.s32 0, %v3240
  %v3242 = vrot.slane %v2244, %v3241
  %v3243 = vlaneseq
  %v3244 = vshrl.u32 %v3243, 7
  %v3245 = vsub.s32 1, %v3244
  %v3246 = vrot.slane %v2244, %v3245
  %v3247 = vlaneseq
  %v3248 = vshrl.u32 %v3247, 7
  %v3249 = vsub.s32 2, %v3248
  %v3250 = vrot.slane %v2244, %v3249
  %v3251 = vlaneseq
  %v3252 = vshrl.u32 %v3251, 7
  %v3253 = vsub.s32 3, %v3252
  %v3254 = vrot.slane %v2244, %v3253
  %v3255 = vlaneseq
  %v3256 = vshrl.u32 %v3255, 7
  %v3257 = vsub.s32 4, %v3256
  %v3258 = vrot.slane %v2244, %v3257
  %v3259 = vlaneseq
  %v3260 = vshrl.u32 %v3259, 7
  %v3261 = vsub.s32 5, %v3260
  %v3262 = vrot.slane %v2244, %v3261
  %v3263 = vlaneseq
  %v3264 = vshrl.u32 %v3263, 7
  %v3265 = vsub.s32 6, %v3264
  %v3266 = vrot.slane %v2244, %v3265
  %v3267 = vlaneseq
  %v3268 = vshrl.u32 %v3267, 7
  %v3269 = vsub.s32 7, %v3268
  %v3270 = vrot.slane %v2244, %v3269
  %v3271 = vlaneseq
  %v3272 = vshrl.u32 %v3271, 7
  %v3273 = vsub.s32 0, %v3272
  %v3274 = vrot.slane %v2245, %v3273
  %v3275 = vlaneseq
  %v3276 = vshrl.u32 %v3275, 7
  %v3277 = vsub.s32 1, %v3276
  %v3278 = vrot.slane %v2245, %v3277
  %v3279 = vlaneseq
  %v3280 = vshrl.u32 %v3279, 7
  %v3281 = vsub.s32 2, %v3280
  %v3282 = vrot.slane %v2245, %v3281
  %v3283 = vlaneseq
  %v3284 = vshrl.u32 %v3283, 7
  %v3285 = vsub.s32 3, %v3284
  %v3286 = vrot.slane %v2245, %v3285
  %v3287 = vlaneseq
  %v3288 = vshrl.u32 %v3287, 7
  %v3289 = vsub.s32 4, %v3288
  %v3290 = vrot.slane %v2245, %v3289
  %v3291 = vlaneseq
  %v3292 = vshrl.u32 %v3291, 7
  %v3293 = vsub.s32 5, %v3292
  %v3294 = vrot.slane %v2245, %v3293
  %v3295 = vlaneseq
  %v3296 = vshrl.u32 %v3295, 7
  %v3297 = vsub.s32 6, %v3296
  %v3298 = vrot.slane %v2245, %v3297
  %v3299 = vlaneseq
  %v3300 = vshrl.u32 %v3299, 7
  %v3301 = vsub.s32 7, %v3300
  %v3302 = vrot.slane %v2245, %v3301
  %v3303 = vlaneseq
  %v3304 = vshrl.u32 %v3303, 7
  %v3305 = vsub.s32 0, %v3304
  %v3306 = vrot.slane %v2246, %v3305
  %v3307 = vlaneseq
  %v3308 = vshrl.u32 %v3307, 7
  %v3309 = vsub.s32 1, %v3308
  %v3310 = vrot.slane %v2246, %v3309
  %v3311 = vlaneseq
  %v3312 = vshrl.u32 %v3311, 7
  %v3313 = vsub.s32 2, %v3312
  %v3314 = vrot.slane %v2246, %v3313
  %v3315 = vlaneseq
  %v3316 = vshrl.u32 %v3315, 7
  %v3317 = vsub.s32 3, %v3316
  %v3318 = vrot.slane %v2246, %v3317
  %v3319 = vlaneseq
  %v3320 = vshrl.u32 %v3319, 7
  %v3321 = vsub.s32 4, %v3320
  %v3322 = vrot.slane %v2246, %v3321
  %v3323 = vlaneseq
  %v3324 = vshrl.u32 %v3323, 7
  %v3325 = vsub.s32 5, %v3324
  %v3326 = vrot.slane %v2246, %v3325
  %v3327 = vlaneseq
  %v3328 = vshrl.u32 %v3327, 7
  %v3329 = vsub.s32 6, %v3328
  %v3330 = vrot.slane %v2246, %v3329
  %v3331 = vlaneseq
  %v3332 = vshrl.u32 %v3331, 7
  %v3333 = vsub.s32 7, %v3332
  %v3334 = vrot.slane %v2246, %v3333
  %v3335 = vlaneseq
  %v3336 = vshrl.u32 %v3335, 7
  %v3337 = vsub.s32 0, %v3336
  %v3338 = vrot.slane %v2247, %v3337
  %v3339 = vlaneseq
  %v3340 = vshrl.u32 %v3339, 7
  %v3341 = vsub.s32 1, %v3340
  %v3342 = vrot.slane %v2247, %v3341
  %v3343 = vlaneseq
  %v3344 = vshrl.u32 %v3343, 7
  %v3345 = vsub.s32 2, %v3344
  %v3346 = vrot.slane %v2247, %v3345
  %v3347 = vlaneseq
  %v3348 = vshrl.u32 %v3347, 7
  %v3349 = vsub.s32 3, %v3348
  %v3350 = vrot.slane %v2247, %v3349
  %v3351 = vlaneseq
  %v3352 = vshrl.u32 %v3351, 7
  %v3353 = vsub.s32 4, %v3352
  %v3354 = vrot.slane %v2247, %v3353
  %v3355 = vlaneseq
  %v3356 = vshrl.u32 %v3355, 7
  %v3357 = vsub.s32 5, %v3356
  %v3358 = vrot.slane %v2247, %v3357
  %v3359 = vlaneseq
  %v3360 = vshrl.u32 %v3359, 7
  %v3361 = vsub.s32 6, %v3360
  %v3362 = vrot.slane %v2247, %v3361
  %v3363 = vlaneseq
  %v3364 = vshrl.u32 %v3363, 7
  %v3365 = vsub.s32 7, %v3364
  %v3366 = vrot.slane %v2247, %v3365
  %v3367 = vlaneseq
  %v3368 = vshrl.u32 %v3367, 7
  %v3369 = vsub.s32 0, %v3368
  %v3370 = vrot.slane %v2248, %v3369
  %v3371 = vlaneseq
  %v3372 = vshrl.u32 %v3371, 7
  %v3373 = vsub.s32 1, %v3372
  %v3374 = vrot.slane %v2248, %v3373
  %v3375 = vlaneseq
  %v3376 = vshrl.u32 %v3375, 7
  %v3377 = vsub.s32 2, %v3376
  %v3378 = vrot.slane %v2248, %v3377
  %v3379 = vlaneseq
  %v3380 = vshrl.u32 %v3379, 7
  %v3381 = vsub.s32 3, %v3380
  %v3382 = vrot.slane %v2248, %v3381
  %v3383 = vlaneseq
  %v3384 = vshrl.u32 %v3383, 7
  %v3385 = vsub.s32 4, %v3384
  %v3386 = vrot.slane %v2248, %v3385
  %v3387 = vlaneseq
  %v3388 = vshrl.u32 %v3387, 7
  %v3389 = vsub.s32 5, %v3388
  %v3390 = vrot.slane %v2248, %v3389
  %v3391 = vlaneseq
  %v3392 = vshrl.u32 %v3391, 7
  %v3393 = vsub.s32 6, %v3392
  %v3394 = vrot.slane %v2248, %v3393
  %v3395 = vlaneseq
  %v3396 = vshrl.u32 %v3395, 7
  %v3397 = vsub.s32 7, %v3396
  %v3398 = vrot.slane %v2248, %v3397
  %v3399 = vlaneseq
  %v3400 = vshrl.u32 %v3399, 7
  %v3401 = vsub.s32 0, %v3400
  %v3402 = vrot.slane %v2249, %v3401
  %v3403 = vlaneseq
  %v3404 = vshrl.u32 %v3403, 7
  %v3405 = vsub.s32 1, %v3404
  %v3406 = vrot.slane %v2249, %v3405
  %v3407 = vlaneseq
  %v3408 = vshrl.u32 %v3407, 7
  %v3409 = vsub.s32 2, %v3408
  %v3410 = vrot.slane %v2249, %v3409
  %v3411 = vlaneseq
  %v3412 = vshrl.u32 %v3411, 7
  %v3413 = vsub.s32 3, %v3412
  %v3414 = vrot.slane %v2249, %v3413
  %v3415 = vlaneseq
  %v3416 = vshrl.u32 %v3415, 7
  %v3417 = vsub.s32 4, %v3416
  %v3418 = vrot.slane %v2249, %v3417
  %v3419 = vlaneseq
  %v3420 = vshrl.u32 %v3419, 7
  %v3421 = vsub.s32 5, %v3420
  %v3422 = vrot.slane %v2249, %v3421
  %v3423 = vlaneseq
  %v3424 = vshrl.u32 %v3423, 7
  %v3425 = vsub.s32 6, %v3424
  %v3426 = vrot.slane %v2249, %v3425
  %v3427 = vlaneseq
  %v3428 = vshrl.u32 %v3427, 7
  %v3429 = vsub.s32 7, %v3428
  %v3430 = vrot.slane %v2249, %v3429
  %v3431 = vlaneseq
  %v3432 = vshrl.u32 %v3431, 7
  %v3433 = vsub.s32 0, %v3432
  %v3434 = vrot.slane %v2250, %v3433
  %v3435 = vlaneseq
  %v3436 = vshrl.u32 %v3435, 7
  %v3437 = vsub.s32 1, %v3436
  %v3438 = vrot.slane %v2250, %v3437
  %v3439 = vlaneseq
  %v3440 = vshrl.u32 %v3439, 7
  %v3441 = vsub.s32 2, %v3440
  %v3442 = vrot.slane %v2250, %v3441
  %v3443 = vlaneseq
  %v3444 = vshrl.u32 %v3443, 7
  %v3445 = vsub.s32 3, %v3444
  %v3446 = vrot.slane %v2250, %v3445
  %v3447 = vlaneseq
  %v3448 = vshrl.u32 %v3447, 7
  %v3449 = vsub.s32 4, %v3448
  %v3450 = vrot.slane %v2250, %v3449
  %v3451 = vlaneseq
  %v3452 = vshrl.u32 %v3451, 7
  %v3453 = vsub.s32 5, %v3452
  %v3454 = vrot.slane %v2250, %v3453
  %v3455 = vlaneseq
  %v3456 = vshrl.u32 %v3455, 7
  %v3457 = vsub.s32 6, %v3456
  %v3458 = vrot.slane %v2250, %v3457
  %v3459 = vlaneseq
  %v3460 = vshrl.u32 %v3459, 7
  %v3461 = vsub.s32 7, %v3460
  %v3462 = vrot.slane %v2250, %v3461
  %v3463 = vlaneseq
  %v3464 = vshrl.u32 %v3463, 7
  %v3465 = vsub.s32 0, %v3464
  %v3466 = vrot.slane %v2251, %v3465
  %v3467 = vlaneseq
  %v3468 = vshrl.u32 %v3467, 7
  %v3469 = vsub.s32 1, %v3468
  %v3470 = vrot.slane %v2251, %v3469
  %v3471 = vlaneseq
  %v3472 = vshrl.u32 %v3471, 7
  %v3473 = vsub.s32 2, %v3472
  %v3474 = vrot.slane %v2251, %v3473
  %v3475 = vlaneseq
  %v3476 = vshrl.u32 %v3475, 7
  %v3477 = vsub.s32 3, %v3476
  %v3478 = vrot.slane %v2251, %v3477
  %v3479 = vlaneseq
  %v3480 = vshrl.u32 %v3479, 7
  %v3481 = vsub.s32 4, %v3480
  %v3482 = vrot.slane %v2251, %v3481
  %v3483 = vlaneseq
  %v3484 = vshrl.u32 %v3483, 7
  %v3485 = vsub.s32 5, %v3484
  %v3486 = vrot.slane %v2251, %v3485
  %v3487 = vlaneseq
  %v3488 = vshrl.u32 %v3487, 7
  %v3489 = vsub.s32 6, %v3488
  %v3490 = vrot.slane %v2251, %v3489
  %v3491 = vlaneseq
  %v3492 = vshrl.u32 %v3491, 7
  %v3493 = vsub.s32 7, %v3492
  %v3494 = vrot.slane %v2251, %v3493
  %v3495 = vlaneseq
  %v3496 = vshrl.u32 %v3495, 7
  %v3497 = vsub.s32 0, %v3496
  %v3498 = vrot.slane %v2252, %v3497
  %v3499 = vlaneseq
  %v3500 = vshrl.u32 %v3499, 7
  %v3501 = vsub.s32 1, %v3500
  %v3502 = vrot.slane %v2252, %v3501
  %v3503 = vlaneseq
  %v3504 = vshrl.u32 %v3503, 7
  %v3505 = vsub.s32 2, %v3504
  %v3506 = vrot.slane %v2252, %v3505
  %v3507 = vlaneseq
  %v3508 = vshrl.u32 %v3507, 7
  %v3509 = vsub.s32 3, %v3508
  %v3510 = vrot.slane %v2252, %v3509
  %v3511 = vlaneseq
  %v3512 = vshrl.u32 %v3511, 7
  %v3513 = vsub.s32 4, %v3512
  %v3514 = vrot.slane %v2252, %v3513
  %v3515 = vlaneseq
  %v3516 = vshrl.u32 %v3515, 7
  %v3517 = vsub.s32 5, %v3516
  %v3518 = vrot.slane %v2252, %v3517
  %v3519 = vlaneseq
  %v3520 = vshrl.u32 %v3519, 7
  %v3521 = vsub.s32 6, %v3520
  %v3522 = vrot.slane %v2252, %v3521
  %v3523 = vlaneseq
  %v3524 = vshrl.u32 %v3523, 7
  %v3525 = vsub.s32 7, %v3524
  %v3526 = vrot.slane %v2252, %v3525
  %v3527 = vlaneseq
  %v3528 = vshrl.u32 %v3527, 7
  %v3529 = vsub.s32 0, %v3528
  %v3530 = vrot.slane %v2253, %v3529
  %v3531 = vlaneseq
  %v3532 = vshrl.u32 %v3531, 7
  %v3533 = vsub.s32 1, %v3532
  %v3534 = vrot.slane %v2253, %v3533
  %v3535 = vlaneseq
  %v3536 = vshrl.u32 %v3535, 7
  %v3537 = vsub.s32 2, %v3536
  %v3538 = vrot.slane %v2253, %v3537
  %v3539 = vlaneseq
  %v3540 = vshrl.u32 %v3539, 7
  %v3541 = vsub.s32 3, %v3540
  %v3542 = vrot.slane %v2253, %v3541
  %v3543 = vlaneseq
  %v3544 = vshrl.u32 %v3543, 7
  %v3545 = vsub.s32 4, %v3544
  %v3546 = vrot.slane %v2253, %v3545
  %v3547 = vlaneseq
  %v3548 = vshrl.u32 %v3547, 7
  %v3549 = vsub.s32 5, %v3548
  %v3550 = vrot.slane %v2253, %v3549
  %v3551 = vlaneseq
  %v3552 = vshrl.u32 %v3551, 7
  %v3553 = vsub.s32 6, %v3552
  %v3554 = vrot.slane %v2253, %v3553
  %v3555 = vlaneseq
  %v3556 = vshrl.u32 %v3555, 7
  %v3557 = vsub.s32 7, %v3556
  %v3558 = vrot.slane %v2253, %v3557
  %v3559 = vlaneseq
  %v3560 = vshrl.u32 %v3559, 7
  %v3561 = vsub.s32 0, %v3560
  %v3562 = vrot.slane %v2254, %v3561
  %v3563 = vlaneseq
  %v3564 = vshrl.u32 %v3563, 7
  %v3565 = vsub.s32 1, %v3564
  %v3566 = vrot.slane %v2254, %v3565
  %v3567 = vlaneseq
  %v3568 = vshrl.u32 %v3567, 7
  %v3569 = vsub.s32 2, %v3568
  %v3570 = vrot.slane %v2254, %v3569
  %v3571 = vlaneseq
  %v3572 = vshrl.u32 %v3571, 7
  %v3573 = vsub.s32 3, %v3572
  %v3574 = vrot.slane %v2254, %v3573
  %v3575 = vlaneseq
  %v3576 = vshrl.u32 %v3575, 7
  %v3577 = vsub.s32 4, %v3576
  %v3578 = vrot.slane %v2254, %v3577
  %v3579 = vlaneseq
  %v3580 = vshrl.u32 %v3579, 7
  %v3581 = vsub.s32 5, %v3580
  %v3582 = vrot.slane %v2254, %v3581
  %v3583 = vlaneseq
  %v3584 = vshrl.u32 %v3583, 7
  %v3585 = vsub.s32 6, %v3584
  %v3586 = vrot.slane %v2254, %v3585
  %v3587 = vlaneseq
  %v3588 = vshrl.u32 %v3587, 7
  %v3589 = vsub.s32 7, %v3588
  %v3590 = vrot.slane %v2254, %v3589
  %v3591 = vlaneseq
  %v3592 = vshrl.u32 %v3591, 7
  %v3593 = vsub.s32 0, %v3592
  %v3594 = vrot.slane %v2255, %v3593
  %v3595 = vlaneseq
  %v3596 = vshrl.u32 %v3595, 7
  %v3597 = vsub.s32 1, %v3596
  %v3598 = vrot.slane %v2255, %v3597
  %v3599 = vlaneseq
  %v3600 = vshrl.u32 %v3599, 7
  %v3601 = vsub.s32 2, %v3600
  %v3602 = vrot.slane %v2255, %v3601
  %v3603 = vlaneseq
  %v3604 = vshrl.u32 %v3603, 7
  %v3605 = vsub.s32 3, %v3604
  %v3606 = vrot.slane %v2255, %v3605
  %v3607 = vlaneseq
  %v3608 = vshrl.u32 %v3607, 7
  %v3609 = vsub.s32 4, %v3608
  %v3610 = vrot.slane %v2255, %v3609
  %v3611 = vlaneseq
  %v3612 = vshrl.u32 %v3611, 7
  %v3613 = vsub.s32 5, %v3612
  %v3614 = vrot.slane %v2255, %v3613
  %v3615 = vlaneseq
  %v3616 = vshrl.u32 %v3615, 7
  %v3617 = vsub.s32 6, %v3616
  %v3618 = vrot.slane %v2255, %v3617
  %v3619 = vlaneseq
  %v3620 = vshrl.u32 %v3619, 7
  %v3621 = vsub.s32 7, %v3620
  %v3622 = vrot.slane %v2255, %v3621
  %v3623 = vlaneseq
  %v3624 = vshrl.u32 %v3623, 7
  %v3625 = vsub.s32 0, %v3624
  %v3626 = vrot.slane %v2256, %v3625
  %v3627 = vlaneseq
  %v3628 = vshrl.u32 %v3627, 7
  %v3629 = vsub.s32 1, %v3628
  %v3630 = vrot.slane %v2256, %v3629
  %v3631 = vlaneseq
  %v3632 = vshrl.u32 %v3631, 7
  %v3633 = vsub.s32 2, %v3632
  %v3634 = vrot.slane %v2256, %v3633
  %v3635 = vlaneseq
  %v3636 = vshrl.u32 %v3635, 7
  %v3637 = vsub.s32 3, %v3636
  %v3638 = vrot.slane %v2256, %v3637
  %v3639 = vlaneseq
  %v3640 = vshrl.u32 %v3639, 7
  %v3641 = vsub.s32 4, %v3640
  %v3642 = vrot.slane %v2256, %v3641
  %v3643 = vlaneseq
  %v3644 = vshrl.u32 %v3643, 7
  %v3645 = vsub.s32 5, %v3644
  %v3646 = vrot.slane %v2256, %v3645
  %v3647 = vlaneseq
  %v3648 = vshrl.u32 %v3647, 7
  %v3649 = vsub.s32 6, %v3648
  %v3650 = vrot.slane %v2256, %v3649
  %v3651 = vlaneseq
  %v3652 = vshrl.u32 %v3651, 7
  %v3653 = vsub.s32 7, %v3652
  %v3654 = vrot.slane %v2256, %v3653
  %v3655 = vlaneseq
  %v3656 = vshrl.u32 %v3655, 7
  %v3657 = vsub.s32 0, %v3656
  %v3658 = vrot.slane %v2257, %v3657
  %v3659 = vlaneseq
  %v3660 = vshrl.u32 %v3659, 7
  %v3661 = vsub.s32 1, %v3660
  %v3662 = vrot.slane %v2257, %v3661
  %v3663 = vlaneseq
  %v3664 = vshrl.u32 %v3663, 7
  %v3665 = vsub.s32 2, %v3664
  %v3666 = vrot.slane %v2257, %v3665
  %v3667 = vlaneseq
  %v3668 = vshrl.u32 %v3667, 7
  %v3669 = vsub.s32 3, %v3668
  %v3670 = vrot.slane %v2257, %v3669
  %v3671 = vlaneseq
  %v3672 = vshrl.u32 %v3671, 7
  %v3673 = vsub.s32 4, %v3672
  %v3674 = vrot.slane %v2257, %v3673
  %v3675 = vlaneseq
  %v3676 = vshrl.u32 %v3675, 7
  %v3677 = vsub.s32 5, %v3676
  %v3678 = vrot.slane %v2257, %v3677
  %v3679 = vlaneseq
  %v3680 = vshrl.u32 %v3679, 7
  %v3681 = vsub.s32 6, %v3680
  %v3682 = vrot.slane %v2257, %v3681
  %v3683 = vlaneseq
  %v3684 = vshrl.u32 %v3683, 7
  %v3685 = vsub.s32 7, %v3684
  %v3686 = vrot.slane %v2257, %v3685
  %v3687 = vlaneseq
  %v3688 = vshrl.u32 %v3687, 7
  %v3689 = vsub.s32 0, %v3688
  %v3690 = vrot.slane %v2258, %v3689
  %v3691 = vlaneseq
  %v3692 = vshrl.u32 %v3691, 7
  %v3693 = vsub.s32 1, %v3692
  %v3694 = vrot.slane %v2258, %v3693
  %v3695 = vlaneseq
  %v3696 = vshrl.u32 %v3695, 7
  %v3697 = vsub.s32 2, %v3696
  %v3698 = vrot.slane %v2258, %v3697
  %v3699 = vlaneseq
  %v3700 = vshrl.u32 %v3699, 7
  %v3701 = vsub.s32 3, %v3700
  %v3702 = vrot.slane %v2258, %v3701
  %v3703 = vlaneseq
  %v3704 = vshrl.u32 %v3703, 7
  %v3705 = vsub.s32 4, %v3704
  %v3706 = vrot.slane %v2258, %v3705
  %v3707 = vlaneseq
  %v3708 = vshrl.u32 %v3707, 7
  %v3709 = vsub.s32 5, %v3708
  %v3710 = vrot.slane %v2258, %v3709
  %v3711 = vlaneseq
  %v3712 = vshrl.u32 %v3711, 7
  %v3713 = vsub.s32 6, %v3712
  %v3714 = vrot.slane %v2258, %v3713
  %v3715 = vlaneseq
  %v3716 = vshrl.u32 %v3715, 7
  %v3717 = vsub.s32 7, %v3716
  %v3718 = vrot.slane %v2258, %v3717
  %v3719 = vlaneseq
  %v3720 = vshrl.u32 %v3719, 7
  %v3721 = vsub.s32 0, %v3720
  %v3722 = vrot.slane %v2259, %v3721
  %v3723 = vlaneseq
  %v3724 = vshrl.u32 %v3723, 7
  %v3725 = vsub.s32 1, %v3724
  %v3726 = vrot.slane %v2259, %v3725
  %v3727 = vlaneseq
  %v3728 = vshrl.u32 %v3727, 7
  %v3729 = vsub.s32 2, %v3728
  %v3730 = vrot.slane %v2259, %v3729
  %v3731 = vlaneseq
  %v3732 = vshrl.u32 %v3731, 7
  %v3733 = vsub.s32 3, %v3732
  %v3734 = vrot.slane %v2259, %v3733
  %v3735 = vlaneseq
  %v3736 = vshrl.u32 %v3735, 7
  %v3737 = vsub.s32 4, %v3736
  %v3738 = vrot.slane %v2259, %v3737
  %v3739 = vlaneseq
  %v3740 = vshrl.u32 %v3739, 7
  %v3741 = vsub.s32 5, %v3740
  %v3742 = vrot.slane %v2259, %v3741
  %v3743 = vlaneseq
  %v3744 = vshrl.u32 %v3743, 7
  %v3745 = vsub.s32 6, %v3744
  %v3746 = vrot.slane %v2259, %v3745
  %v3747 = vlaneseq
  %v3748 = vshrl.u32 %v3747, 7
  %v3749 = vsub.s32 7, %v3748
  %v3750 = vrot.slane %v2259, %v3749
  %v3751 = vlaneseq
  %v3752 = vshrl.u32 %v3751, 7
  %v3753 = vsub.s32 0, %v3752
  %v3754 = vrot.slane %v2260, %v3753
  %v3755 = vlaneseq
  %v3756 = vshrl.u32 %v3755, 7
  %v3757 = vsub.s32 1, %v3756
  %v3758 = vrot.slane %v2260, %v3757
  %v3759 = vlaneseq
  %v3760 = vshrl.u32 %v3759, 7
  %v3761 = vsub.s32 2, %v3760
  %v3762 = vrot.slane %v2260, %v3761
  %v3763 = vlaneseq
  %v3764 = vshrl.u32 %v3763, 7
  %v3765 = vsub.s32 3, %v3764
  %v3766 = vrot.slane %v2260, %v3765
  %v3767 = vlaneseq
  %v3768 = vshrl.u32 %v3767, 7
  %v3769 = vsub.s32 4, %v3768
  %v3770 = vrot.slane %v2260, %v3769
  %v3771 = vlaneseq
  %v3772 = vshrl.u32 %v3771, 7
  %v3773 = vsub.s32 5, %v3772
  %v3774 = vrot.slane %v2260, %v3773
  %v3775 = vlaneseq
  %v3776 = vshrl.u32 %v3775, 7
  %v3777 = vsub.s32 6, %v3776
  %v3778 = vrot.slane %v2260, %v3777
  %v3779 = vlaneseq
  %v3780 = vshrl.u32 %v3779, 7
  %v3781 = vsub.s32 7, %v3780
  %v3782 = vrot.slane %v2260, %v3781
  %v3783 = vlaneseq
  %v3784 = vshrl.u32 %v3783, 7
  %v3785 = vsub.s32 0, %v3784
  %v3786 = vrot.slane %v2261, %v3785
  %v3787 = vlaneseq
  %v3788 = vshrl.u32 %v3787, 7
  %v3789 = vsub.s32 1, %v3788
  %v3790 = vrot.slane %v2261, %v3789
  %v3791 = vlaneseq
  %v3792 = vshrl.u32 %v3791, 7
  %v3793 = vsub.s32 2, %v3792
  %v3794 = vrot.slane %v2261, %v3793
  %v3795 = vlaneseq
  %v3796 = vshrl.u32 %v3795, 7
  %v3797 = vsub.s32 3, %v3796
  %v3798 = vrot.slane %v2261, %v3797
  %v3799 = vlaneseq
  %v3800 = vshrl.u32 %v3799, 7
  %v3801 = vsub.s32 4, %v3800
  %v3802 = vrot.slane %v2261, %v3801
  %v3803 = vlaneseq
  %v3804 = vshrl.u32 %v3803, 7
  %v3805 = vsub.s32 5, %v3804
  %v3806 = vrot.slane %v2261, %v3805
  %v3807 = vlaneseq
  %v3808 = vshrl.u32 %v3807, 7
  %v3809 = vsub.s32 6, %v3808
  %v3810 = vrot.slane %v2261, %v3809
  %v3811 = vlaneseq
  %v3812 = vshrl.u32 %v3811, 7
  %v3813 = vsub.s32 7, %v3812
  %v3814 = vrot.slane %v2261, %v3813
  %v3815 = vlaneseq
  %v3816 = vshrl.u32 %v3815, 7
  %v3817 = vsub.s32 0, %v3816
  %v3818 = vrot.slane %v2262, %v3817
  %v3819 = vlaneseq
  %v3820 = vshrl.u32 %v3819, 7
  %v3821 = vsub.s32 1, %v3820
  %v3822 = vrot.slane %v2262, %v3821
  %v3823 = vlaneseq
  %v3824 = vshrl.u32 %v3823, 7
  %v3825 = vsub.s32 2, %v3824
  %v3826 = vrot.slane %v2262, %v3825
  %v3827 = vlaneseq
  %v3828 = vshrl.u32 %v3827, 7
  %v3829 = vsub.s32 3, %v3828
  %v3830 = vrot.slane %v2262, %v3829
  %v3831 = vlaneseq
  %v3832 = vshrl.u32 %v3831, 7
  %v3833 = vsub.s32 4, %v3832
  %v3834 = vrot.slane %v2262, %v3833
  %v3835 = vlaneseq
  %v3836 = vshrl.u32 %v3835, 7
  %v3837 = vsub.s32 5, %v3836
  %v3838 = vrot.slane %v2262, %v3837
  %v3839 = vlaneseq
  %v3840 = vshrl.u32 %v3839, 7
  %v3841 = vsub.s32 6, %v3840
  %v3842 = vrot.slane %v2262, %v3841
  %v3843 = vlaneseq
  %v3844 = vshrl.u32 %v3843, 7
  %v3845 = vsub.s32 7, %v3844
  %v3846 = vrot.slane %v2262, %v3845
  %v3847 = vcombine.low %v2314, %v2318
  %v3848 = vcombine.low %v2322, %v2326
  %v3849 = vcombine.low %v2330, %v2334
  %v3850 = vcombine.low %v2338, %v2342
  %v3852 = vunpack.c.l.s4 1966171168
  %v3853 = vunpack.c.0.s8 %v3852
  %v3854 = vlaneseq
  %v3855 = vshrl.u32 %v3854, 7
  %v3856 = vsub.s32 %v3853, %v3855
  %v3857 = vrot.slane %v3847, %v3856
  %v3859 = vunpack.c.l.s4 1966171168
  %v3860 = vunpack.c.0.s8 %v3859
  %v3861 = vlaneseq
  %v3862 = vshrl.u32 %v3861, 7
  %v3863 = vsub.s32 %v3860, %v3862
  %v3864 = vrot.slane %v3848, %v3863
  %v3866 = vunpack.c.l.s4 1966171168
  %v3867 = vunpack.c.0.s8 %v3866
  %v3868 = vlaneseq
  %v3869 = vshrl.u32 %v3868, 7
  %v3870 = vsub.s32 %v3867, %v3869
  %v3871 = vrot.slane %v3849, %v3870
  %v3873 = vunpack.c.l.s4 1966171168
  %v3874 = vunpack.c.0.s8 %v3873
  %v3875 = vlaneseq
  %v3876 = vshrl.u32 %v3875, 7
  %v3877 = vsub.s32 %v3874, %v3876
  %v3878 = vrot.slane %v3850, %v3877
  %v3879 = vcombine.low %v3857, %v3864
  %v3880 = vcombine.low %v3871, %v3878
  %v3882 = vunpack.c.l.s4 1966171168
  %v3883 = vunpack.c.0.s8 %v3882
  %v3884 = vlaneseq
  %v3885 = vshrl.u32 %v3884, 7
  %v3886 = vsub.s32 %v3883, %v3885
  %v3887 = vrot.slane %v3879, %v3886
  %v3889 = vunpack.c.l.s4 1966171168
  %v3890 = vunpack.c.0.s8 %v3889
  %v3891 = vlaneseq
  %v3892 = vshrl.u32 %v3891, 7
  %v3893 = vsub.s32 %v3890, %v3892
  %v3894 = vrot.slane %v3880, %v3893
  %v3895 = vcombine.low %v3887, %v3894
  %v3896 = vcombine.low %v2346, %v2350
  %v3897 = vcombine.low %v2354, %v2358
  %v3898 = vcombine.low %v2362, %v2366
  %v3899 = vcombine.low %v2370, %v2374
  %v3901 = vunpack.c.l.s4 1966171168
  %v3902 = vunpack.c.0.s8 %v3901
  %v3903 = vlaneseq
  %v3904 = vshrl.u32 %v3903, 7
  %v3905 = vsub.s32 %v3902, %v3904
  %v3906 = vrot.slane %v3896, %v3905
  %v3908 = vunpack.c.l.s4 1966171168
  %v3909 = vunpack.c.0.s8 %v3908
  %v3910 = vlaneseq
  %v3911 = vshrl.u32 %v3910, 7
  %v3912 = vsub.s32 %v3909, %v3911
  %v3913 = vrot.slane %v3897, %v3912
  %v3915 = vunpack.c.l.s4 1966171168
  %v3916 = vunpack.c.0.s8 %v3915
  %v3917 = vlaneseq
  %v3918 = vshrl.u32 %v3917, 7
  %v3919 = vsub.s32 %v3916, %v3918
  %v3920 = vrot.slane %v3898, %v3919
  %v3922 = vunpack.c.l.s4 1966171168
  %v3923 = vunpack.c.0.s8 %v3922
  %v3924 = vlaneseq
  %v3925 = vshrl.u32 %v3924, 7
  %v3926 = vsub.s32 %v3923, %v3925
  %v3927 = vrot.slane %v3899, %v3926
  %v3928 = vcombine.low %v3906, %v3913
  %v3929 = vcombine.low %v3920, %v3927
  %v3931 = vunpack.c.l.s4 1966171168
  %v3932 = vunpack.c.0.s8 %v3931
  %v3933 = vlaneseq
  %v3934 = vshrl.u32 %v3933, 7
  %v3935 = vsub.s32 %v3932, %v3934
  %v3936 = vrot.slane %v3928, %v3935
  %v3938 = vunpack.c.l.s4 1966171168
  %v3939 = vunpack.c.0.s8 %v3938
  %v3940 = vlaneseq
  %v3941 = vshrl.u32 %v3940, 7
  %v3942 = vsub.s32 %v3939, %v3941
  %v3943 = vrot.slane %v3929, %v3942
  %v3944 = vcombine.low %v3936, %v3943
  %v3945 = vcombine.low %v2378, %v2382
  %v3946 = vcombine.low %v2386, %v2390
  %v3947 = vcombine.low %v2394, %v2398
  %v3948 = vcombine.low %v2402, %v2406
  %v3950 = vunpack.c.l.s4 1966171168
  %v3951 = vunpack.c.0.s8 %v3950
  %v3952 = vlaneseq
  %v3953 = vshrl.u32 %v3952, 7
  %v3954 = vsub.s32 %v3951, %v3953
  %v3955 = vrot.slane %v3945, %v3954
  %v3957 = vunpack.c.l.s4 1966171168
  %v3958 = vunpack.c.0.s8 %v3957
  %v3959 = vlaneseq
  %v3960 = vshrl.u32 %v3959, 7
  %v3961 = vsub.s32 %v3958, %v3960
  %v3962 = vrot.slane %v3946, %v3961
  %v3964 = vunpack.c.l.s4 1966171168
  %v3965 = vunpack.c.0.s8 %v3964
  %v3966 = vlaneseq
  %v3967 = vshrl.u32 %v3966, 7
  %v3968 = vsub.s32 %v3965, %v3967
  %v3969 = vrot.slane %v3947, %v3968
  %v3971 = vunpack.c.l.s4 1966171168
  %v3972 = vunpack.c.0.s8 %v3971
  %v3973 = vlaneseq
  %v3974 = vshrl.u32 %v3973, 7
  %v3975 = vsub.s32 %v3972, %v3974
  %v3976 = vrot.slane %v3948, %v3975
  %v3977 = vcombine.low %v3955, %v3962
  %v3978 = vcombine.low %v3969, %v3976
  %v3980 = vunpack.c.l.s4 1966171168
  %v3981 = vunpack.c.0.s8 %v3980
  %v3982 = vlaneseq
  %v3983 = vshrl.u32 %v3982, 7
  %v3984 = vsub.s32 %v3981, %v3983
  %v3985 = vrot.slane %v3977, %v3984
  %v3987 = vunpack.c.l.s4 1966171168
  %v3988 = vunpack.c.0.s8 %v3987
  %v3989 = vlaneseq
  %v3990 = vshrl.u32 %v3989, 7
  %v3991 = vsub.s32 %v3988, %v3990
  %v3992 = vrot.slane %v3978, %v3991
  %v3993 = vcombine.low %v3985, %v3992
  %v3994 = vcombine.low %v2410, %v2414
  %v3995 = vcombine.low %v2418, %v2422
  %v3996 = vcombine.low %v2426, %v2430
  %v3997 = vcombine.low %v2434, %v2438
  %v3999 = vunpack.c.l.s4 1966171168
  %v4000 = vunpack.c.0.s8 %v3999
  %v4001 = vlaneseq
  %v4002 = vshrl.u32 %v4001, 7
  %v4003 = vsub.s32 %v4000, %v4002
  %v4004 = vrot.slane %v3994, %v4003
  %v4006 = vunpack.c.l.s4 1966171168
  %v4007 = vunpack.c.0.s8 %v4006
  %v4008 = vlaneseq
  %v4009 = vshrl.u32 %v4008, 7
  %v4010 = vsub.s32 %v4007, %v4009
  %v4011 = vrot.slane %v3995, %v4010
  %v4013 = vunpack.c.l.s4 1966171168
  %v4014 = vunpack.c.0.s8 %v4013
  %v4015 = vlaneseq
  %v4016 = vshrl.u32 %v4015, 7
  %v4017 = vsub.s32 %v4014, %v4016
  %v4018 = vrot.slane %v3996, %v4017
  %v4020 = vunpack.c.l.s4 1966171168
  %v4021 = vunpack.c.0.s8 %v4020
  %v4022 = vlaneseq
  %v4023 = vshrl.u32 %v4022, 7
  %v4024 = vsub.s32 %v4021, %v4023
  %v4025 = vrot.slane %v3997, %v4024
  %v4026 = vcombine.low %v4004, %v4011
  %v4027 = vcombine.low %v4018, %v4025
  %v4029 = vunpack.c.l.s4 1966171168
  %v4030 = vunpack.c.0.s8 %v4029
  %v4031 = vlaneseq
  %v4032 = vshrl.u32 %v4031, 7
  %v4033 = vsub.s32 %v4030, %v4032
  %v4034 = vrot.slane %v4026, %v4033
  %v4036 = vunpack.c.l.s4 1966171168
  %v4037 = vunpack.c.0.s8 %v4036
  %v4038 = vlaneseq
  %v4039 = vshrl.u32 %v4038, 7
  %v4040 = vsub.s32 %v4037, %v4039
  %v4041 = vrot.slane %v4027, %v4040
  %v4042 = vcombine.low %v4034, %v4041
  %v4043 = vcombine.low %v2442, %v2446
  %v4044 = vcombine.low %v2450, %v2454
  %v4045 = vcombine.low %v2458, %v2462
  %v4046 = vcombine.low %v2466, %v2470
  %v4048 = vunpack.c.l.s4 1966171168
  %v4049 = vunpack.c.0.s8 %v4048
  %v4050 = vlaneseq
  %v4051 = vshrl.u32 %v4050, 7
  %v4052 = vsub.s32 %v4049, %v4051
  %v4053 = vrot.slane %v4043, %v4052
  %v4055 = vunpack.c.l.s4 1966171168
  %v4056 = vunpack.c.0.s8 %v4055
  %v4057 = vlaneseq
  %v4058 = vshrl.u32 %v4057, 7
  %v4059 = vsub.s32 %v4056, %v4058
  %v4060 = vrot.slane %v4044, %v4059
  %v4062 = vunpack.c.l.s4 1966171168
  %v4063 = vunpack.c.0.s8 %v4062
  %v4064 = vlaneseq
  %v4065 = vshrl.u32 %v4064, 7
  %v4066 = vsub.s32 %v4063, %v4065
  %v4067 = vrot.slane %v4045, %v4066
  %v4069 = vunpack.c.l.s4 1966171168
  %v4070 = vunpack.c.0.s8 %v4069
  %v4071 = vlaneseq
  %v4072 = vshrl.u32 %v4071, 7
  %v4073 = vsub.s32 %v4070, %v4072
  %v4074 = vrot.slane %v4046, %v4073
  %v4075 = vcombine.low %v4053, %v4060
  %v4076 = vcombine.low %v4067, %v4074
  %v4078 = vunpack.c.l.s4 1966171168
  %v4079 = vunpack.c.0.s8 %v4078
  %v4080 = vlaneseq
  %v4081 = vshrl.u32 %v4080, 7
  %v4082 = vsub.s32 %v4079, %v4081
  %v4083 = vrot.slane %v4075, %v4082
  %v4085 = vunpack.c.l.s4 1966171168
  %v4086 = vunpack.c.0.s8 %v4085
  %v4087 = vlaneseq
  %v4088 = vshrl.u32 %v4087, 7
  %v4089 = vsub.s32 %v4086, %v4088
  %v4090 = vrot.slane %v4076, %v4089
  %v4091 = vcombine.low %v4083, %v4090
  %v4092 = vcombine.low %v2474, %v2478
  %v4093 = vcombine.low %v2482, %v2486
  %v4094 = vcombine.low %v2490, %v2494
  %v4095 = vcombine.low %v2498, %v2502
  %v4097 = vunpack.c.l.s4 1966171168
  %v4098 = vunpack.c.0.s8 %v4097
  %v4099 = vlaneseq
  %v4100 = vshrl.u32 %v4099, 7
  %v4101 = vsub.s32 %v4098, %v4100
  %v4102 = vrot.slane %v4092, %v4101
  %v4104 = vunpack.c.l.s4 1966171168
  %v4105 = vunpack.c.0.s8 %v4104
  %v4106 = vlaneseq
  %v4107 = vshrl.u32 %v4106, 7
  %v4108 = vsub.s32 %v4105, %v4107
  %v4109 = vrot.slane %v4093, %v4108
  %v4111 = vunpack.c.l.s4 1966171168
  %v4112 = vunpack.c.0.s8 %v4111
  %v4113 = vlaneseq
  %v4114 = vshrl.u32 %v4113, 7
  %v4115 = vsub.s32 %v4112, %v4114
  %v4116 = vrot.slane %v4094, %v4115
  %v4118 = vunpack.c.l.s4 1966171168
  %v4119 = vunpack.c.0.s8 %v4118
  %v4120 = vlaneseq
  %v4121 = vshrl.u32 %v4120, 7
  %v4122 = vsub.s32 %v4119, %v4121
  %v4123 = vrot.slane %v4095, %v4122
  %v4124 = vcombine.low %v4102, %v4109
  %v4125 = vcombine.low %v4116, %v4123
  %v4127 = vunpack.c.l.s4 1966171168
  %v4128 = vunpack.c.0.s8 %v4127
  %v4129 = vlaneseq
  %v4130 = vshrl.u32 %v4129, 7
  %v4131 = vsub.s32 %v4128, %v4130
  %v4132 = vrot.slane %v4124, %v4131
  %v4134 = vunpack.c.l.s4 1966171168
  %v4135 = vunpack.c.0.s8 %v4134
  %v4136 = vlaneseq
  %v4137 = vshrl.u32 %v4136, 7
  %v4138 = vsub.s32 %v4135, %v4137
  %v4139 = vrot.slane %v4125, %v4138
  %v4140 = vcombine.low %v4132, %v4139
  %v4141 = vcombine.low %v2506, %v2510
  %v4142 = vcombine.low %v2514, %v2518
  %v4143 = vcombine.low %v2522, %v2526
  %v4144 = vcombine.low %v2530, %v2534
  %v4146 = vunpack.c.l.s4 1966171168
  %v4147 = vunpack.c.0.s8 %v4146
  %v4148 = vlaneseq
  %v4149 = vshrl.u32 %v4148, 7
  %v4150 = vsub.s32 %v4147, %v4149
  %v4151 = vrot.slane %v4141, %v4150
  %v4153 = vunpack.c.l.s4 1966171168
  %v4154 = vunpack.c.0.s8 %v4153
  %v4155 = vlaneseq
  %v4156 = vshrl.u32 %v4155, 7
  %v4157 = vsub.s32 %v4154, %v4156
  %v4158 = vrot.slane %v4142, %v4157
  %v4160 = vunpack.c.l.s4 1966171168
  %v4161 = vunpack.c.0.s8 %v4160
  %v4162 = vlaneseq
  %v4163 = vshrl.u32 %v4162, 7
  %v4164 = vsub.s32 %v4161, %v4163
  %v4165 = vrot.slane %v4143, %v4164
  %v4167 = vunpack.c.l.s4 1966171168
  %v4168 = vunpack.c.0.s8 %v4167
  %v4169 = vlaneseq
  %v4170 = vshrl.u32 %v4169, 7
  %v4171 = vsub.s32 %v4168, %v4170
  %v4172 = vrot.slane %v4144, %v4171
  %v4173 = vcombine.low %v4151, %v4158
  %v4174 = vcombine.low %v4165, %v4172
  %v4176 = vunpack.c.l.s4 1966171168
  %v4177 = vunpack.c.0.s8 %v4176
  %v4178 = vlaneseq
  %v4179 = vshrl.u32 %v4178, 7
  %v4180 = vsub.s32 %v4177, %v4179
  %v4181 = vrot.slane %v4173, %v4180
  %v4183 = vunpack.c.l.s4 1966171168
  %v4184 = vunpack.c.0.s8 %v4183
  %v4185 = vlaneseq
  %v4186 = vshrl.u32 %v4185, 7
  %v4187 = vsub.s32 %v4184, %v4186
  %v4188 = vrot.slane %v4174, %v4187
  %v4189 = vcombine.low %v4181, %v4188
  %v4190 = vcombine.low %v2538, %v2542
  %v4191 = vcombine.low %v2546, %v2550
  %v4192 = vcombine.low %v2554, %v2558
  %v4193 = vcombine.low %v2562, %v2566
  %v4195 = vunpack.c.l.s4 1966171168
  %v4196 = vunpack.c.0.s8 %v4195
  %v4197 = vlaneseq
  %v4198 = vshrl.u32 %v4197, 7
  %v4199 = vsub.s32 %v4196, %v4198
  %v4200 = vrot.slane %v4190, %v4199
  %v4202 = vunpack.c.l.s4 1966171168
  %v4203 = vunpack.c.0.s8 %v4202
  %v4204 = vlaneseq
  %v4205 = vshrl.u32 %v4204, 7
  %v4206 = vsub.s32 %v4203, %v4205
  %v4207 = vrot.slane %v4191, %v4206
  %v4209 = vunpack.c.l.s4 1966171168
  %v4210 = vunpack.c.0.s8 %v4209
  %v4211 = vlaneseq
  %v4212 = vshrl.u32 %v4211, 7
  %v4213 = vsub.s32 %v4210, %v4212
  %v4214 = vrot.slane %v4192, %v4213
  %v4216 = vunpack.c.l.s4 1966171168
  %v4217 = vunpack.c.0.s8 %v4216
  %v4218 = vlaneseq
  %v4219 = vshrl.u32 %v4218, 7
  %v4220 = vsub.s32 %v4217, %v4219
  %v4221 = vrot.slane %v4193, %v4220
  %v4222 = vcombine.low %v4200, %v4207
  %v4223 = vcombine.low %v4214, %v4221
  %v4225 = vunpack.c.l.s4 1966171168
  %v4226 = vunpack.c.0.s8 %v4225
  %v4227 = vlaneseq
  %v4228 = vshrl.u32 %v4227, 7
  %v4229 = vsub.s32 %v4226, %v4228
  %v4230 = vrot.slane %v4222, %v4229
  %v4232 = vunpack.c.l.s4 1966171168
  %v4233 = vunpack.c.0.s8 %v4232
  %v4234 = vlaneseq
  %v4235 = vshrl.u32 %v4234, 7
  %v4236 = vsub.s32 %v4233, %v4235
  %v4237 = vrot.slane %v4223, %v4236
  %v4238 = vcombine.low %v4230, %v4237
  %v4239 = vcombine.low %v2570, %v2574
  %v4240 = vcombine.low %v2578, %v2582
  %v4241 = vcombine.low %v2586, %v2590
  %v4242 = vcombine.low %v2594, %v2598
  %v4244 = vunpack.c.l.s4 1966171168
  %v4245 = vunpack.c.0.s8 %v4244
  %v4246 = vlaneseq
  %v4247 = vshrl.u32 %v4246, 7
  %v4248 = vsub.s32 %v4245, %v4247
  %v4249 = vrot.slane %v4239, %v4248
  %v4251 = vunpack.c.l.s4 1966171168
  %v4252 = vunpack.c.0.s8 %v4251
  %v4253 = vlaneseq
  %v4254 = vshrl.u32 %v4253, 7
  %v4255 = vsub.s32 %v4252, %v4254
  %v4256 = vrot.slane %v4240, %v4255
  %v4258 = vunpack.c.l.s4 1966171168
  %v4259 = vunpack.c.0.s8 %v4258
  %v4260 = vlaneseq
  %v4261 = vshrl.u32 %v4260, 7
  %v4262 = vsub.s32 %v4259, %v4261
  %v4263 = vrot.slane %v4241, %v4262
  %v4265 = vunpack.c.l.s4 1966171168
  %v4266 = vunpack.c.0.s8 %v4265
  %v4267 = vlaneseq
  %v4268 = vshrl.u32 %v4267, 7
  %v4269 = vsub.s32 %v4266, %v4268
  %v4270 = vrot.slane %v4242, %v4269
  %v4271 = vcombine.low %v4249, %v4256
  %v4272 = vcombine.low %v4263, %v4270
  %v4274 = vunpack.c.l.s4 1966171168
  %v4275 = vunpack.c.0.s8 %v4274
  %v4276 = vlaneseq
  %v4277 = vshrl.u32 %v4276, 7
  %v4278 = vsub.s32 %v4275, %v4277
  %v4279 = vrot.slane %v4271, %v4278
  %v4281 = vunpack.c.l.s4 1966171168
  %v4282 = vunpack.c.0.s8 %v4281
  %v4283 = vlaneseq
  %v4284 = vshrl.u32 %v4283, 7
  %v4285 = vsub.s32 %v4282, %v4284
  %v4286 = vrot.slane %v4272, %v4285
  %v4287 = vcombine.low %v4279, %v4286
  %v4288 = vcombine.low %v2602, %v2606
  %v4289 = vcombine.low %v2610, %v2614
  %v4290 = vcombine.low %v2618, %v2622
  %v4291 = vcombine.low %v2626, %v2630
  %v4293 = vunpack.c.l.s4 1966171168
  %v4294 = vunpack.c.0.s8 %v4293
  %v4295 = vlaneseq
  %v4296 = vshrl.u32 %v4295, 7
  %v4297 = vsub.s32 %v4294, %v4296
  %v4298 = vrot.slane %v4288, %v4297
  %v4300 = vunpack.c.l.s4 1966171168
  %v4301 = vunpack.c.0.s8 %v4300
  %v4302 = vlaneseq
  %v4303 = vshrl.u32 %v4302, 7
  %v4304 = vsub.s32 %v4301, %v4303
  %v4305 = vrot.slane %v4289, %v4304
  %v4307 = vunpack.c.l.s4 1966171168
  %v4308 = vunpack.c.0.s8 %v4307
  %v4309 = vlaneseq
  %v4310 = vshrl.u32 %v4309, 7
  %v4311 = vsub.s32 %v4308, %v4310
  %v4312 = vrot.slane %v4290, %v4311
  %v4314 = vunpack.c.l.s4 1966171168
  %v4315 = vunpack.c.0.s8 %v4314
  %v4316 = vlaneseq
  %v4317 = vshrl.u32 %v4316, 7
  %v4318 = vsub.s32 %v4315, %v4317
  %v4319 = vrot.slane %v4291, %v4318
  %v4320 = vcombine.low %v4298, %v4305
  %v4321 = vcombine.low %v4312, %v4319
  %v4323 = vunpack.c.l.s4 1966171168
  %v4324 = vunpack.c.0.s8 %v4323
  %v4325 = vlaneseq
  %v4326 = vshrl.u32 %v4325, 7
  %v4327 = vsub.s32 %v4324, %v4326
  %v4328 = vrot.slane %v4320, %v4327
  %v4330 = vunpack.c.l.s4 1966171168
  %v4331 = vunpack.c.0.s8 %v4330
  %v4332 = vlaneseq
  %v4333 = vshrl.u32 %v4332, 7
  %v4334 = vsub.s32 %v4331, %v4333
  %v4335 = vrot.slane %v4321, %v4334
  %v4336 = vcombine.low %v4328, %v4335
  %v4337 = vcombine.low %v2634, %v2638
  %v4338 = vcombine.low %v2642, %v2646
  %v4339 = vcombine.low %v2650, %v2654
  %v4340 = vcombine.low %v2658, %v2662
  %v4342 = vunpack.c.l.s4 1966171168
  %v4343 = vunpack.c.0.s8 %v4342
  %v4344 = vlaneseq
  %v4345 = vshrl.u32 %v4344, 7
  %v4346 = vsub.s32 %v4343, %v4345
  %v4347 = vrot.slane %v4337, %v4346
  %v4349 = vunpack.c.l.s4 1966171168
  %v4350 = vunpack.c.0.s8 %v4349
  %v4351 = vlaneseq
  %v4352 = vshrl.u32 %v4351, 7
  %v4353 = vsub.s32 %v4350, %v4352
  %v4354 = vrot.slane %v4338, %v4353
  %v4356 = vunpack.c.l.s4 1966171168
  %v4357 = vunpack.c.0.s8 %v4356
  %v4358 = vlaneseq
  %v4359 = vshrl.u32 %v4358, 7
  %v4360 = vsub.s32 %v4357, %v4359
  %v4361 = vrot.slane %v4339, %v4360
  %v4363 = vunpack.c.l.s4 1966171168
  %v4364 = vunpack.c.0.s8 %v4363
  %v4365 = vlaneseq
  %v4366 = vshrl.u32 %v4365, 7
  %v4367 = vsub.s32 %v4364, %v4366
  %v4368 = vrot.slane %v4340, %v4367
  %v4369 = vcombine.low %v4347, %v4354
  %v4370 = vcombine.low %v4361, %v4368
  %v4372 = vunpack.c.l.s4 1966171168
  %v4373 = vunpack.c.0.s8 %v4372
  %v4374 = vlaneseq
  %v4375 = vshrl.u32 %v4374, 7
  %v4376 = vsub.s32 %v4373, %v4375
  %v4377 = vrot.slane %v4369, %v4376
  %v4379 = vunpack.c.l.s4 1966171168
  %v4380 = vunpack.c.0.s8 %v4379
  %v4381 = vlaneseq
  %v4382 = vshrl.u32 %v4381, 7
  %v4383 = vsub.s32 %v4380, %v4382
  %v4384 = vrot.slane %v4370, %v4383
  %v4385 = vcombine.low %v4377, %v4384
  %v4386 = vcombine.low %v2666, %v2670
  %v4387 = vcombine.low %v2674, %v2678
  %v4388 = vcombine.low %v2682, %v2686
  %v4389 = vcombine.low %v2690, %v2694
  %v4391 = vunpack.c.l.s4 1966171168
  %v4392 = vunpack.c.0.s8 %v4391
  %v4393 = vlaneseq
  %v4394 = vshrl.u32 %v4393, 7
  %v4395 = vsub.s32 %v4392, %v4394
  %v4396 = vrot.slane %v4386, %v4395
  %v4398 = vunpack.c.l.s4 1966171168
  %v4399 = vunpack.c.0.s8 %v4398
  %v4400 = vlaneseq
  %v4401 = vshrl.u32 %v4400, 7
  %v4402 = vsub.s32 %v4399, %v4401
  %v4403 = vrot.slane %v4387, %v4402
  %v4405 = vunpack.c.l.s4 1966171168
  %v4406 = vunpack.c.0.s8 %v4405
  %v4407 = vlaneseq
  %v4408 = vshrl.u32 %v4407, 7
  %v4409 = vsub.s32 %v4406, %v4408
  %v4410 = vrot.slane %v4388, %v4409
  %v4412 = vunpack.c.l.s4 1966171168
  %v4413 = vunpack.c.0.s8 %v4412
  %v4414 = vlaneseq
  %v4415 = vshrl.u32 %v4414, 7
  %v4416 = vsub.s32 %v4413, %v4415
  %v4417 = vrot.slane %v4389, %v4416
  %v4418 = vcombine.low %v4396, %v4403
  %v4419 = vcombine.low %v4410, %v4417
  %v4421 = vunpack.c.l.s4 1966171168
  %v4422 = vunpack.c.0.s8 %v4421
  %v4423 = vlaneseq
  %v4424 = vshrl.u32 %v4423, 7
  %v4425 = vsub.s32 %v4422, %v4424
  %v4426 = vrot.slane %v4418, %v4425
  %v4428 = vunpack.c.l.s4 1966171168
  %v4429 = vunpack.c.0.s8 %v4428
  %v4430 = vlaneseq
  %v4431 = vshrl.u32 %v4430, 7
  %v4432 = vsub.s32 %v4429, %v4431
  %v4433 = vrot.slane %v4419, %v4432
  %v4434 = vcombine.low %v4426, %v4433
  %v4435 = vcombine.low %v2698, %v2702
  %v4436 = vcombine.low %v2706, %v2710
  %v4437 = vcombine.low %v2714, %v2718
  %v4438 = vcombine.low %v2722, %v2726
  %v4440 = vunpack.c.l.s4 1966171168
  %v4441 = vunpack.c.0.s8 %v4440
  %v4442 = vlaneseq
  %v4443 = vshrl.u32 %v4442, 7
  %v4444 = vsub.s32 %v4441, %v4443
  %v4445 = vrot.slane %v4435, %v4444
  %v4447 = vunpack.c.l.s4 1966171168
  %v4448 = vunpack.c.0.s8 %v4447
  %v4449 = vlaneseq
  %v4450 = vshrl.u32 %v4449, 7
  %v4451 = vsub.s32 %v4448, %v4450
  %v4452 = vrot.slane %v4436, %v4451
  %v4454 = vunpack.c.l.s4 1966171168
  %v4455 = vunpack.c.0.s8 %v4454
  %v4456 = vlaneseq
  %v4457 = vshrl.u32 %v4456, 7
  %v4458 = vsub.s32 %v4455, %v4457
  %v4459 = vrot.slane %v4437, %v4458
  %v4461 = vunpack.c.l.s4 1966171168
  %v4462 = vunpack.c.0.s8 %v4461
  %v4463 = vlaneseq
  %v4464 = vshrl.u32 %v4463, 7
  %v4465 = vsub.s32 %v4462, %v4464
  %v4466 = vrot.slane %v4438, %v4465
  %v4467 = vcombine.low %v4445, %v4452
  %v4468 = vcombine.low %v4459, %v4466
  %v4470 = vunpack.c.l.s4 1966171168
  %v4471 = vunpack.c.0.s8 %v4470
  %v4472 = vlaneseq
  %v4473 = vshrl.u32 %v4472, 7
  %v4474 = vsub.s32 %v4471, %v4473
  %v4475 = vrot.slane %v4467, %v4474
  %v4477 = vunpack.c.l.s4 1966171168
  %v4478 = vunpack.c.0.s8 %v4477
  %v4479 = vlaneseq
  %v4480 = vshrl.u32 %v4479, 7
  %v4481 = vsub.s32 %v4478, %v4480
  %v4482 = vrot.slane %v4468, %v4481
  %v4483 = vcombine.low %v4475, %v4482
  %v4484 = vcombine.low %v2730, %v2734
  %v4485 = vcombine.low %v2738, %v2742
  %v4486 = vcombine.low %v2746, %v2750
  %v4487 = vcombine.low %v2754, %v2758
  %v4489 = vunpack.c.l.s4 1966171168
  %v4490 = vunpack.c.0.s8 %v4489
  %v4491 = vlaneseq
  %v4492 = vshrl.u32 %v4491, 7
  %v4493 = vsub.s32 %v4490, %v4492
  %v4494 = vrot.slane %v4484, %v4493
  %v4496 = vunpack.c.l.s4 1966171168
  %v4497 = vunpack.c.0.s8 %v4496
  %v4498 = vlaneseq
  %v4499 = vshrl.u32 %v4498, 7
  %v4500 = vsub.s32 %v4497, %v4499
  %v4501 = vrot.slane %v4485, %v4500
  %v4503 = vunpack.c.l.s4 1966171168
  %v4504 = vunpack.c.0.s8 %v4503
  %v4505 = vlaneseq
  %v4506 = vshrl.u32 %v4505, 7
  %v4507 = vsub.s32 %v4504, %v4506
  %v4508 = vrot.slane %v4486, %v4507
  %v4510 = vunpack.c.l.s4 1966171168
  %v4511 = vunpack.c.0.s8 %v4510
  %v4512 = vlaneseq
  %v4513 = vshrl.u32 %v4512, 7
  %v4514 = vsub.s32 %v4511, %v4513
  %v4515 = vrot.slane %v4487, %v4514
  %v4516 = vcombine.low %v4494, %v4501
  %v4517 = vcombine.low %v4508, %v4515
  %v4519 = vunpack.c.l.s4 1966171168
  %v4520 = vunpack.c.0.s8 %v4519
  %v4521 = vlaneseq
  %v4522 = vshrl.u32 %v4521, 7
  %v4523 = vsub.s32 %v4520, %v4522
  %v4524 = vrot.slane %v4516, %v4523
  %v4526 = vunpack.c.l.s4 1966171168
  %v4527 = vunpack.c.0.s8 %v4526
  %v4528 = vlaneseq
  %v4529 = vshrl.u32 %v4528, 7
  %v4530 = vsub.s32 %v4527, %v4529
  %v4531 = vrot.slane %v4517, %v4530
  %v4532 = vcombine.low %v4524, %v4531
  %v4533 = vcombine.low %v2762, %v2766
  %v4534 = vcombine.low %v2770, %v2774
  %v4535 = vcombine.low %v2778, %v2782
  %v4536 = vcombine.low %v2786, %v2790
  %v4538 = vunpack.c.l.s4 1966171168
  %v4539 = vunpack.c.0.s8 %v4538
  %v4540 = vlaneseq
  %v4541 = vshrl.u32 %v4540, 7
  %v4542 = vsub.s32 %v4539, %v4541
  %v4543 = vrot.slane %v4533, %v4542
  %v4545 = vunpack.c.l.s4 1966171168
  %v4546 = vunpack.c.0.s8 %v4545
  %v4547 = vlaneseq
  %v4548 = vshrl.u32 %v4547, 7
  %v4549 = vsub.s32 %v4546, %v4548
  %v4550 = vrot.slane %v4534, %v4549
  %v4552 = vunpack.c.l.s4 1966171168
  %v4553 = vunpack.c.0.s8 %v4552
  %v4554 = vlaneseq
  %v4555 = vshrl.u32 %v4554, 7
  %v4556 = vsub.s32 %v4553, %v4555
  %v4557 = vrot.slane %v4535, %v4556
  %v4559 = vunpack.c.l.s4 1966171168
  %v4560 = vunpack.c.0.s8 %v4559
  %v4561 = vlaneseq
  %v4562 = vshrl.u32 %v4561, 7
  %v4563 = vsub.s32 %v4560, %v4562
  %v4564 = vrot.slane %v4536, %v4563
  %v4565 = vcombine.low %v4543, %v4550
  %v4566 = vcombine.low %v4557, %v4564
  %v4568 = vunpack.c.l.s4 1966171168
  %v4569 = vunpack.c.0.s8 %v4568
  %v4570 = vlaneseq
  %v4571 = vshrl.u32 %v4570, 7
  %v4572 = vsub.s32 %v4569, %v4571
  %v4573 = vrot.slane %v4565, %v4572
  %v4575 = vunpack.c.l.s4 1966171168
  %v4576 = vunpack.c.0.s8 %v4575
  %v4577 = vlaneseq
  %v4578 = vshrl.u32 %v4577, 7
  %v4579 = vsub.s32 %v4576, %v4578
  %v4580 = vrot.slane %v4566, %v4579
  %v4581 = vcombine.low %v4573, %v4580
  %v4582 = vcombine.low %v2794, %v2798
  %v4583 = vcombine.low %v2802, %v2806
  %v4584 = vcombine.low %v2810, %v2814
  %v4585 = vcombine.low %v2818, %v2822
  %v4587 = vunpack.c.l.s4 1966171168
  %v4588 = vunpack.c.0.s8 %v4587
  %v4589 = vlaneseq
  %v4590 = vshrl.u32 %v4589, 7
  %v4591 = vsub.s32 %v4588, %v4590
  %v4592 = vrot.slane %v4582, %v4591
  %v4594 = vunpack.c.l.s4 1966171168
  %v4595 = vunpack.c.0.s8 %v4594
  %v4596 = vlaneseq
  %v4597 = vshrl.u32 %v4596, 7
  %v4598 = vsub.s32 %v4595, %v4597
  %v4599 = vrot.slane %v4583, %v4598
  %v4601 = vunpack.c.l.s4 1966171168
  %v4602 = vunpack.c.0.s8 %v4601
  %v4603 = vlaneseq
  %v4604 = vshrl.u32 %v4603, 7
  %v4605 = vsub.s32 %v4602, %v4604
  %v4606 = vrot.slane %v4584, %v4605
  %v4608 = vunpack.c.l.s4 1966171168
  %v4609 = vunpack.c.0.s8 %v4608
  %v4610 = vlaneseq
  %v4611 = vshrl.u32 %v4610, 7
  %v4612 = vsub.s32 %v4609, %v4611
  %v4613 = vrot.slane %v4585, %v4612
  %v4614 = vcombine.low %v4592, %v4599
  %v4615 = vcombine.low %v4606, %v4613
  %v4617 = vunpack.c.l.s4 1966171168
  %v4618 = vunpack.c.0.s8 %v4617
  %v4619 = vlaneseq
  %v4620 = vshrl.u32 %v4619, 7
  %v4621 = vsub.s32 %v4618, %v4620
  %v4622 = vrot.slane %v4614, %v4621
  %v4624 = vunpack.c.l.s4 1966171168
  %v4625 = vunpack.c.0.s8 %v4624
  %v4626 = vlaneseq
  %v4627 = vshrl.u32 %v4626, 7
  %v4628 = vsub.s32 %v4625, %v4627
  %v4629 = vrot.slane %v4615, %v4628
  %v4630 = vcombine.low %v4622, %v4629
  %v4631 = vcombine.low %v2826, %v2830
  %v4632 = vcombine.low %v2834, %v2838
  %v4633 = vcombine.low %v2842, %v2846
  %v4634 = vcombine.low %v2850, %v2854
  %v4636 = vunpack.c.l.s4 1966171168
  %v4637 = vunpack.c.0.s8 %v4636
  %v4638 = vlaneseq
  %v4639 = vshrl.u32 %v4638, 7
  %v4640 = vsub.s32 %v4637, %v4639
  %v4641 = vrot.slane %v4631, %v4640
  %v4643 = vunpack.c.l.s4 1966171168
  %v4644 = vunpack.c.0.s8 %v4643
  %v4645 = vlaneseq
  %v4646 = vshrl.u32 %v4645, 7
  %v4647 = vsub.s32 %v4644, %v4646
  %v4648 = vrot.slane %v4632, %v4647
  %v4650 = vunpack.c.l.s4 1966171168
  %v4651 = vunpack.c.0.s8 %v4650
  %v4652 = vlaneseq
  %v4653 = vshrl.u32 %v4652, 7
  %v4654 = vsub.s32 %v4651, %v4653
  %v4655 = vrot.slane %v4633, %v4654
  %v4657 = vunpack.c.l.s4 1966171168
  %v4658 = vunpack.c.0.s8 %v4657
  %v4659 = vlaneseq
  %v4660 = vshrl.u32 %v4659, 7
  %v4661 = vsub.s32 %v4658, %v4660
  %v4662 = vrot.slane %v4634, %v4661
  %v4663 = vcombine.low %v4641, %v4648
  %v4664 = vcombine.low %v4655, %v4662
  %v4666 = vunpack.c.l.s4 1966171168
  %v4667 = vunpack.c.0.s8 %v4666
  %v4668 = vlaneseq
  %v4669 = vshrl.u32 %v4668, 7
  %v4670 = vsub.s32 %v4667, %v4669
  %v4671 = vrot.slane %v4663, %v4670
  %v4673 = vunpack.c.l.s4 1966171168
  %v4674 = vunpack.c.0.s8 %v4673
  %v4675 = vlaneseq
  %v4676 = vshrl.u32 %v4675, 7
  %v4677 = vsub.s32 %v4674, %v4676
  %v4678 = vrot.slane %v4664, %v4677
  %v4679 = vcombine.low %v4671, %v4678
  %v4680 = vcombine.low %v2858, %v2862
  %v4681 = vcombine.low %v2866, %v2870
  %v4682 = vcombine.low %v2874, %v2878
  %v4683 = vcombine.low %v2882, %v2886
  %v4685 = vunpack.c.l.s4 1966171168
  %v4686 = vunpack.c.0.s8 %v4685
  %v4687 = vlaneseq
  %v4688 = vshrl.u32 %v4687, 7
  %v4689 = vsub.s32 %v4686, %v4688
  %v4690 = vrot.slane %v4680, %v4689
  %v4692 = vunpack.c.l.s4 1966171168
  %v4693 = vunpack.c.0.s8 %v4692
  %v4694 = vlaneseq
  %v4695 = vshrl.u32 %v4694, 7
  %v4696 = vsub.s32 %v4693, %v4695
  %v4697 = vrot.slane %v4681, %v4696
  %v4699 = vunpack.c.l.s4 1966171168
  %v4700 = vunpack.c.0.s8 %v4699
  %v4701 = vlaneseq
  %v4702 = vshrl.u32 %v4701, 7
  %v4703 = vsub.s32 %v4700, %v4702
  %v4704 = vrot.slane %v4682, %v4703
  %v4706 = vunpack.c.l.s4 1966171168
  %v4707 = vunpack.c.0.s8 %v4706
  %v4708 = vlaneseq
  %v4709 = vshrl.u32 %v4708, 7
  %v4710 = vsub.s32 %v4707, %v4709
  %v4711 = vrot.slane %v4683, %v4710
  %v4712 = vcombine.low %v4690, %v4697
  %v4713 = vcombine.low %v4704, %v4711
  %v4715 = vunpack.c.l.s4 1966171168
  %v4716 = vunpack.c.0.s8 %v4715
  %v4717 = vlaneseq
  %v4718 = vshrl.u32 %v4717, 7
  %v4719 = vsub.s32 %v4716, %v4718
  %v4720 = vrot.slane %v4712, %v4719
  %v4722 = vunpack.c.l.s4 1966171168
  %v4723 = vunpack.c.0.s8 %v4722
  %v4724 = vlaneseq
  %v4725 = vshrl.u32 %v4724, 7
  %v4726 = vsub.s32 %v4723, %v4725
  %v4727 = vrot.slane %v4713, %v4726
  %v4728 = vcombine.low %v4720, %v4727
  %v4729 = vcombine.low %v2890, %v2894
  %v4730 = vcombine.low %v2898, %v2902
  %v4731 = vcombine.low %v2906, %v2910
  %v4732 = vcombine.low %v2914, %v2918
  %v4734 = vunpack.c.l.s4 1966171168
  %v4735 = vunpack.c.0.s8 %v4734
  %v4736 = vlaneseq
  %v4737 = vshrl.u32 %v4736, 7
  %v4738 = vsub.s32 %v4735, %v4737
  %v4739 = vrot.slane %v4729, %v4738
  %v4741 = vunpack.c.l.s4 1966171168
  %v4742 = vunpack.c.0.s8 %v4741
  %v4743 = vlaneseq
  %v4744 = vshrl.u32 %v4743, 7
  %v4745 = vsub.s32 %v4742, %v4744
  %v4746 = vrot.slane %v4730, %v4745
  %v4748 = vunpack.c.l.s4 1966171168
  %v4749 = vunpack.c.0.s8 %v4748
  %v4750 = vlaneseq
  %v4751 = vshrl.u32 %v4750, 7
  %v4752 = vsub.s32 %v4749, %v4751
  %v4753 = vrot.slane %v4731, %v4752
  %v4755 = vunpack.c.l.s4 1966171168
  %v4756 = vunpack.c.0.s8 %v4755
  %v4757 = vlaneseq
  %v4758 = vshrl.u32 %v4757, 7
  %v4759 = vsub.s32 %v4756, %v4758
  %v4760 = vrot.slane %v4732, %v4759
  %v4761 = vcombine.low %v4739, %v4746
  %v4762 = vcombine.low %v4753, %v4760
  %v4764 = vunpack.c.l.s4 1966171168
  %v4765 = vunpack.c.0.s8 %v4764
  %v4766 = vlaneseq
  %v4767 = vshrl.u32 %v4766, 7
  %v4768 = vsub.s32 %v4765, %v4767
  %v4769 = vrot.slane %v4761, %v4768
  %v4771 = vunpack.c.l.s4 1966171168
  %v4772 = vunpack.c.0.s8 %v4771
  %v4773 = vlaneseq
  %v4774 = vshrl.u32 %v4773, 7
  %v4775 = vsub.s32 %v4772, %v4774
  %v4776 = vrot.slane %v4762, %v4775
  %v4777 = vcombine.low %v4769, %v4776
  %v4778 = vcombine.low %v2922, %v2926
  %v4779 = vcombine.low %v2930, %v2934
  %v4780 = vcombine.low %v2938, %v2942
  %v4781 = vcombine.low %v2946, %v2950
  %v4783 = vunpack.c.l.s4 1966171168
  %v4784 = vunpack.c.0.s8 %v4783
  %v4785 = vlaneseq
  %v4786 = vshrl.u32 %v4785, 7
  %v4787 = vsub.s32 %v4784, %v4786
  %v4788 = vrot.slane %v4778, %v4787
  %v4790 = vunpack.c.l.s4 1966171168
  %v4791 = vunpack.c.0.s8 %v4790
  %v4792 = vlaneseq
  %v4793 = vshrl.u32 %v4792, 7
  %v4794 = vsub.s32 %v4791, %v4793
  %v4795 = vrot.slane %v4779, %v4794
  %v4797 = vunpack.c.l.s4 1966171168
  %v4798 = vunpack.c.0.s8 %v4797
  %v4799 = vlaneseq
  %v4800 = vshrl.u32 %v4799, 7
  %v4801 = vsub.s32 %v4798, %v4800
  %v4802 = vrot.slane %v4780, %v4801
  %v4804 = vunpack.c.l.s4 1966171168
  %v4805 = vunpack.c.0.s8 %v4804
  %v4806 = vlaneseq
  %v4807 = vshrl.u32 %v4806, 7
  %v4808 = vsub.s32 %v4805, %v4807
  %v4809 = vrot.slane %v4781, %v4808
  %v4810 = vcombine.low %v4788, %v4795
  %v4811 = vcombine.low %v4802, %v4809
  %v4813 = vunpack.c.l.s4 1966171168
  %v4814 = vunpack.c.0.s8 %v4813
  %v4815 = vlaneseq
  %v4816 = vshrl.u32 %v4815, 7
  %v4817 = vsub.s32 %v4814, %v4816
  %v4818 = vrot.slane %v4810, %v4817
  %v4820 = vunpack.c.l.s4 1966171168
  %v4821 = vunpack.c.0.s8 %v4820
  %v4822 = vlaneseq
  %v4823 = vshrl.u32 %v4822, 7
  %v4824 = vsub.s32 %v4821, %v4823
  %v4825 = vrot.slane %v4811, %v4824
  %v4826 = vcombine.low %v4818, %v4825
  %v4827 = vcombine.low %v2954, %v2958
  %v4828 = vcombine.low %v2962, %v2966
  %v4829 = vcombine.low %v2970, %v2974
  %v4830 = vcombine.low %v2978, %v2982
  %v4832 = vunpack.c.l.s4 1966171168
  %v4833 = vunpack.c.0.s8 %v4832
  %v4834 = vlaneseq
  %v4835 = vshrl.u32 %v4834, 7
  %v4836 = vsub.s32 %v4833, %v4835
  %v4837 = vrot.slane %v4827, %v4836
  %v4839 = vunpack.c.l.s4 1966171168
  %v4840 = vunpack.c.0.s8 %v4839
  %v4841 = vlaneseq
  %v4842 = vshrl.u32 %v4841, 7
  %v4843 = vsub.s32 %v4840, %v4842
  %v4844 = vrot.slane %v4828, %v4843
  %v4846 = vunpack.c.l.s4 1966171168
  %v4847 = vunpack.c.0.s8 %v4846
  %v4848 = vlaneseq
  %v4849 = vshrl.u32 %v4848, 7
  %v4850 = vsub.s32 %v4847, %v4849
  %v4851 = vrot.slane %v4829, %v4850
  %v4853 = vunpack.c.l.s4 1966171168
  %v4854 = vunpack.c.0.s8 %v4853
  %v4855 = vlaneseq
  %v4856 = vshrl.u32 %v4855, 7
  %v4857 = vsub.s32 %v4854, %v4856
  %v4858 = vrot.slane %v4830, %v4857
  %v4859 = vcombine.low %v4837, %v4844
  %v4860 = vcombine.low %v4851, %v4858
  %v4862 = vunpack.c.l.s4 1966171168
  %v4863 = vunpack.c.0.s8 %v4862
  %v4864 = vlaneseq
  %v4865 = vshrl.u32 %v4864, 7
  %v4866 = vsub.s32 %v4863, %v4865
  %v4867 = vrot.slane %v4859, %v4866
  %v4869 = vunpack.c.l.s4 1966171168
  %v4870 = vunpack.c.0.s8 %v4869
  %v4871 = vlaneseq
  %v4872 = vshrl.u32 %v4871, 7
  %v4873 = vsub.s32 %v4870, %v4872
  %v4874 = vrot.slane %v4860, %v4873
  %v4875 = vcombine.low %v4867, %v4874
  %v4876 = vcombine.low %v2986, %v2990
  %v4877 = vcombine.low %v2994, %v2998
  %v4878 = vcombine.low %v3002, %v3006
  %v4879 = vcombine.low %v3010, %v3014
  %v4881 = vunpack.c.l.s4 1966171168
  %v4882 = vunpack.c.0.s8 %v4881
  %v4883 = vlaneseq
  %v4884 = vshrl.u32 %v4883, 7
  %v4885 = vsub.s32 %v4882, %v4884
  %v4886 = vrot.slane %v4876, %v4885
  %v4888 = vunpack.c.l.s4 1966171168
  %v4889 = vunpack.c.0.s8 %v4888
  %v4890 = vlaneseq
  %v4891 = vshrl.u32 %v4890, 7
  %v4892 = vsub.s32 %v4889, %v4891
  %v4893 = vrot.slane %v4877, %v4892
  %v4895 = vunpack.c.l.s4 1966171168
  %v4896 = vunpack.c.0.s8 %v4895
  %v4897 = vlaneseq
  %v4898 = vshrl.u32 %v4897, 7
  %v4899 = vsub.s32 %v4896, %v4898
  %v4900 = vrot.slane %v4878, %v4899
  %v4902 = vunpack.c.l.s4 1966171168
  %v4903 = vunpack.c.0.s8 %v4902
  %v4904 = vlaneseq
  %v4905 = vshrl.u32 %v4904, 7
  %v4906 = vsub.s32 %v4903, %v4905
  %v4907 = vrot.slane %v4879, %v4906
  %v4908 = vcombine.low %v4886, %v4893
  %v4909 = vcombine.low %v4900, %v4907
  %v4911 = vunpack.c.l.s4 1966171168
  %v4912 = vunpack.c.0.s8 %v4911
  %v4913 = vlaneseq
  %v4914 = vshrl.u32 %v4913, 7
  %v4915 = vsub.s32 %v4912, %v4914
  %v4916 = vrot.slane %v4908, %v4915
  %v4918 = vunpack.c.l.s4 1966171168
  %v4919 = vunpack.c.0.s8 %v4918
  %v4920 = vlaneseq
  %v4921 = vshrl.u32 %v4920, 7
  %v4922 = vsub.s32 %v4919, %v4921
  %v4923 = vrot.slane %v4909, %v4922
  %v4924 = vcombine.low %v4916, %v4923
  %v4925 = vcombine.low %v3018, %v3022
  %v4926 = vcombine.low %v3026, %v3030
  %v4927 = vcombine.low %v3034, %v3038
  %v4928 = vcombine.low %v3042, %v3046
  %v4930 = vunpack.c.l.s4 1966171168
  %v4931 = vunpack.c.0.s8 %v4930
  %v4932 = vlaneseq
  %v4933 = vshrl.u32 %v4932, 7
  %v4934 = vsub.s32 %v4931, %v4933
  %v4935 = vrot.slane %v4925, %v4934
  %v4937 = vunpack.c.l.s4 1966171168
  %v4938 = vunpack.c.0.s8 %v4937
  %v4939 = vlaneseq
  %v4940 = vshrl.u32 %v4939, 7
  %v4941 = vsub.s32 %v4938, %v4940
  %v4942 = vrot.slane %v4926, %v4941
  %v4944 = vunpack.c.l.s4 1966171168
  %v4945 = vunpack.c.0.s8 %v4944
  %v4946 = vlaneseq
  %v4947 = vshrl.u32 %v4946, 7
  %v4948 = vsub.s32 %v4945, %v4947
  %v4949 = vrot.slane %v4927, %v4948
  %v4951 = vunpack.c.l.s4 1966171168
  %v4952 = vunpack.c.0.s8 %v4951
  %v4953 = vlaneseq
  %v4954 = vshrl.u32 %v4953, 7
  %v4955 = vsub.s32 %v4952, %v4954
  %v4956 = vrot.slane %v4928, %v4955
  %v4957 = vcombine.low %v4935, %v4942
  %v4958 = vcombine.low %v4949, %v4956
  %v4960 = vunpack.c.l.s4 1966171168
  %v4961 = vunpack.c.0.s8 %v4960
  %v4962 = vlaneseq
  %v4963 = vshrl.u32 %v4962, 7
  %v4964 = vsub.s32 %v4961, %v4963
  %v4965 = vrot.slane %v4957, %v4964
  %v4967 = vunpack.c.l.s4 1966171168
  %v4968 = vunpack.c.0.s8 %v4967
  %v4969 = vlaneseq
  %v4970 = vshrl.u32 %v4969, 7
  %v4971 = vsub.s32 %v4968, %v4970
  %v4972 = vrot.slane %v4958, %v4971
  %v4973 = vcombine.low %v4965, %v4972
  %v4974 = vcombine.low %v3050, %v3054
  %v4975 = vcombine.low %v3058, %v3062
  %v4976 = vcombine.low %v3066, %v3070
  %v4977 = vcombine.low %v3074, %v3078
  %v4979 = vunpack.c.l.s4 1966171168
  %v4980 = vunpack.c.0.s8 %v4979
  %v4981 = vlaneseq
  %v4982 = vshrl.u32 %v4981, 7
  %v4983 = vsub.s32 %v4980, %v4982
  %v4984 = vrot.slane %v4974, %v4983
  %v4986 = vunpack.c.l.s4 1966171168
  %v4987 = vunpack.c.0.s8 %v4986
  %v4988 = vlaneseq
  %v4989 = vshrl.u32 %v4988, 7
  %v4990 = vsub.s32 %v4987, %v4989
  %v4991 = vrot.slane %v4975, %v4990
  %v4993 = vunpack.c.l.s4 1966171168
  %v4994 = vunpack.c.0.s8 %v4993
  %v4995 = vlaneseq
  %v4996 = vshrl.u32 %v4995, 7
  %v4997 = vsub.s32 %v4994, %v4996
  %v4998 = vrot.slane %v4976, %v4997
  %v5000 = vunpack.c.l.s4 1966171168
  %v5001 = vunpack.c.0.s8 %v5000
  %v5002 = vlaneseq
  %v5003 = vshrl.u32 %v5002, 7
  %v5004 = vsub.s32 %v5001, %v5003
  %v5005 = vrot.slane %v4977, %v5004
  %v5006 = vcombine.low %v4984, %v4991
  %v5007 = vcombine.low %v4998, %v5005
  %v5009 = vunpack.c.l.s4 1966171168
  %v5010 = vunpack.c.0.s8 %v5009
  %v5011 = vlaneseq
  %v5012 = vshrl.u32 %v5011, 7
  %v5013 = vsub.s32 %v5010, %v5012
  %v5014 = vrot.slane %v5006, %v5013
  %v5016 = vunpack.c.l.s4 1966171168
  %v5017 = vunpack.c.0.s8 %v5016
  %v5018 = vlaneseq
  %v5019 = vshrl.u32 %v5018, 7
  %v5020 = vsub.s32 %v5017, %v5019
  %v5021 = vrot.slane %v5007, %v5020
  %v5022 = vcombine.low %v5014, %v5021
  %v5023 = vcombine.low %v3082, %v3086
  %v5024 = vcombine.low %v3090, %v3094
  %v5025 = vcombine.low %v3098, %v3102
  %v5026 = vcombine.low %v3106, %v3110
  %v5028 = vunpack.c.l.s4 1966171168
  %v5029 = vunpack.c.0.s8 %v5028
  %v5030 = vlaneseq
  %v5031 = vshrl.u32 %v5030, 7
  %v5032 = vsub.s32 %v5029, %v5031
  %v5033 = vrot.slane %v5023, %v5032
  %v5035 = vunpack.c.l.s4 1966171168
  %v5036 = vunpack.c.0.s8 %v5035
  %v5037 = vlaneseq
  %v5038 = vshrl.u32 %v5037, 7
  %v5039 = vsub.s32 %v5036, %v5038
  %v5040 = vrot.slane %v5024, %v5039
  %v5042 = vunpack.c.l.s4 1966171168
  %v5043 = vunpack.c.0.s8 %v5042
  %v5044 = vlaneseq
  %v5045 = vshrl.u32 %v5044, 7
  %v5046 = vsub.s32 %v5043, %v5045
  %v5047 = vrot.slane %v5025, %v5046
  %v5049 = vunpack.c.l.s4 1966171168
  %v5050 = vunpack.c.0.s8 %v5049
  %v5051 = vlaneseq
  %v5052 = vshrl.u32 %v5051, 7
  %v5053 = vsub.s32 %v5050, %v5052
  %v5054 = vrot.slane %v5026, %v5053
  %v5055 = vcombine.low %v5033, %v5040
  %v5056 = vcombine.low %v5047, %v5054
  %v5058 = vunpack.c.l.s4 1966171168
  %v5059 = vunpack.c.0.s8 %v5058
  %v5060 = vlaneseq
  %v5061 = vshrl.u32 %v5060, 7
  %v5062 = vsub.s32 %v5059, %v5061
  %v5063 = vrot.slane %v5055, %v5062
  %v5065 = vunpack.c.l.s4 1966171168
  %v5066 = vunpack.c.0.s8 %v5065
  %v5067 = vlaneseq
  %v5068 = vshrl.u32 %v5067, 7
  %v5069 = vsub.s32 %v5066, %v5068
  %v5070 = vrot.slane %v5056, %v5069
  %v5071 = vcombine.low %v5063, %v5070
  %v5072 = vcombine.low %v3114, %v3118
  %v5073 = vcombine.low %v3122, %v3126
  %v5074 = vcombine.low %v3130, %v3134
  %v5075 = vcombine.low %v3138, %v3142
  %v5077 = vunpack.c.l.s4 1966171168
  %v5078 = vunpack.c.0.s8 %v5077
  %v5079 = vlaneseq
  %v5080 = vshrl.u32 %v5079, 7
  %v5081 = vsub.s32 %v5078, %v5080
  %v5082 = vrot.slane %v5072, %v5081
  %v5084 = vunpack.c.l.s4 1966171168
  %v5085 = vunpack.c.0.s8 %v5084
  %v5086 = vlaneseq
  %v5087 = vshrl.u32 %v5086, 7
  %v5088 = vsub.s32 %v5085, %v5087
  %v5089 = vrot.slane %v5073, %v5088
  %v5091 = vunpack.c.l.s4 1966171168
  %v5092 = vunpack.c.0.s8 %v5091
  %v5093 = vlaneseq
  %v5094 = vshrl.u32 %v5093, 7
  %v5095 = vsub.s32 %v5092, %v5094
  %v5096 = vrot.slane %v5074, %v5095
  %v5098 = vunpack.c.l.s4 1966171168
  %v5099 = vunpack.c.0.s8 %v5098
  %v5100 = vlaneseq
  %v5101 = vshrl.u32 %v5100, 7
  %v5102 = vsub.s32 %v5099, %v5101
  %v5103 = vrot.slane %v5075, %v5102
  %v5104 = vcombine.low %v5082, %v5089
  %v5105 = vcombine.low %v5096, %v5103
  %v5107 = vunpack.c.l.s4 1966171168
  %v5108 = vunpack.c.0.s8 %v5107
  %v5109 = vlaneseq
  %v5110 = vshrl.u32 %v5109, 7
  %v5111 = vsub.s32 %v5108, %v5110
  %v5112 = vrot.slane %v5104, %v5111
  %v5114 = vunpack.c.l.s4 1966171168
  %v5115 = vunpack.c.0.s8 %v5114
  %v5116 = vlaneseq
  %v5117 = vshrl.u32 %v5116, 7
  %v5118 = vsub.s32 %v5115, %v5117
  %v5119 = vrot.slane %v5105, %v5118
  %v5120 = vcombine.low %v5112, %v5119
  %v5121 = vcombine.low %v3146, %v3150
  %v5122 = vcombine.low %v3154, %v3158
  %v5123 = vcombine.low %v3162, %v3166
  %v5124 = vcombine.low %v3170, %v3174
  %v5126 = vunpack.c.l.s4 1966171168
  %v5127 = vunpack.c.0.s8 %v5126
  %v5128 = vlaneseq
  %v5129 = vshrl.u32 %v5128, 7
  %v5130 = vsub.s32 %v5127, %v5129
  %v5131 = vrot.slane %v5121, %v5130
  %v5133 = vunpack.c.l.s4 1966171168
  %v5134 = vunpack.c.0.s8 %v5133
  %v5135 = vlaneseq
  %v5136 = vshrl.u32 %v5135, 7
  %v5137 = vsub.s32 %v5134, %v5136
  %v5138 = vrot.slane %v5122, %v5137
  %v5140 = vunpack.c.l.s4 1966171168
  %v5141 = vunpack.c.0.s8 %v5140
  %v5142 = vlaneseq
  %v5143 = vshrl.u32 %v5142, 7
  %v5144 = vsub.s32 %v5141, %v5143
  %v5145 = vrot.slane %v5123, %v5144
  %v5147 = vunpack.c.l.s4 1966171168
  %v5148 = vunpack.c.0.s8 %v5147
  %v5149 = vlaneseq
  %v5150 = vshrl.u32 %v5149, 7
  %v5151 = vsub.s32 %v5148, %v5150
  %v5152 = vrot.slane %v5124, %v5151
  %v5153 = vcombine.low %v5131, %v5138
  %v5154 = vcombine.low %v5145, %v5152
  %v5156 = vunpack.c.l.s4 1966171168
  %v5157 = vunpack.c.0.s8 %v5156
  %v5158 = vlaneseq
  %v5159 = vshrl.u32 %v5158, 7
  %v5160 = vsub.s32 %v5157, %v5159
  %v5161 = vrot.slane %v5153, %v5160
  %v5163 = vunpack.c.l.s4 1966171168
  %v5164 = vunpack.c.0.s8 %v5163
  %v5165 = vlaneseq
  %v5166 = vshrl.u32 %v5165, 7
  %v5167 = vsub.s32 %v5164, %v5166
  %v5168 = vrot.slane %v5154, %v5167
  %v5169 = vcombine.low %v5161, %v5168
  %v5170 = vcombine.low %v3178, %v3182
  %v5171 = vcombine.low %v3186, %v3190
  %v5172 = vcombine.low %v3194, %v3198
  %v5173 = vcombine.low %v3202, %v3206
  %v5175 = vunpack.c.l.s4 1966171168
  %v5176 = vunpack.c.0.s8 %v5175
  %v5177 = vlaneseq
  %v5178 = vshrl.u32 %v5177, 7
  %v5179 = vsub.s32 %v5176, %v5178
  %v5180 = vrot.slane %v5170, %v5179
  %v5182 = vunpack.c.l.s4 1966171168
  %v5183 = vunpack.c.0.s8 %v5182
  %v5184 = vlaneseq
  %v5185 = vshrl.u32 %v5184, 7
  %v5186 = vsub.s32 %v5183, %v5185
  %v5187 = vrot.slane %v5171, %v5186
  %v5189 = vunpack.c.l.s4 1966171168
  %v5190 = vunpack.c.0.s8 %v5189
  %v5191 = vlaneseq
  %v5192 = vshrl.u32 %v5191, 7
  %v5193 = vsub.s32 %v5190, %v5192
  %v5194 = vrot.slane %v5172, %v5193
  %v5196 = vunpack.c.l.s4 1966171168
  %v5197 = vunpack.c.0.s8 %v5196
  %v5198 = vlaneseq
  %v5199 = vshrl.u32 %v5198, 7
  %v5200 = vsub.s32 %v5197, %v5199
  %v5201 = vrot.slane %v5173, %v5200
  %v5202 = vcombine.low %v5180, %v5187
  %v5203 = vcombine.low %v5194, %v5201
  %v5205 = vunpack.c.l.s4 1966171168
  %v5206 = vunpack.c.0.s8 %v5205
  %v5207 = vlaneseq
  %v5208 = vshrl.u32 %v5207, 7
  %v5209 = vsub.s32 %v5206, %v5208
  %v5210 = vrot.slane %v5202, %v5209
  %v5212 = vunpack.c.l.s4 1966171168
  %v5213 = vunpack.c.0.s8 %v5212
  %v5214 = vlaneseq
  %v5215 = vshrl.u32 %v5214, 7
  %v5216 = vsub.s32 %v5213, %v5215
  %v5217 = vrot.slane %v5203, %v5216
  %v5218 = vcombine.low %v5210, %v5217
  %v5219 = vcombine.low %v3210, %v3214
  %v5220 = vcombine.low %v3218, %v3222
  %v5221 = vcombine.low %v3226, %v3230
  %v5222 = vcombine.low %v3234, %v3238
  %v5224 = vunpack.c.l.s4 1966171168
  %v5225 = vunpack.c.0.s8 %v5224
  %v5226 = vlaneseq
  %v5227 = vshrl.u32 %v5226, 7
  %v5228 = vsub.s32 %v5225, %v5227
  %v5229 = vrot.slane %v5219, %v5228
  %v5231 = vunpack.c.l.s4 1966171168
  %v5232 = vunpack.c.0.s8 %v5231
  %v5233 = vlaneseq
  %v5234 = vshrl.u32 %v5233, 7
  %v5235 = vsub.s32 %v5232, %v5234
  %v5236 = vrot.slane %v5220, %v5235
  %v5238 = vunpack.c.l.s4 1966171168
  %v5239 = vunpack.c.0.s8 %v5238
  %v5240 = vlaneseq
  %v5241 = vshrl.u32 %v5240, 7
  %v5242 = vsub.s32 %v5239, %v5241
  %v5243 = vrot.slane %v5221, %v5242
  %v5245 = vunpack.c.l.s4 1966171168
  %v5246 = vunpack.c.0.s8 %v5245
  %v5247 = vlaneseq
  %v5248 = vshrl.u32 %v5247, 7
  %v5249 = vsub.s32 %v5246, %v5248
  %v5250 = vrot.slane %v5222, %v5249
  %v5251 = vcombine.low %v5229, %v5236
  %v5252 = vcombine.low %v5243, %v5250
  %v5254 = vunpack.c.l.s4 1966171168
  %v5255 = vunpack.c.0.s8 %v5254
  %v5256 = vlaneseq
  %v5257 = vshrl.u32 %v5256, 7
  %v5258 = vsub.s32 %v5255, %v5257
  %v5259 = vrot.slane %v5251, %v5258
  %v5261 = vunpack.c.l.s4 1966171168
  %v5262 = vunpack.c.0.s8 %v5261
  %v5263 = vlaneseq
  %v5264 = vshrl.u32 %v5263, 7
  %v5265 = vsub.s32 %v5262, %v5264
  %v5266 = vrot.slane %v5252, %v5265
  %v5267 = vcombine.low %v5259, %v5266
  %v5268 = vcombine.low %v3242, %v3246
  %v5269 = vcombine.low %v3250, %v3254
  %v5270 = vcombine.low %v3258, %v3262
  %v5271 = vcombine.low %v3266, %v3270
  %v5273 = vunpack.c.l.s4 1966171168
  %v5274 = vunpack.c.0.s8 %v5273
  %v5275 = vlaneseq
  %v5276 = vshrl.u32 %v5275, 7
  %v5277 = vsub.s32 %v5274, %v5276
  %v5278 = vrot.slane %v5268, %v5277
  %v5280 = vunpack.c.l.s4 1966171168
  %v5281 = vunpack.c.0.s8 %v5280
  %v5282 = vlaneseq
  %v5283 = vshrl.u32 %v5282, 7
  %v5284 = vsub.s32 %v5281, %v5283
  %v5285 = vrot.slane %v5269, %v5284
  %v5287 = vunpack.c.l.s4 1966171168
  %v5288 = vunpack.c.0.s8 %v5287
  %v5289 = vlaneseq
  %v5290 = vshrl.u32 %v5289, 7
  %v5291 = vsub.s32 %v5288, %v5290
  %v5292 = vrot.slane %v5270, %v5291
  %v5294 = vunpack.c.l.s4 1966171168
  %v5295 = vunpack.c.0.s8 %v5294
  %v5296 = vlaneseq
  %v5297 = vshrl.u32 %v5296, 7
  %v5298 = vsub.s32 %v5295, %v5297
  %v5299 = vrot.slane %v5271, %v5298
  %v5300 = vcombine.low %v5278, %v5285
  %v5301 = vcombine.low %v5292, %v5299
  %v5303 = vunpack.c.l.s4 1966171168
  %v5304 = vunpack.c.0.s8 %v5303
  %v5305 = vlaneseq
  %v5306 = vshrl.u32 %v5305, 7
  %v5307 = vsub.s32 %v5304, %v5306
  %v5308 = vrot.slane %v5300, %v5307
  %v5310 = vunpack.c.l.s4 1966171168
  %v5311 = vunpack.c.0.s8 %v5310
  %v5312 = vlaneseq
  %v5313 = vshrl.u32 %v5312, 7
  %v5314 = vsub.s32 %v5311, %v5313
  %v5315 = vrot.slane %v5301, %v5314
  %v5316 = vcombine.low %v5308, %v5315
  %v5317 = vcombine.low %v3274, %v3278
  %v5318 = vcombine.low %v3282, %v3286
  %v5319 = vcombine.low %v3290, %v3294
  %v5320 = vcombine.low %v3298, %v3302
  %v5322 = vunpack.c.l.s4 1966171168
  %v5323 = vunpack.c.0.s8 %v5322
  %v5324 = vlaneseq
  %v5325 = vshrl.u32 %v5324, 7
  %v5326 = vsub.s32 %v5323, %v5325
  %v5327 = vrot.slane %v5317, %v5326
  %v5329 = vunpack.c.l.s4 1966171168
  %v5330 = vunpack.c.0.s8 %v5329
  %v5331 = vlaneseq
  %v5332 = vshrl.u32 %v5331, 7
  %v5333 = vsub.s32 %v5330, %v5332
  %v5334 = vrot.slane %v5318, %v5333
  %v5336 = vunpack.c.l.s4 1966171168
  %v5337 = vunpack.c.0.s8 %v5336
  %v5338 = vlaneseq
  %v5339 = vshrl.u32 %v5338, 7
  %v5340 = vsub.s32 %v5337, %v5339
  %v5341 = vrot.slane %v5319, %v5340
  %v5343 = vunpack.c.l.s4 1966171168
  %v5344 = vunpack.c.0.s8 %v5343
  %v5345 = vlaneseq
  %v5346 = vshrl.u32 %v5345, 7
  %v5347 = vsub.s32 %v5344, %v5346
  %v5348 = vrot.slane %v5320, %v5347
  %v5349 = vcombine.low %v5327, %v5334
  %v5350 = vcombine.low %v5341, %v5348
  %v5352 = vunpack.c.l.s4 1966171168
  %v5353 = vunpack.c.0.s8 %v5352
  %v5354 = vlaneseq
  %v5355 = vshrl.u32 %v5354, 7
  %v5356 = vsub.s32 %v5353, %v5355
  %v5357 = vrot.slane %v5349, %v5356
  %v5359 = vunpack.c.l.s4 1966171168
  %v5360 = vunpack.c.0.s8 %v5359
  %v5361 = vlaneseq
  %v5362 = vshrl.u32 %v5361, 7
  %v5363 = vsub.s32 %v5360, %v5362
  %v5364 = vrot.slane %v5350, %v5363
  %v5365 = vcombine.low %v5357, %v5364
  %v5366 = vcombine.low %v3306, %v3310
  %v5367 = vcombine.low %v3314, %v3318
  %v5368 = vcombine.low %v3322, %v3326
  %v5369 = vcombine.low %v3330, %v3334
  %v5371 = vunpack.c.l.s4 1966171168
  %v5372 = vunpack.c.0.s8 %v5371
  %v5373 = vlaneseq
  %v5374 = vshrl.u32 %v5373, 7
  %v5375 = vsub.s32 %v5372, %v5374
  %v5376 = vrot.slane %v5366, %v5375
  %v5378 = vunpack.c.l.s4 1966171168
  %v5379 = vunpack.c.0.s8 %v5378
  %v5380 = vlaneseq
  %v5381 = vshrl.u32 %v5380, 7
  %v5382 = vsub.s32 %v5379, %v5381
  %v5383 = vrot.slane %v5367, %v5382
  %v5385 = vunpack.c.l.s4 1966171168
  %v5386 = vunpack.c.0.s8 %v5385
  %v5387 = vlaneseq
  %v5388 = vshrl.u32 %v5387, 7
  %v5389 = vsub.s32 %v5386, %v5388
  %v5390 = vrot.slane %v5368, %v5389
  %v5392 = vunpack.c.l.s4 1966171168
  %v5393 = vunpack.c.0.s8 %v5392
  %v5394 = vlaneseq
  %v5395 = vshrl.u32 %v5394, 7
  %v5396 = vsub.s32 %v5393, %v5395
  %v5397 = vrot.slane %v5369, %v5396
  %v5398 = vcombine.low %v5376, %v5383
  %v5399 = vcombine.low %v5390, %v5397
  %v5401 = vunpack.c.l.s4 1966171168
  %v5402 = vunpack.c.0.s8 %v5401
  %v5403 = vlaneseq
  %v5404 = vshrl.u32 %v5403, 7
  %v5405 = vsub.s32 %v5402, %v5404
  %v5406 = vrot.slane %v5398, %v5405
  %v5408 = vunpack.c.l.s4 1966171168
  %v5409 = vunpack.c.0.s8 %v5408
  %v5410 = vlaneseq
  %v5411 = vshrl.u32 %v5410, 7
  %v5412 = vsub.s32 %v5409, %v5411
  %v5413 = vrot.slane %v5399, %v5412
  %v5414 = vcombine.low %v5406, %v5413
  %v5415 = vcombine.low %v3338, %v3342
  %v5416 = vcombine.low %v3346, %v3350
  %v5417 = vcombine.low %v3354, %v3358
  %v5418 = vcombine.low %v3362, %v3366
  %v5420 = vunpack.c.l.s4 1966171168
  %v5421 = vunpack.c.0.s8 %v5420
  %v5422 = vlaneseq
  %v5423 = vshrl.u32 %v5422, 7
  %v5424 = vsub.s32 %v5421, %v5423
  %v5425 = vrot.slane %v5415, %v5424
  %v5427 = vunpack.c.l.s4 1966171168
  %v5428 = vunpack.c.0.s8 %v5427
  %v5429 = vlaneseq
  %v5430 = vshrl.u32 %v5429, 7
  %v5431 = vsub.s32 %v5428, %v5430
  %v5432 = vrot.slane %v5416, %v5431
  %v5434 = vunpack.c.l.s4 1966171168
  %v5435 = vunpack.c.0.s8 %v5434
  %v5436 = vlaneseq
  %v5437 = vshrl.u32 %v5436, 7
  %v5438 = vsub.s32 %v5435, %v5437
  %v5439 = vrot.slane %v5417, %v5438
  %v5441 = vunpack.c.l.s4 1966171168
  %v5442 = vunpack.c.0.s8 %v5441
  %v5443 = vlaneseq
  %v5444 = vshrl.u32 %v5443, 7
  %v5445 = vsub.s32 %v5442, %v5444
  %v5446 = vrot.slane %v5418, %v5445
  %v5447 = vcombine.low %v5425, %v5432
  %v5448 = vcombine.low %v5439, %v5446
  %v5450 = vunpack.c.l.s4 1966171168
  %v5451 = vunpack.c.0.s8 %v5450
  %v5452 = vlaneseq
  %v5453 = vshrl.u32 %v5452, 7
  %v5454 = vsub.s32 %v5451, %v5453
  %v5455 = vrot.slane %v5447, %v5454
  %v5457 = vunpack.c.l.s4 1966171168
  %v5458 = vunpack.c.0.s8 %v5457
  %v5459 = vlaneseq
  %v5460 = vshrl.u32 %v5459, 7
  %v5461 = vsub.s32 %v5458, %v5460
  %v5462 = vrot.slane %v5448, %v5461
  %v5463 = vcombine.low %v5455, %v5462
  %v5464 = vcombine.low %v3370, %v3374
  %v5465 = vcombine.low %v3378, %v3382
  %v5466 = vcombine.low %v3386, %v3390
  %v5467 = vcombine.low %v3394, %v3398
  %v5469 = vunpack.c.l.s4 1966171168
  %v5470 = vunpack.c.0.s8 %v5469
  %v5471 = vlaneseq
  %v5472 = vshrl.u32 %v5471, 7
  %v5473 = vsub.s32 %v5470, %v5472
  %v5474 = vrot.slane %v5464, %v5473
  %v5476 = vunpack.c.l.s4 1966171168
  %v5477 = vunpack.c.0.s8 %v5476
  %v5478 = vlaneseq
  %v5479 = vshrl.u32 %v5478, 7
  %v5480 = vsub.s32 %v5477, %v5479
  %v5481 = vrot.slane %v5465, %v5480
  %v5483 = vunpack.c.l.s4 1966171168
  %v5484 = vunpack.c.0.s8 %v5483
  %v5485 = vlaneseq
  %v5486 = vshrl.u32 %v5485, 7
  %v5487 = vsub.s32 %v5484, %v5486
  %v5488 = vrot.slane %v5466, %v5487
  %v5490 = vunpack.c.l.s4 1966171168
  %v5491 = vunpack.c.0.s8 %v5490
  %v5492 = vlaneseq
  %v5493 = vshrl.u32 %v5492, 7
  %v5494 = vsub.s32 %v5491, %v5493
  %v5495 = vrot.slane %v5467, %v5494
  %v5496 = vcombine.low %v5474, %v5481
  %v5497 = vcombine.low %v5488, %v5495
  %v5499 = vunpack.c.l.s4 1966171168
  %v5500 = vunpack.c.0.s8 %v5499
  %v5501 = vlaneseq
  %v5502 = vshrl.u32 %v5501, 7
  %v5503 = vsub.s32 %v5500, %v5502
  %v5504 = vrot.slane %v5496, %v5503
  %v5506 = vunpack.c.l.s4 1966171168
  %v5507 = vunpack.c.0.s8 %v5506
  %v5508 = vlaneseq
  %v5509 = vshrl.u32 %v5508, 7
  %v5510 = vsub.s32 %v5507, %v5509
  %v5511 = vrot.slane %v5497, %v5510
  %v5512 = vcombine.low %v5504, %v5511
  %v5513 = vcombine.low %v3402, %v3406
  %v5514 = vcombine.low %v3410, %v3414
  %v5515 = vcombine.low %v3418, %v3422
  %v5516 = vcombine.low %v3426, %v3430
  %v5518 = vunpack.c.l.s4 1966171168
  %v5519 = vunpack.c.0.s8 %v5518
  %v5520 = vlaneseq
  %v5521 = vshrl.u32 %v5520, 7
  %v5522 = vsub.s32 %v5519, %v5521
  %v5523 = vrot.slane %v5513, %v5522
  %v5525 = vunpack.c.l.s4 1966171168
  %v5526 = vunpack.c.0.s8 %v5525
  %v5527 = vlaneseq
  %v5528 = vshrl.u32 %v5527, 7
  %v5529 = vsub.s32 %v5526, %v5528
  %v5530 = vrot.slane %v5514, %v5529
  %v5532 = vunpack.c.l.s4 1966171168
  %v5533 = vunpack.c.0.s8 %v5532
  %v5534 = vlaneseq
  %v5535 = vshrl.u32 %v5534, 7
  %v5536 = vsub.s32 %v5533, %v5535
  %v5537 = vrot.slane %v5515, %v5536
  %v5539 = vunpack.c.l.s4 1966171168
  %v5540 = vunpack.c.0.s8 %v5539
  %v5541 = vlaneseq
  %v5542 = vshrl.u32 %v5541, 7
  %v5543 = vsub.s32 %v5540, %v5542
  %v5544 = vrot.slane %v5516, %v5543
  %v5545 = vcombine.low %v5523, %v5530
  %v5546 = vcombine.low %v5537, %v5544
  %v5548 = vunpack.c.l.s4 1966171168
  %v5549 = vunpack.c.0.s8 %v5548
  %v5550 = vlaneseq
  %v5551 = vshrl.u32 %v5550, 7
  %v5552 = vsub.s32 %v5549, %v5551
  %v5553 = vrot.slane %v5545, %v5552
  %v5555 = vunpack.c.l.s4 1966171168
  %v5556 = vunpack.c.0.s8 %v5555
  %v5557 = vlaneseq
  %v5558 = vshrl.u32 %v5557, 7
  %v5559 = vsub.s32 %v5556, %v5558
  %v5560 = vrot.slane %v5546, %v5559
  %v5561 = vcombine.low %v5553, %v5560
  %v5562 = vcombine.low %v3434, %v3438
  %v5563 = vcombine.low %v3442, %v3446
  %v5564 = vcombine.low %v3450, %v3454
  %v5565 = vcombine.low %v3458, %v3462
  %v5567 = vunpack.c.l.s4 1966171168
  %v5568 = vunpack.c.0.s8 %v5567
  %v5569 = vlaneseq
  %v5570 = vshrl.u32 %v5569, 7
  %v5571 = vsub.s32 %v5568, %v5570
  %v5572 = vrot.slane %v5562, %v5571
  %v5574 = vunpack.c.l.s4 1966171168
  %v5575 = vunpack.c.0.s8 %v5574
  %v5576 = vlaneseq
  %v5577 = vshrl.u32 %v5576, 7
  %v5578 = vsub.s32 %v5575, %v5577
  %v5579 = vrot.slane %v5563, %v5578
  %v5581 = vunpack.c.l.s4 1966171168
  %v5582 = vunpack.c.0.s8 %v5581
  %v5583 = vlaneseq
  %v5584 = vshrl.u32 %v5583, 7
  %v5585 = vsub.s32 %v5582, %v5584
  %v5586 = vrot.slane %v5564, %v5585
  %v5588 = vunpack.c.l.s4 1966171168
  %v5589 = vunpack.c.0.s8 %v5588
  %v5590 = vlaneseq
  %v5591 = vshrl.u32 %v5590, 7
  %v5592 = vsub.s32 %v5589, %v5591
  %v5593 = vrot.slane %v5565, %v5592
  %v5594 = vcombine.low %v5572, %v5579
  %v5595 = vcombine.low %v5586, %v5593
  %v5597 = vunpack.c.l.s4 1966171168
  %v5598 = vunpack.c.0.s8 %v5597
  %v5599 = vlaneseq
  %v5600 = vshrl.u32 %v5599, 7
  %v5601 = vsub.s32 %v5598, %v5600
  %v5602 = vrot.slane %v5594, %v5601
  %v5604 = vunpack.c.l.s4 1966171168
  %v5605 = vunpack.c.0.s8 %v5604
  %v5606 = vlaneseq
  %v5607 = vshrl.u32 %v5606, 7
  %v5608 = vsub.s32 %v5605, %v5607
  %v5609 = vrot.slane %v5595, %v5608
  %v5610 = vcombine.low %v5602, %v5609
  %v5611 = vcombine.low %v3466, %v3470
  %v5612 = vcombine.low %v3474, %v3478
  %v5613 = vcombine.low %v3482, %v3486
  %v5614 = vcombine.low %v3490, %v3494
  %v5616 = vunpack.c.l.s4 1966171168
  %v5617 = vunpack.c.0.s8 %v5616
  %v5618 = vlaneseq
  %v5619 = vshrl.u32 %v5618, 7
  %v5620 = vsub.s32 %v5617, %v5619
  %v5621 = vrot.slane %v5611, %v5620
  %v5623 = vunpack.c.l.s4 1966171168
  %v5624 = vunpack.c.0.s8 %v5623
  %v5625 = vlaneseq
  %v5626 = vshrl.u32 %v5625, 7
  %v5627 = vsub.s32 %v5624, %v5626
  %v5628 = vrot.slane %v5612, %v5627
  %v5630 = vunpack.c.l.s4 1966171168
  %v5631 = vunpack.c.0.s8 %v5630
  %v5632 = vlaneseq
  %v5633 = vshrl.u32 %v5632, 7
  %v5634 = vsub.s32 %v5631, %v5633
  %v5635 = vrot.slane %v5613, %v5634
  %v5637 = vunpack.c.l.s4 1966171168
  %v5638 = vunpack.c.0.s8 %v5637
  %v5639 = vlaneseq
  %v5640 = vshrl.u32 %v5639, 7
  %v5641 = vsub.s32 %v5638, %v5640
  %v5642 = vrot.slane %v5614, %v5641
  %v5643 = vcombine.low %v5621, %v5628
  %v5644 = vcombine.low %v5635, %v5642
  %v5646 = vunpack.c.l.s4 1966171168
  %v5647 = vunpack.c.0.s8 %v5646
  %v5648 = vlaneseq
  %v5649 = vshrl.u32 %v5648, 7
  %v5650 = vsub.s32 %v5647, %v5649
  %v5651 = vrot.slane %v5643, %v5650
  %v5653 = vunpack.c.l.s4 1966171168
  %v5654 = vunpack.c.0.s8 %v5653
  %v5655 = vlaneseq
  %v5656 = vshrl.u32 %v5655, 7
  %v5657 = vsub.s32 %v5654, %v5656
  %v5658 = vrot.slane %v5644, %v5657
  %v5659 = vcombine.low %v5651, %v5658
  %v5660 = vcombine.low %v3498, %v3502
  %v5661 = vcombine.low %v3506, %v3510
  %v5662 = vcombine.low %v3514, %v3518
  %v5663 = vcombine.low %v3522, %v3526
  %v5665 = vunpack.c.l.s4 1966171168
  %v5666 = vunpack.c.0.s8 %v5665
  %v5667 = vlaneseq
  %v5668 = vshrl.u32 %v5667, 7
  %v5669 = vsub.s32 %v5666, %v5668
  %v5670 = vrot.slane %v5660, %v5669
  %v5672 = vunpack.c.l.s4 1966171168
  %v5673 = vunpack.c.0.s8 %v5672
  %v5674 = vlaneseq
  %v5675 = vshrl.u32 %v5674, 7
  %v5676 = vsub.s32 %v5673, %v5675
  %v5677 = vrot.slane %v5661, %v5676
  %v5679 = vunpack.c.l.s4 1966171168
  %v5680 = vunpack.c.0.s8 %v5679
  %v5681 = vlaneseq
  %v5682 = vshrl.u32 %v5681, 7
  %v5683 = vsub.s32 %v5680, %v5682
  %v5684 = vrot.slane %v5662, %v5683
  %v5686 = vunpack.c.l.s4 1966171168
  %v5687 = vunpack.c.0.s8 %v5686
  %v5688 = vlaneseq
  %v5689 = vshrl.u32 %v5688, 7
  %v5690 = vsub.s32 %v5687, %v5689
  %v5691 = vrot.slane %v5663, %v5690
  %v5692 = vcombine.low %v5670, %v5677
  %v5693 = vcombine.low %v5684, %v5691
  %v5695 = vunpack.c.l.s4 1966171168
  %v5696 = vunpack.c.0.s8 %v5695
  %v5697 = vlaneseq
  %v5698 = vshrl.u32 %v5697, 7
  %v5699 = vsub.s32 %v5696, %v5698
  %v5700 = vrot.slane %v5692, %v5699
  %v5702 = vunpack.c.l.s4 1966171168
  %v5703 = vunpack.c.0.s8 %v5702
  %v5704 = vlaneseq
  %v5705 = vshrl.u32 %v5704, 7
  %v5706 = vsub.s32 %v5703, %v5705
  %v5707 = vrot.slane %v5693, %v5706
  %v5708 = vcombine.low %v5700, %v5707
  %v5709 = vcombine.low %v3530, %v3534
  %v5710 = vcombine.low %v3538, %v3542
  %v5711 = vcombine.low %v3546, %v3550
  %v5712 = vcombine.low %v3554, %v3558
  %v5714 = vunpack.c.l.s4 1966171168
  %v5715 = vunpack.c.0.s8 %v5714
  %v5716 = vlaneseq
  %v5717 = vshrl.u32 %v5716, 7
  %v5718 = vsub.s32 %v5715, %v5717
  %v5719 = vrot.slane %v5709, %v5718
  %v5721 = vunpack.c.l.s4 1966171168
  %v5722 = vunpack.c.0.s8 %v5721
  %v5723 = vlaneseq
  %v5724 = vshrl.u32 %v5723, 7
  %v5725 = vsub.s32 %v5722, %v5724
  %v5726 = vrot.slane %v5710, %v5725
  %v5728 = vunpack.c.l.s4 1966171168
  %v5729 = vunpack.c.0.s8 %v5728
  %v5730 = vlaneseq
  %v5731 = vshrl.u32 %v5730, 7
  %v5732 = vsub.s32 %v5729, %v5731
  %v5733 = vrot.slane %v5711, %v5732
  %v5735 = vunpack.c.l.s4 1966171168
  %v5736 = vunpack.c.0.s8 %v5735
  %v5737 = vlaneseq
  %v5738 = vshrl.u32 %v5737, 7
  %v5739 = vsub.s32 %v5736, %v5738
  %v5740 = vrot.slane %v5712, %v5739
  %v5741 = vcombine.low %v5719, %v5726
  %v5742 = vcombine.low %v5733, %v5740
  %v5744 = vunpack.c.l.s4 1966171168
  %v5745 = vunpack.c.0.s8 %v5744
  %v5746 = vlaneseq
  %v5747 = vshrl.u32 %v5746, 7
  %v5748 = vsub.s32 %v5745, %v5747
  %v5749 = vrot.slane %v5741, %v5748
  %v5751 = vunpack.c.l.s4 1966171168
  %v5752 = vunpack.c.0.s8 %v5751
  %v5753 = vlaneseq
  %v5754 = vshrl.u32 %v5753, 7
  %v5755 = vsub.s32 %v5752, %v5754
  %v5756 = vrot.slane %v5742, %v5755
  %v5757 = vcombine.low %v5749, %v5756
  %v5758 = vcombine.low %v3562, %v3566
  %v5759 = vcombine.low %v3570, %v3574
  %v5760 = vcombine.low %v3578, %v3582
  %v5761 = vcombine.low %v3586, %v3590
  %v5763 = vunpack.c.l.s4 1966171168
  %v5764 = vunpack.c.0.s8 %v5763
  %v5765 = vlaneseq
  %v5766 = vshrl.u32 %v5765, 7
  %v5767 = vsub.s32 %v5764, %v5766
  %v5768 = vrot.slane %v5758, %v5767
  %v5770 = vunpack.c.l.s4 1966171168
  %v5771 = vunpack.c.0.s8 %v5770
  %v5772 = vlaneseq
  %v5773 = vshrl.u32 %v5772, 7
  %v5774 = vsub.s32 %v5771, %v5773
  %v5775 = vrot.slane %v5759, %v5774
  %v5777 = vunpack.c.l.s4 1966171168
  %v5778 = vunpack.c.0.s8 %v5777
  %v5779 = vlaneseq
  %v5780 = vshrl.u32 %v5779, 7
  %v5781 = vsub.s32 %v5778, %v5780
  %v5782 = vrot.slane %v5760, %v5781
  %v5784 = vunpack.c.l.s4 1966171168
  %v5785 = vunpack.c.0.s8 %v5784
  %v5786 = vlaneseq
  %v5787 = vshrl.u32 %v5786, 7
  %v5788 = vsub.s32 %v5785, %v5787
  %v5789 = vrot.slane %v5761, %v5788
  %v5790 = vcombine.low %v5768, %v5775
  %v5791 = vcombine.low %v5782, %v5789
  %v5793 = vunpack.c.l.s4 1966171168
  %v5794 = vunpack.c.0.s8 %v5793
  %v5795 = vlaneseq
  %v5796 = vshrl.u32 %v5795, 7
  %v5797 = vsub.s32 %v5794, %v5796
  %v5798 = vrot.slane %v5790, %v5797
  %v5800 = vunpack.c.l.s4 1966171168
  %v5801 = vunpack.c.0.s8 %v5800
  %v5802 = vlaneseq
  %v5803 = vshrl.u32 %v5802, 7
  %v5804 = vsub.s32 %v5801, %v5803
  %v5805 = vrot.slane %v5791, %v5804
  %v5806 = vcombine.low %v5798, %v5805
  %v5807 = vcombine.low %v3594, %v3598
  %v5808 = vcombine.low %v3602, %v3606
  %v5809 = vcombine.low %v3610, %v3614
  %v5810 = vcombine.low %v3618, %v3622
  %v5812 = vunpack.c.l.s4 1966171168
  %v5813 = vunpack.c.0.s8 %v5812
  %v5814 = vlaneseq
  %v5815 = vshrl.u32 %v5814, 7
  %v5816 = vsub.s32 %v5813, %v5815
  %v5817 = vrot.slane %v5807, %v5816
  %v5819 = vunpack.c.l.s4 1966171168
  %v5820 = vunpack.c.0.s8 %v5819
  %v5821 = vlaneseq
  %v5822 = vshrl.u32 %v5821, 7
  %v5823 = vsub.s32 %v5820, %v5822
  %v5824 = vrot.slane %v5808, %v5823
  %v5826 = vunpack.c.l.s4 1966171168
  %v5827 = vunpack.c.0.s8 %v5826
  %v5828 = vlaneseq
  %v5829 = vshrl.u32 %v5828, 7
  %v5830 = vsub.s32 %v5827, %v5829
  %v5831 = vrot.slane %v5809, %v5830
  %v5833 = vunpack.c.l.s4 1966171168
  %v5834 = vunpack.c.0.s8 %v5833
  %v5835 = vlaneseq
  %v5836 = vshrl.u32 %v5835, 7
  %v5837 = vsub.s32 %v5834, %v5836
  %v5838 = vrot.slane %v5810, %v5837
  %v5839 = vcombine.low %v5817, %v5824
  %v5840 = vcombine.low %v5831, %v5838
  %v5842 = vunpack.c.l.s4 1966171168
  %v5843 = vunpack.c.0.s8 %v5842
  %v5844 = vlaneseq
  %v5845 = vshrl.u32 %v5844, 7
  %v5846 = vsub.s32 %v5843, %v5845
  %v5847 = vrot.slane %v5839, %v5846
  %v5849 = vunpack.c.l.s4 1966171168
  %v5850 = vunpack.c.0.s8 %v5849
  %v5851 = vlaneseq
  %v5852 = vshrl.u32 %v5851, 7
  %v5853 = vsub.s32 %v5850, %v5852
  %v5854 = vrot.slane %v5840, %v5853
  %v5855 = vcombine.low %v5847, %v5854
  %v5856 = vcombine.low %v3626, %v3630
  %v5857 = vcombine.low %v3634, %v3638
  %v5858 = vcombine.low %v3642, %v3646
  %v5859 = vcombine.low %v3650, %v3654
  %v5861 = vunpack.c.l.s4 1966171168
  %v5862 = vunpack.c.0.s8 %v5861
  %v5863 = vlaneseq
  %v5864 = vshrl.u32 %v5863, 7
  %v5865 = vsub.s32 %v5862, %v5864
  %v5866 = vrot.slane %v5856, %v5865
  %v5868 = vunpack.c.l.s4 1966171168
  %v5869 = vunpack.c.0.s8 %v5868
  %v5870 = vlaneseq
  %v5871 = vshrl.u32 %v5870, 7
  %v5872 = vsub.s32 %v5869, %v5871
  %v5873 = vrot.slane %v5857, %v5872
  %v5875 = vunpack.c.l.s4 1966171168
  %v5876 = vunpack.c.0.s8 %v5875
  %v5877 = vlaneseq
  %v5878 = vshrl.u32 %v5877, 7
  %v5879 = vsub.s32 %v5876, %v5878
  %v5880 = vrot.slane %v5858, %v5879
  %v5882 = vunpack.c.l.s4 1966171168
  %v5883 = vunpack.c.0.s8 %v5882
  %v5884 = vlaneseq
  %v5885 = vshrl.u32 %v5884, 7
  %v5886 = vsub.s32 %v5883, %v5885
  %v5887 = vrot.slane %v5859, %v5886
  %v5888 = vcombine.low %v5866, %v5873
  %v5889 = vcombine.low %v5880, %v5887
  %v5891 = vunpack.c.l.s4 1966171168
  %v5892 = vunpack.c.0.s8 %v5891
  %v5893 = vlaneseq
  %v5894 = vshrl.u32 %v5893, 7
  %v5895 = vsub.s32 %v5892, %v5894
  %v5896 = vrot.slane %v5888, %v5895
  %v5898 = vunpack.c.l.s4 1966171168
  %v5899 = vunpack.c.0.s8 %v5898
  %v5900 = vlaneseq
  %v5901 = vshrl.u32 %v5900, 7
  %v5902 = vsub.s32 %v5899, %v5901
  %v5903 = vrot.slane %v5889, %v5902
  %v5904 = vcombine.low %v5896, %v5903
  %v5905 = vcombine.low %v3658, %v3662
  %v5906 = vcombine.low %v3666, %v3670
  %v5907 = vcombine.low %v3674, %v3678
  %v5908 = vcombine.low %v3682, %v3686
  %v5910 = vunpack.c.l.s4 1966171168
  %v5911 = vunpack.c.0.s8 %v5910
  %v5912 = vlaneseq
  %v5913 = vshrl.u32 %v5912, 7
  %v5914 = vsub.s32 %v5911, %v5913
  %v5915 = vrot.slane %v5905, %v5914
  %v5917 = vunpack.c.l.s4 1966171168
  %v5918 = vunpack.c.0.s8 %v5917
  %v5919 = vlaneseq
  %v5920 = vshrl.u32 %v5919, 7
  %v5921 = vsub.s32 %v5918, %v5920
  %v5922 = vrot.slane %v5906, %v5921
  %v5924 = vunpack.c.l.s4 1966171168
  %v5925 = vunpack.c.0.s8 %v5924
  %v5926 = vlaneseq
  %v5927 = vshrl.u32 %v5926, 7
  %v5928 = vsub.s32 %v5925, %v5927
  %v5929 = vrot.slane %v5907, %v5928
  %v5931 = vunpack.c.l.s4 1966171168
  %v5932 = vunpack.c.0.s8 %v5931
  %v5933 = vlaneseq
  %v5934 = vshrl.u32 %v5933, 7
  %v5935 = vsub.s32 %v5932, %v5934
  %v5936 = vrot.slane %v5908, %v5935
  %v5937 = vcombine.low %v5915, %v5922
  %v5938 = vcombine.low %v5929, %v5936
  %v5940 = vunpack.c.l.s4 1966171168
  %v5941 = vunpack.c.0.s8 %v5940
  %v5942 = vlaneseq
  %v5943 = vshrl.u32 %v5942, 7
  %v5944 = vsub.s32 %v5941, %v5943
  %v5945 = vrot.slane %v5937, %v5944
  %v5947 = vunpack.c.l.s4 1966171168
  %v5948 = vunpack.c.0.s8 %v5947
  %v5949 = vlaneseq
  %v5950 = vshrl.u32 %v5949, 7
  %v5951 = vsub.s32 %v5948, %v5950
  %v5952 = vrot.slane %v5938, %v5951
  %v5953 = vcombine.low %v5945, %v5952
  %v5954 = vcombine.low %v3690, %v3694
  %v5955 = vcombine.low %v3698, %v3702
  %v5956 = vcombine.low %v3706, %v3710
  %v5957 = vcombine.low %v3714, %v3718
  %v5959 = vunpack.c.l.s4 1966171168
  %v5960 = vunpack.c.0.s8 %v5959
  %v5961 = vlaneseq
  %v5962 = vshrl.u32 %v5961, 7
  %v5963 = vsub.s32 %v5960, %v5962
  %v5964 = vrot.slane %v5954, %v5963
  %v5966 = vunpack.c.l.s4 1966171168
  %v5967 = vunpack.c.0.s8 %v5966
  %v5968 = vlaneseq
  %v5969 = vshrl.u32 %v5968, 7
  %v5970 = vsub.s32 %v5967, %v5969
  %v5971 = vrot.slane %v5955, %v5970
  %v5973 = vunpack.c.l.s4 1966171168
  %v5974 = vunpack.c.0.s8 %v5973
  %v5975 = vlaneseq
  %v5976 = vshrl.u32 %v5975, 7
  %v5977 = vsub.s32 %v5974, %v5976
  %v5978 = vrot.slane %v5956, %v5977
  %v5980 = vunpack.c.l.s4 1966171168
  %v5981 = vunpack.c.0.s8 %v5980
  %v5982 = vlaneseq
  %v5983 = vshrl.u32 %v5982, 7
  %v5984 = vsub.s32 %v5981, %v5983
  %v5985 = vrot.slane %v5957, %v5984
  %v5986 = vcombine.low %v5964, %v5971
  %v5987 = vcombine.low %v5978, %v5985
  %v5989 = vunpack.c.l.s4 1966171168
  %v5990 = vunpack.c.0.s8 %v5989
  %v5991 = vlaneseq
  %v5992 = vshrl.u32 %v5991, 7
  %v5993 = vsub.s32 %v5990, %v5992
  %v5994 = vrot.slane %v5986, %v5993
  %v5996 = vunpack.c.l.s4 1966171168
  %v5997 = vunpack.c.0.s8 %v5996
  %v5998 = vlaneseq
  %v5999 = vshrl.u32 %v5998, 7
  %v6000 = vsub.s32 %v5997, %v5999
  %v6001 = vrot.slane %v5987, %v6000
  %v6002 = vcombine.low %v5994, %v6001
  %v6003 = vcombine.low %v3722, %v3726
  %v6004 = vcombine.low %v3730, %v3734
  %v6005 = vcombine.low %v3738, %v3742
  %v6006 = vcombine.low %v3746, %v3750
  %v6008 = vunpack.c.l.s4 1966171168
  %v6009 = vunpack.c.0.s8 %v6008
  %v6010 = vlaneseq
  %v6011 = vshrl.u32 %v6010, 7
  %v6012 = vsub.s32 %v6009, %v6011
  %v6013 = vrot.slane %v6003, %v6012
  %v6015 = vunpack.c.l.s4 1966171168
  %v6016 = vunpack.c.0.s8 %v6015
  %v6017 = vlaneseq
  %v6018 = vshrl.u32 %v6017, 7
  %v6019 = vsub.s32 %v6016, %v6018
  %v6020 = vrot.slane %v6004, %v6019
  %v6022 = vunpack.c.l.s4 1966171168
  %v6023 = vunpack.c.0.s8 %v6022
  %v6024 = vlaneseq
  %v6025 = vshrl.u32 %v6024, 7
  %v6026 = vsub.s32 %v6023, %v6025
  %v6027 = vrot.slane %v6005, %v6026
  %v6029 = vunpack.c.l.s4 1966171168
  %v6030 = vunpack.c.0.s8 %v6029
  %v6031 = vlaneseq
  %v6032 = vshrl.u32 %v6031, 7
  %v6033 = vsub.s32 %v6030, %v6032
  %v6034 = vrot.slane %v6006, %v6033
  %v6035 = vcombine.low %v6013, %v6020
  %v6036 = vcombine.low %v6027, %v6034
  %v6038 = vunpack.c.l.s4 1966171168
  %v6039 = vunpack.c.0.s8 %v6038
  %v6040 = vlaneseq
  %v6041 = vshrl.u32 %v6040, 7
  %v6042 = vsub.s32 %v6039, %v6041
  %v6043 = vrot.slane %v6035, %v6042
  %v6045 = vunpack.c.l.s4 1966171168
  %v6046 = vunpack.c.0.s8 %v6045
  %v6047 = vlaneseq
  %v6048 = vshrl.u32 %v6047, 7
  %v6049 = vsub.s32 %v6046, %v6048
  %v6050 = vrot.slane %v6036, %v6049
  %v6051 = vcombine.low %v6043, %v6050
  %v6052 = vcombine.low %v3754, %v3758
  %v6053 = vcombine.low %v3762, %v3766
  %v6054 = vcombine.low %v3770, %v3774
  %v6055 = vcombine.low %v3778, %v3782
  %v6057 = vunpack.c.l.s4 1966171168
  %v6058 = vunpack.c.0.s8 %v6057
  %v6059 = vlaneseq
  %v6060 = vshrl.u32 %v6059, 7
  %v6061 = vsub.s32 %v6058, %v6060
  %v6062 = vrot.slane %v6052, %v6061
  %v6064 = vunpack.c.l.s4 1966171168
  %v6065 = vunpack.c.0.s8 %v6064
  %v6066 = vlaneseq
  %v6067 = vshrl.u32 %v6066, 7
  %v6068 = vsub.s32 %v6065, %v6067
  %v6069 = vrot.slane %v6053, %v6068
  %v6071 = vunpack.c.l.s4 1966171168
  %v6072 = vunpack.c.0.s8 %v6071
  %v6073 = vlaneseq
  %v6074 = vshrl.u32 %v6073, 7
  %v6075 = vsub.s32 %v6072, %v6074
  %v6076 = vrot.slane %v6054, %v6075
  %v6078 = vunpack.c.l.s4 1966171168
  %v6079 = vunpack.c.0.s8 %v6078
  %v6080 = vlaneseq
  %v6081 = vshrl.u32 %v6080, 7
  %v6082 = vsub.s32 %v6079, %v6081
  %v6083 = vrot.slane %v6055, %v6082
  %v6084 = vcombine.low %v6062, %v6069
  %v6085 = vcombine.low %v6076, %v6083
  %v6087 = vunpack.c.l.s4 1966171168
  %v6088 = vunpack.c.0.s8 %v6087
  %v6089 = vlaneseq
  %v6090 = vshrl.u32 %v6089, 7
  %v6091 = vsub.s32 %v6088, %v6090
  %v6092 = vrot.slane %v6084, %v6091
  %v6094 = vunpack.c.l.s4 1966171168
  %v6095 = vunpack.c.0.s8 %v6094
  %v6096 = vlaneseq
  %v6097 = vshrl.u32 %v6096, 7
  %v6098 = vsub.s32 %v6095, %v6097
  %v6099 = vrot.slane %v6085, %v6098
  %v6100 = vcombine.low %v6092, %v6099
  %v6101 = vcombine.low %v3786, %v3790
  %v6102 = vcombine.low %v3794, %v3798
  %v6103 = vcombine.low %v3802, %v3806
  %v6104 = vcombine.low %v3810, %v3814
  %v6106 = vunpack.c.l.s4 1966171168
  %v6107 = vunpack.c.0.s8 %v6106
  %v6108 = vlaneseq
  %v6109 = vshrl.u32 %v6108, 7
  %v6110 = vsub.s32 %v6107, %v6109
  %v6111 = vrot.slane %v6101, %v6110
  %v6113 = vunpack.c.l.s4 1966171168
  %v6114 = vunpack.c.0.s8 %v6113
  %v6115 = vlaneseq
  %v6116 = vshrl.u32 %v6115, 7
  %v6117 = vsub.s32 %v6114, %v6116
  %v6118 = vrot.slane %v6102, %v6117
  %v6120 = vunpack.c.l.s4 1966171168
  %v6121 = vunpack.c.0.s8 %v6120
  %v6122 = vlaneseq
  %v6123 = vshrl.u32 %v6122, 7
  %v6124 = vsub.s32 %v6121, %v6123
  %v6125 = vrot.slane %v6103, %v6124
  %v6127 = vunpack.c.l.s4 1966171168
  %v6128 = vunpack.c.0.s8 %v6127
  %v6129 = vlaneseq
  %v6130 = vshrl.u32 %v6129, 7
  %v6131 = vsub.s32 %v6128, %v6130
  %v6132 = vrot.slane %v6104, %v6131
  %v6133 = vcombine.low %v6111, %v6118
  %v6134 = vcombine.low %v6125, %v6132
  %v6136 = vunpack.c.l.s4 1966171168
  %v6137 = vunpack.c.0.s8 %v6136
  %v6138 = vlaneseq
  %v6139 = vshrl.u32 %v6138, 7
  %v6140 = vsub.s32 %v6137, %v6139
  %v6141 = vrot.slane %v6133, %v6140
  %v6143 = vunpack.c.l.s4 1966171168
  %v6144 = vunpack.c.0.s8 %v6143
  %v6145 = vlaneseq
  %v6146 = vshrl.u32 %v6145, 7
  %v6147 = vsub.s32 %v6144, %v6146
  %v6148 = vrot.slane %v6134, %v6147
  %v6149 = vcombine.low %v6141, %v6148
  %v6150 = vcombine.low %v3818, %v3822
  %v6151 = vcombine.low %v3826, %v3830
  %v6152 = vcombine.low %v3834, %v3838
  %v6153 = vcombine.low %v3842, %v3846
  %v6155 = vunpack.c.l.s4 1966171168
  %v6156 = vunpack.c.0.s8 %v6155
  %v6157 = vlaneseq
  %v6158 = vshrl.u32 %v6157, 7
  %v6159 = vsub.s32 %v6156, %v6158
  %v6160 = vrot.slane %v6150, %v6159
  %v6162 = vunpack.c.l.s4 1966171168
  %v6163 = vunpack.c.0.s8 %v6162
  %v6164 = vlaneseq
  %v6165 = vshrl.u32 %v6164, 7
  %v6166 = vsub.s32 %v6163, %v6165
  %v6167 = vrot.slane %v6151, %v6166
  %v6169 = vunpack.c.l.s4 1966171168
  %v6170 = vunpack.c.0.s8 %v6169
  %v6171 = vlaneseq
  %v6172 = vshrl.u32 %v6171, 7
  %v6173 = vsub.s32 %v6170, %v6172
  %v6174 = vrot.slane %v6152, %v6173
  %v6176 = vunpack.c.l.s4 1966171168
  %v6177 = vunpack.c.0.s8 %v6176
  %v6178 = vlaneseq
  %v6179 = vshrl.u32 %v6178, 7
  %v6180 = vsub.s32 %v6177, %v6179
  %v6181 = vrot.slane %v6153, %v6180
  %v6182 = vcombine.low %v6160, %v6167
  %v6183 = vcombine.low %v6174, %v6181
  %v6185 = vunpack.c.l.s4 1966171168
  %v6186 = vunpack.c.0.s8 %v6185
  %v6187 = vlaneseq
  %v6188 = vshrl.u32 %v6187, 7
  %v6189 = vsub.s32 %v6186, %v6188
  %v6190 = vrot.slane %v6182, %v6189
  %v6192 = vunpack.c.l.s4 1966171168
  %v6193 = vunpack.c.0.s8 %v6192
  %v6194 = vlaneseq
  %v6195 = vshrl.u32 %v6194, 7
  %v6196 = vsub.s32 %v6193, %v6195
  %v6197 = vrot.slane %v6183, %v6196
  %v6198 = vcombine.low %v6190, %v6197
  %6199 = vset.pattern.permute.xlu0 0
  %6200 = vperm.xlu0 %6199, %v3895
  %v6201 = vpop.permute.xlu0 %6200
  %6202 = vset.pattern.permute.xlu0 0
  %6203 = vperm.xlu0 %6202, %v3944
  %v6204 = vpop.permute.xlu0 %6203
  %6205 = vset.pattern.permute.xlu0 0
  %6206 = vperm.xlu0 %6205, %v3993
  %v6207 = vpop.permute.xlu0 %6206
  %6208 = vset.pattern.permute.xlu0 0
  %6209 = vperm.xlu0 %6208, %v4042
  %v6210 = vpop.permute.xlu0 %6209
  %6211 = vset.pattern.permute.xlu0 0
  %6212 = vperm.xlu0 %6211, %v4091
  %v6213 = vpop.permute.xlu0 %6212
  %6214 = vset.pattern.permute.xlu0 0
  %6215 = vperm.xlu0 %6214, %v4140
  %v6216 = vpop.permute.xlu0 %6215
  %6217 = vset.pattern.permute.xlu0 0
  %6218 = vperm.xlu0 %6217, %v4189
  %v6219 = vpop.permute.xlu0 %6218
  %6220 = vset.pattern.permute.xlu0 0
  %6221 = vperm.xlu0 %6220, %v4238
  %v6222 = vpop.permute.xlu0 %6221
  %6223 = vset.pattern.permute.xlu0 0
  %6224 = vperm.xlu0 %6223, %v4287
  %v6225 = vpop.permute.xlu0 %6224
  %6226 = vset.pattern.permute.xlu0 0
  %6227 = vperm.xlu0 %6226, %v4336
  %v6228 = vpop.permute.xlu0 %6227
  %6229 = vset.pattern.permute.xlu0 0
  %6230 = vperm.xlu0 %6229, %v4385
  %v6231 = vpop.permute.xlu0 %6230
  %6232 = vset.pattern.permute.xlu0 0
  %6233 = vperm.xlu0 %6232, %v4434
  %v6234 = vpop.permute.xlu0 %6233
  %6235 = vset.pattern.permute.xlu0 0
  %6236 = vperm.xlu0 %6235, %v4483
  %v6237 = vpop.permute.xlu0 %6236
  %6238 = vset.pattern.permute.xlu0 0
  %6239 = vperm.xlu0 %6238, %v4532
  %v6240 = vpop.permute.xlu0 %6239
  %6241 = vset.pattern.permute.xlu0 0
  %6242 = vperm.xlu0 %6241, %v4581
  %v6243 = vpop.permute.xlu0 %6242
  %6244 = vset.pattern.permute.xlu0 0
  %6245 = vperm.xlu0 %6244, %v4630
  %v6246 = vpop.permute.xlu0 %6245
  %6247 = vset.pattern.permute.xlu0 0
  %6248 = vperm.xlu0 %6247, %v4679
  %v6249 = vpop.permute.xlu0 %6248
  %6250 = vset.pattern.permute.xlu0 0
  %6251 = vperm.xlu0 %6250, %v4728
  %v6252 = vpop.permute.xlu0 %6251
  %6253 = vset.pattern.permute.xlu0 0
  %6254 = vperm.xlu0 %6253, %v4777
  %v6255 = vpop.permute.xlu0 %6254
  %6256 = vset.pattern.permute.xlu0 0
  %6257 = vperm.xlu0 %6256, %v4826
  %v6258 = vpop.permute.xlu0 %6257
  %6259 = vset.pattern.permute.xlu0 0
  %6260 = vperm.xlu0 %6259, %v4875
  %v6261 = vpop.permute.xlu0 %6260
  %6262 = vset.pattern.permute.xlu0 0
  %6263 = vperm.xlu0 %6262, %v4924
  %v6264 = vpop.permute.xlu0 %6263
  %6265 = vset.pattern.permute.xlu0 0
  %6266 = vperm.xlu0 %6265, %v4973
  %v6267 = vpop.permute.xlu0 %6266
  %6268 = vset.pattern.permute.xlu0 0
  %6269 = vperm.xlu0 %6268, %v5022
  %v6270 = vpop.permute.xlu0 %6269
  %6271 = vset.pattern.permute.xlu0 0
  %6272 = vperm.xlu0 %6271, %v5071
  %v6273 = vpop.permute.xlu0 %6272
  %6274 = vset.pattern.permute.xlu0 0
  %6275 = vperm.xlu0 %6274, %v5120
  %v6276 = vpop.permute.xlu0 %6275
  %6277 = vset.pattern.permute.xlu0 0
  %6278 = vperm.xlu0 %6277, %v5169
  %v6279 = vpop.permute.xlu0 %6278
  %6280 = vset.pattern.permute.xlu0 0
  %6281 = vperm.xlu0 %6280, %v5218
  %v6282 = vpop.permute.xlu0 %6281
  %6283 = vset.pattern.permute.xlu0 0
  %6284 = vperm.xlu0 %6283, %v5267
  %v6285 = vpop.permute.xlu0 %6284
  %6286 = vset.pattern.permute.xlu0 0
  %6287 = vperm.xlu0 %6286, %v5316
  %v6288 = vpop.permute.xlu0 %6287
  %6289 = vset.pattern.permute.xlu0 0
  %6290 = vperm.xlu0 %6289, %v5365
  %v6291 = vpop.permute.xlu0 %6290
  %6292 = vset.pattern.permute.xlu0 0
  %6293 = vperm.xlu0 %6292, %v5414
  %v6294 = vpop.permute.xlu0 %6293
  %6295 = vset.pattern.permute.xlu0 0
  %6296 = vperm.xlu0 %6295, %v5463
  %v6297 = vpop.permute.xlu0 %6296
  %6298 = vset.pattern.permute.xlu0 0
  %6299 = vperm.xlu0 %6298, %v5512
  %v6300 = vpop.permute.xlu0 %6299
  %6301 = vset.pattern.permute.xlu0 0
  %6302 = vperm.xlu0 %6301, %v5561
  %v6303 = vpop.permute.xlu0 %6302
  %6304 = vset.pattern.permute.xlu0 0
  %6305 = vperm.xlu0 %6304, %v5610
  %v6306 = vpop.permute.xlu0 %6305
  %6307 = vset.pattern.permute.xlu0 0
  %6308 = vperm.xlu0 %6307, %v5659
  %v6309 = vpop.permute.xlu0 %6308
  %6310 = vset.pattern.permute.xlu0 0
  %6311 = vperm.xlu0 %6310, %v5708
  %v6312 = vpop.permute.xlu0 %6311
  %6313 = vset.pattern.permute.xlu0 0
  %6314 = vperm.xlu0 %6313, %v5757
  %v6315 = vpop.permute.xlu0 %6314
  %6316 = vset.pattern.permute.xlu0 0
  %6317 = vperm.xlu0 %6316, %v5806
  %v6318 = vpop.permute.xlu0 %6317
  %6319 = vset.pattern.permute.xlu0 0
  %6320 = vperm.xlu0 %6319, %v5855
  %v6321 = vpop.permute.xlu0 %6320
  %6322 = vset.pattern.permute.xlu0 0
  %6323 = vperm.xlu0 %6322, %v5904
  %v6324 = vpop.permute.xlu0 %6323
  %6325 = vset.pattern.permute.xlu0 0
  %6326 = vperm.xlu0 %6325, %v5953
  %v6327 = vpop.permute.xlu0 %6326
  %6328 = vset.pattern.permute.xlu0 0
  %6329 = vperm.xlu0 %6328, %v6002
  %v6330 = vpop.permute.xlu0 %6329
  %6331 = vset.pattern.permute.xlu0 0
  %6332 = vperm.xlu0 %6331, %v6051
  %v6333 = vpop.permute.xlu0 %6332
  %6334 = vset.pattern.permute.xlu0 0
  %6335 = vperm.xlu0 %6334, %v6100
  %v6336 = vpop.permute.xlu0 %6335
  %6337 = vset.pattern.permute.xlu0 0
  %6338 = vperm.xlu0 %6337, %v6149
  %v6339 = vpop.permute.xlu0 %6338
  %6340 = vset.pattern.permute.xlu0 0
  %6341 = vperm.xlu0 %6340, %v6198
  %v6342 = vpop.permute.xlu0 %6341
  %v6343 = vlaneseq
  %v6344 = vand.u32 %v6343, 127
  %v6345 = vlaneseq
  %v6346 = vshrl.u32 %v6345, 7
  %v6347 = vsub.s32 %v6344, %v6346
  %v6348 = vrot.slane %v6201, %v6347
  %v6349 = vadd.s32 %v6344, 4294967288
  %v6350 = vlaneseq
  %v6351 = vshrl.u32 %v6350, 7
  %v6352 = vsub.s32 %v6349, %v6351
  %v6353 = vrot.slane %v6204, %v6352
  %vm6354 = vcmask 130112
  %v6355 = vsel %vm6354, %v6353, %v6348
  %v6356 = vadd.s32 %v6344, 4294967280
  %v6357 = vlaneseq
  %v6358 = vshrl.u32 %v6357, 7
  %v6359 = vsub.s32 %v6356, %v6358
  %v6360 = vrot.slane %v6207, %v6359
  %vm6361 = vcmask 195712
  %v6362 = vsel %vm6361, %v6360, %v6355
  %v6363 = vadd.s32 %v6344, 4294967272
  %v6364 = vlaneseq
  %v6365 = vshrl.u32 %v6364, 7
  %v6366 = vsub.s32 %v6363, %v6365
  %v6367 = vrot.slane %v6210, %v6366
  %vm6368 = vcmask 261312
  %v6369 = vsel %vm6368, %v6367, %v6362
  %v6370 = vadd.s32 %v6344, 4294967264
  %v6371 = vlaneseq
  %v6372 = vshrl.u32 %v6371, 7
  %v6373 = vsub.s32 %v6370, %v6372
  %v6374 = vrot.slane %v6213, %v6373
  %vm6375 = vcmask 326912
  %v6376 = vsel %vm6375, %v6374, %v6369
  %v6377 = vadd.s32 %v6344, 4294967256
  %v6378 = vlaneseq
  %v6379 = vshrl.u32 %v6378, 7
  %v6380 = vsub.s32 %v6377, %v6379
  %v6381 = vrot.slane %v6216, %v6380
  %vm6382 = vcmask 392512
  %v6383 = vsel %vm6382, %v6381, %v6376
  %v6384 = vadd.s32 %v6344, 4294967248
  %v6385 = vlaneseq
  %v6386 = vshrl.u32 %v6385, 7
  %v6387 = vsub.s32 %v6384, %v6386
  %v6388 = vrot.slane %v6219, %v6387
  %vm6389 = vcmask 458112
  %v6390 = vsel %vm6389, %v6388, %v6383
  %v6391 = vadd.s32 %v6344, 4294967240
  %v6392 = vlaneseq
  %v6393 = vshrl.u32 %v6392, 7
  %v6394 = vsub.s32 %v6391, %v6393
  %v6395 = vrot.slane %v6222, %v6394
  %vm6396 = vcmask 523712
  %v6397 = vsel %vm6396, %v6395, %v6390
  %v6398 = vadd.s32 %v6344, 4294967232
  %v6399 = vlaneseq
  %v6400 = vshrl.u32 %v6399, 7
  %v6401 = vsub.s32 %v6398, %v6400
  %v6402 = vrot.slane %v6225, %v6401
  %vm6403 = vcmask 589312
  %v6404 = vsel %vm6403, %v6402, %v6397
  %v6405 = vadd.s32 %v6344, 4294967224
  %v6406 = vlaneseq
  %v6407 = vshrl.u32 %v6406, 7
  %v6408 = vsub.s32 %v6405, %v6407
  %v6409 = vrot.slane %v6228, %v6408
  %vm6410 = vcmask 654912
  %v6411 = vsel %vm6410, %v6409, %v6404
  %v6412 = vadd.s32 %v6344, 4294967216
  %v6413 = vlaneseq
  %v6414 = vshrl.u32 %v6413, 7
  %v6415 = vsub.s32 %v6412, %v6414
  %v6416 = vrot.slane %v6231, %v6415
  %vm6417 = vcmask 720512
  %v6418 = vsel %vm6417, %v6416, %v6411
  %v6419 = vadd.s32 %v6344, 4294967208
  %v6420 = vlaneseq
  %v6421 = vshrl.u32 %v6420, 7
  %v6422 = vsub.s32 %v6419, %v6421
  %v6423 = vrot.slane %v6234, %v6422
  %vm6424 = vcmask 786112
  %v6425 = vsel %vm6424, %v6423, %v6418
  %v6426 = vadd.s32 %v6344, 4294967200
  %v6427 = vlaneseq
  %v6428 = vshrl.u32 %v6427, 7
  %v6429 = vsub.s32 %v6426, %v6428
  %v6430 = vrot.slane %v6237, %v6429
  %vm6431 = vcmask 851712
  %v6432 = vsel %vm6431, %v6430, %v6425
  %v6433 = vadd.s32 %v6344, 4294967192
  %v6434 = vlaneseq
  %v6435 = vshrl.u32 %v6434, 7
  %v6436 = vsub.s32 %v6433, %v6435
  %v6437 = vrot.slane %v6240, %v6436
  %vm6438 = vcmask 917312
  %v6439 = vsel %vm6438, %v6437, %v6432
  %v6440 = vadd.s32 %v6344, 4294967184
  %v6441 = vlaneseq
  %v6442 = vshrl.u32 %v6441, 7
  %v6443 = vsub.s32 %v6440, %v6442
  %v6444 = vrot.slane %v6243, %v6443
  %vm6445 = vcmask 982912
  %v6446 = vsel %vm6445, %v6444, %v6439
  %v6447 = vadd.s32 %v6344, 4294967176
  %v6448 = vlaneseq
  %v6449 = vshrl.u32 %v6448, 7
  %v6450 = vsub.s32 %v6447, %v6449
  %v6451 = vrot.slane %v6246, %v6450
  %vm6452 = vcmask 1048512
  %v6453 = vsel %vm6452, %v6451, %v6446
  %v6454 = vlaneseq
  %v6455 = vshrl.u32 %v6454, 7
  %v6456 = vsub.s32 %v6344, %v6455
  %v6457 = vrot.slane %v6249, %v6456
  %v6458 = vlaneseq
  %v6459 = vshrl.u32 %v6458, 7
  %v6460 = vsub.s32 %v6349, %v6459
  %v6461 = vrot.slane %v6252, %v6460
  %v6462 = vsel %vm6354, %v6461, %v6457
  %v6463 = vlaneseq
  %v6464 = vshrl.u32 %v6463, 7
  %v6465 = vsub.s32 %v6356, %v6464
  %v6466 = vrot.slane %v6255, %v6465
  %v6467 = vsel %vm6361, %v6466, %v6462
  %v6468 = vlaneseq
  %v6469 = vshrl.u32 %v6468, 7
  %v6470 = vsub.s32 %v6363, %v6469
  %v6471 = vrot.slane %v6258, %v6470
  %v6472 = vsel %vm6368, %v6471, %v6467
  %v6473 = vlaneseq
  %v6474 = vshrl.u32 %v6473, 7
  %v6475 = vsub.s32 %v6370, %v6474
  %v6476 = vrot.slane %v6261, %v6475
  %v6477 = vsel %vm6375, %v6476, %v6472
  %v6478 = vlaneseq
  %v6479 = vshrl.u32 %v6478, 7
  %v6480 = vsub.s32 %v6377, %v6479
  %v6481 = vrot.slane %v6264, %v6480
  %v6482 = vsel %vm6382, %v6481, %v6477
  %v6483 = vlaneseq
  %v6484 = vshrl.u32 %v6483, 7
  %v6485 = vsub.s32 %v6384, %v6484
  %v6486 = vrot.slane %v6267, %v6485
  %v6487 = vsel %vm6389, %v6486, %v6482
  %v6488 = vlaneseq
  %v6489 = vshrl.u32 %v6488, 7
  %v6490 = vsub.s32 %v6391, %v6489
  %v6491 = vrot.slane %v6270, %v6490
  %v6492 = vsel %vm6396, %v6491, %v6487
  %v6493 = vlaneseq
  %v6494 = vshrl.u32 %v6493, 7
  %v6495 = vsub.s32 %v6398, %v6494
  %v6496 = vrot.slane %v6273, %v6495
  %v6497 = vsel %vm6403, %v6496, %v6492
  %v6498 = vlaneseq
  %v6499 = vshrl.u32 %v6498, 7
  %v6500 = vsub.s32 %v6405, %v6499
  %v6501 = vrot.slane %v6276, %v6500
  %v6502 = vsel %vm6410, %v6501, %v6497
  %v6503 = vlaneseq
  %v6504 = vshrl.u32 %v6503, 7
  %v6505 = vsub.s32 %v6412, %v6504
  %v6506 = vrot.slane %v6279, %v6505
  %v6507 = vsel %vm6417, %v6506, %v6502
  %v6508 = vlaneseq
  %v6509 = vshrl.u32 %v6508, 7
  %v6510 = vsub.s32 %v6419, %v6509
  %v6511 = vrot.slane %v6282, %v6510
  %v6512 = vsel %vm6424, %v6511, %v6507
  %v6513 = vlaneseq
  %v6514 = vshrl.u32 %v6513, 7
  %v6515 = vsub.s32 %v6426, %v6514
  %v6516 = vrot.slane %v6285, %v6515
  %v6517 = vsel %vm6431, %v6516, %v6512
  %v6518 = vlaneseq
  %v6519 = vshrl.u32 %v6518, 7
  %v6520 = vsub.s32 %v6433, %v6519
  %v6521 = vrot.slane %v6288, %v6520
  %v6522 = vsel %vm6438, %v6521, %v6517
  %v6523 = vlaneseq
  %v6524 = vshrl.u32 %v6523, 7
  %v6525 = vsub.s32 %v6440, %v6524
  %v6526 = vrot.slane %v6291, %v6525
  %v6527 = vsel %vm6445, %v6526, %v6522
  %v6528 = vlaneseq
  %v6529 = vshrl.u32 %v6528, 7
  %v6530 = vsub.s32 %v6447, %v6529
  %v6531 = vrot.slane %v6294, %v6530
  %v6532 = vsel %vm6452, %v6531, %v6527
  %v6533 = vlaneseq
  %v6534 = vshrl.u32 %v6533, 7
  %v6535 = vsub.s32 %v6344, %v6534
  %v6536 = vrot.slane %v6297, %v6535
  %v6537 = vlaneseq
  %v6538 = vshrl.u32 %v6537, 7
  %v6539 = vsub.s32 %v6349, %v6538
  %v6540 = vrot.slane %v6300, %v6539
  %v6541 = vsel %vm6354, %v6540, %v6536
  %v6542 = vlaneseq
  %v6543 = vshrl.u32 %v6542, 7
  %v6544 = vsub.s32 %v6356, %v6543
  %v6545 = vrot.slane %v6303, %v6544
  %v6546 = vsel %vm6361, %v6545, %v6541
  %v6547 = vlaneseq
  %v6548 = vshrl.u32 %v6547, 7
  %v6549 = vsub.s32 %v6363, %v6548
  %v6550 = vrot.slane %v6306, %v6549
  %v6551 = vsel %vm6368, %v6550, %v6546
  %v6552 = vlaneseq
  %v6553 = vshrl.u32 %v6552, 7
  %v6554 = vsub.s32 %v6370, %v6553
  %v6555 = vrot.slane %v6309, %v6554
  %v6556 = vsel %vm6375, %v6555, %v6551
  %v6557 = vlaneseq
  %v6558 = vshrl.u32 %v6557, 7
  %v6559 = vsub.s32 %v6377, %v6558
  %v6560 = vrot.slane %v6312, %v6559
  %v6561 = vsel %vm6382, %v6560, %v6556
  %v6562 = vlaneseq
  %v6563 = vshrl.u32 %v6562, 7
  %v6564 = vsub.s32 %v6384, %v6563
  %v6565 = vrot.slane %v6315, %v6564
  %v6566 = vsel %vm6389, %v6565, %v6561
  %v6567 = vlaneseq
  %v6568 = vshrl.u32 %v6567, 7
  %v6569 = vsub.s32 %v6391, %v6568
  %v6570 = vrot.slane %v6318, %v6569
  %v6571 = vsel %vm6396, %v6570, %v6566
  %v6572 = vlaneseq
  %v6573 = vshrl.u32 %v6572, 7
  %v6574 = vsub.s32 %v6398, %v6573
  %v6575 = vrot.slane %v6321, %v6574
  %v6576 = vsel %vm6403, %v6575, %v6571
  %v6577 = vlaneseq
  %v6578 = vshrl.u32 %v6577, 7
  %v6579 = vsub.s32 %v6405, %v6578
  %v6580 = vrot.slane %v6324, %v6579
  %v6581 = vsel %vm6410, %v6580, %v6576
  %v6582 = vlaneseq
  %v6583 = vshrl.u32 %v6582, 7
  %v6584 = vsub.s32 %v6412, %v6583
  %v6585 = vrot.slane %v6327, %v6584
  %v6586 = vsel %vm6417, %v6585, %v6581
  %v6587 = vlaneseq
  %v6588 = vshrl.u32 %v6587, 7
  %v6589 = vsub.s32 %v6419, %v6588
  %v6590 = vrot.slane %v6330, %v6589
  %v6591 = vsel %vm6424, %v6590, %v6586
  %v6592 = vlaneseq
  %v6593 = vshrl.u32 %v6592, 7
  %v6594 = vsub.s32 %v6426, %v6593
  %v6595 = vrot.slane %v6333, %v6594
  %v6596 = vsel %vm6431, %v6595, %v6591
  %v6597 = vlaneseq
  %v6598 = vshrl.u32 %v6597, 7
  %v6599 = vsub.s32 %v6433, %v6598
  %v6600 = vrot.slane %v6336, %v6599
  %v6601 = vsel %vm6438, %v6600, %v6596
  %v6602 = vlaneseq
  %v6603 = vshrl.u32 %v6602, 7
  %v6604 = vsub.s32 %v6440, %v6603
  %v6605 = vrot.slane %v6339, %v6604
  %v6606 = vsel %vm6445, %v6605, %v6601
  %v6607 = vlaneseq
  %v6608 = vshrl.u32 %v6607, 7
  %v6609 = vsub.s32 %v6447, %v6608
  %v6610 = vrot.slane %v6342, %v6609
  %v6611 = vsel %vm6452, %v6610, %v6606
  %v6612 = vcombine.low %v6453, %v6532
  %v6614 = vunpack.c.l.s4 1966171168
  %v6615 = vunpack.c.0.s8 %v6614
  %v6616 = vlaneseq
  %v6617 = vshrl.u32 %v6616, 7
  %v6618 = vsub.s32 %v6615, %v6617
  %v6619 = vrot.slane %v6612, %v6618
  %v6621 = vunpack.c.l.s4 1966171168
  %v6622 = vunpack.c.0.s8 %v6621
  %v6623 = vlaneseq
  %v6624 = vshrl.u32 %v6623, 7
  %v6625 = vsub.s32 %v6622, %v6624
  %v6626 = vrot.slane %v6611, %v6625
  %v6627 = vcombine.low %v6619, %v6626
  %v6629 = vunpack.c.l.s4 1966171168
  %v6630 = vunpack.c.0.s8 %v6629
  %v6631 = vlaneseq
  %v6632 = vshrl.u32 %v6631, 7
  %v6633 = vsub.s32 %v6630, %v6632
  %v6634 = vrot.slane %v6627, %v6633
  %v6636 = vlaneseq
  %vm6637 = vcmp.ge.s32.totalorder %v6636, 0
  %vm6638 = vcmp.lt.s32.totalorder %v6636, 384
  %vm6639 = vmand %vm6637, %vm6638
  %6640 = vst.msk [vmem:[%s7] sm:$0x7] %vm6639, %v6634
  // Predicated region
  $region30: #{decomposition_model_forward.1} parent=0 // pred_check
    _
  $region31: #{decomposition_model_forward.1} parent=0 // pred_check_branch
    %6642 = sbr.rel (0) target = $region33
  $region32: #{decomposition_model_forward.1} parent=0 // pred_region
    _
  $region33: #{decomposition_model_forward.1} parent=0 // pred_fallthru
    _
  // Predicated region
  $region34: #{decomposition_model_forward.1} parent=0 // pred_check
    _
  $region35: #{decomposition_model_forward.1} parent=0 // pred_check_branch
    %6644 = sbr.rel (0) target = $region37
  $region36: #{decomposition_model_forward.1} parent=0 // pred_region
    _
  $region37: #{decomposition_model_forward.1} parent=0 // pred_fallthru
    _

</llo_original>
